<compile_context>
chip_gen: v6e
topology: v6e:2x2x1
jax: 0.10.0
libtpu: 0.0.40
codegen_flags: <defaults>
</compile_context>

<pallas_src>
import functools

import jax
import jax.numpy as jnp
from jax.experimental import pallas as pl
from jax.experimental.pallas import tpu as pltpu


def freq_bias_kernel(joint_ref, w_ref, o_ref):
    """One K-block per grid step: o += joint_blk @ w_blk (bf16 MXU, f32 acc)."""

    @pl.when(pl.program_id(0) == 0)
    def _init():
        o_ref[...] = jnp.zeros_like(o_ref)

    o_ref[...] += jnp.dot(
        joint_ref[...], w_ref[...], preferred_element_type=jnp.float32
    )


def init_frequency_bias(pred_dist, *, num_k_blocks=2, weight_dtype=jnp.bfloat16):
    """One-time weight prep (module __init__): flatten [N,N,P] -> [K,P], pad K to a
    multiple of num_k_blocks*128, cast to bf16.  Done once, outside the forward path."""
    n0, n1, p = pred_dist.shape
    k = n0 * n1
    kb = num_k_blocks * 128
    k_pad = ((k + kb - 1) // kb) * kb
    w = jnp.asarray(pred_dist, jnp.float32).reshape(k, p)
    w = jnp.pad(w, ((0, k_pad - k), (0, 0)))       # zero rows contribute exactly 0
    return w.astype(weight_dtype)


@functools.partial(jax.jit, static_argnames=("num_k_blocks",))
def frequency_bias_forward(obj_cands0, obj_cands1, w_prep, *, num_k_blocks=2):
    """obj_cands0/1: [B, N] f32; w_prep: [K_pad, P] bf16 (from init) -> [B, P] f32."""
    b, n = obj_cands0.shape
    k_pad, p = w_prep.shape
    k = n * n
    assert obj_cands1.shape == (b, n)
    assert k_pad % (num_k_blocks * 128) == 0 and k_pad >= k
    bk = k_pad // num_k_blocks

    # Tiny fused XLA op: joint prob over (obj0, obj1) pairs, already padded + bf16.
    joint = (
        obj_cands0.astype(jnp.float32)[:, :, None]
        * obj_cands1.astype(jnp.float32)[:, None, :]
    ).reshape(b, k)
    joint = jnp.pad(joint, ((0, 0), (0, k_pad - k))).astype(w_prep.dtype)

    itemsize = jnp.dtype(w_prep.dtype).itemsize
    cost = pl.CostEstimate(
        flops=2 * b * k_pad * p,
        transcendentals=0,
        bytes_accessed=k_pad * p * itemsize + b * k_pad * itemsize + b * p * 4,
    )

    return pl.pallas_call(
        freq_bias_kernel,
        out_shape=jax.ShapeDtypeStruct((b, p), jnp.float32),
        grid=(num_k_blocks,),
        in_specs=[
            pl.BlockSpec((b, bk), lambda i: (0, i)),   # joint K-block (lane dim % 128 == 0)
            pl.BlockSpec((bk, p), lambda i: (i, 0)),   # weight K-block (~1.2 MB bf16)
        ],
        out_specs=pl.BlockSpec((b, p), lambda i: (0, 0)),  # VMEM-resident accumulator
        compiler_params=pltpu.CompilerParams(
            dimension_semantics=("arbitrary",),  # K is a reduction axis
        ),
        cost_estimate=cost,
    )(joint, w_prep)


def frequency_bias_reference(obj_cands0, obj_cands1, pred_dist):
    """Pure-JAX f32 reference matching the PyTorch forward exactly."""
    b, n = obj_cands0.shape
    p = pred_dist.shape[2]
    w = pred_dist.reshape(n * n, p)                                  # .view(-1, P)
    joint = obj_cands0[:, :, None] * obj_cands1[:, None, :]          # [B, N, N]
    return joint.reshape(b, n * n) @ w                               # [B, P]


if __name__ == "__main__":
    # Shapes implied by the module: 151 object classes, 51 predicates (VG-style).
    B, N, P = 8, 151, 51

    key = jax.random.PRNGKey(0)
    k_pd, k_c0, k_c1 = jax.random.split(key, 3)

    # "pred_dist": probability distribution over predicates for every (obj0, obj1) pair.
    pred_dist = jax.random.uniform(k_pd, (N, N, P), dtype=jnp.float32)
    pred_dist = pred_dist / jnp.sum(pred_dist, axis=-1, keepdims=True)

    # Object candidate distributions (softmax over classes).
    obj_cands0 = jax.nn.softmax(jax.random.normal(k_c0, (B, N), dtype=jnp.float32), axis=-1)
    obj_cands1 = jax.nn.softmax(jax.random.normal(k_c1, (B, N), dtype=jnp.float32), axis=-1)

    # One-time weight preparation (module __init__), then the hot forward path.
    w_prep = init_frequency_bias(pred_dist)
    out = frequency_bias_forward(obj_cands0, obj_cands1, w_prep)
    out = jax.block_until_ready(out)

    ref = frequency_bias_reference(obj_cands0, obj_cands1, pred_dist)
    assert out.shape == (B, P) and out.dtype == jnp.float32
    max_err = float(jnp.max(jnp.abs(out - ref)))
    # bf16 weight/joint stream with f32 accumulation -> relaxed tolerance.
    assert jnp.allclose(out, ref, rtol=2e-2, atol=5e-4), max_err

    print("KERNEL_OK")
</pallas_src>

<mosaic_0001>
module attributes {stable_mosaic.version = 11 : i64} {
  func.func @freq_bias_kernel(%arg0: i32, %arg1: memref<8x11520xbf16, #tpu.memory_space<vmem>>, %arg2: memref<11520x51xbf16, #tpu.memory_space<vmem>>, %arg3: memref<8x51xf32, #tpu.memory_space<vmem>>) attributes {dimension_semantics = [#tpu.dimension_semantics<arbitrary>], iteration_bounds = array<i64: 2>, scalar_prefetch = 0 : i64, scratch_operands = 0 : i64, tpu.core_type = #tpu.core_type<tc>, window_params = [{transform_indices = @transform_0, window_bounds = array<i64: 8, 11520>}, {transform_indices = @transform_1, window_bounds = array<i64: 11520, 51>}, {pipeline_mode = #tpu.pipeline_mode<synchronous>, transform_indices = @transform_2, window_bounds = array<i64: 8, 51>}]} {
    %c0_i32 = arith.constant 0 : i32
    %0 = arith.cmpi eq, %arg0, %c0_i32 : i32
    %1 = arith.extui %0 : i1 to i32
    %c0_i32_0 = arith.constant 0 : i32
    %2 = arith.cmpi ne, %1, %c0_i32_0 : i32
    scf.if %2 {
      %cst_8 = arith.constant 0.000000e+00 : f32
      %9 = vector.broadcast %cst_8 : f32 to vector<8x51xf32>
      %c0_9 = arith.constant 0 : index
      %c0_10 = arith.constant 0 : index
      %10 = vector.load %arg3[%c0_9, %c0_10] : memref<8x51xf32, #tpu.memory_space<vmem>>, vector<8x51xf32>
      tpu.vector_store %arg3[%c0_9, %c0_10], %9 {strides = array<i32>} : memref<8x51xf32, #tpu.memory_space<vmem>>, vector<8x51xf32>,
    } else {
    }
    %c0 = arith.constant 0 : index
    %c0_1 = arith.constant 0 : index
    %3 = vector.load %arg3[%c0, %c0_1] : memref<8x51xf32, #tpu.memory_space<vmem>>, vector<8x51xf32>
    %c0_2 = arith.constant 0 : index
    %c0_3 = arith.constant 0 : index
    %4 = vector.load %arg1[%c0_2, %c0_3] : memref<8x11520xbf16, #tpu.memory_space<vmem>>, vector<8x11520xbf16>
    %c0_4 = arith.constant 0 : index
    %c0_5 = arith.constant 0 : index
    %5 = vector.load %arg2[%c0_4, %c0_5] : memref<11520x51xbf16, #tpu.memory_space<vmem>>, vector<11520x51xbf16>
    %cst = arith.constant dense<0.000000e+00> : vector<8x51xf32>
    %6 = tpu.matmul %4, %5, %cst {dimension_numbers = #tpu.dot_dimension_numbers<[1], [0], [0], [1], [0, 0, 1, 1], [], []>} : vector<8x11520xbf16>, vector<11520x51xbf16>, vector<8x51xf32> -> vector<8x51xf32>
    %7 = arith.addf %3, %6 : vector<8x51xf32>
    %c0_6 = arith.constant 0 : index
    %c0_7 = arith.constant 0 : index
    %8 = vector.load %arg3[%c0_6, %c0_7] : memref<8x51xf32, #tpu.memory_space<vmem>>, vector<8x51xf32>
    tpu.vector_store %arg3[%c0_6, %c0_7], %7 {strides = array<i32>} : memref<8x51xf32, #tpu.memory_space<vmem>>, vector<8x51xf32>,
    return
  }
  func.func @transform_0(%arg0: i32) -> (i32, i32) {
    %c0_i32 = arith.constant 0 : i32
    %c0_i32_0 = arith.constant 0 : i32
    return %c0_i32, %arg0 : i32, i32
  }
  func.func @transform_1(%arg0: i32) -> (i32, i32) {
    %c0_i32 = arith.constant 0 : i32
    %c0_i32_0 = arith.constant 0 : i32
    return %arg0, %c0_i32 : i32, i32
  }
  func.func @transform_2(%arg0: i32) -> (i32, i32) {
    %c0_i32 = arith.constant 0 : i32
    %c0_i32_0 = arith.constant 0 : i32
    %c0_i32_1 = arith.constant 0 : i32
    return %c0_i32, %c0_i32_0 : i32, i32
  }
}

</mosaic_0001>

<llo_original>
// kernel: frequency_bias_forward.1
$region0: #{frequency_bias_forward.1}
  #allocation0 [shape = 'u32[]', space=smem, size = 0x4, offset = 0x4, fixed_abs, tag = 'smem constant byte address 0x4 - core index']
  #allocation1 [shape = 'u32[144,128]{1,0:T(1,128)}', space=vmem, size = 0x12000, scoped, tag = 'internal scratch']
  %s0 = inlined_call_operand.vmem [shape: bf16[8,23040], index: 0, kind: input, shape index: {}]
  %s1 = inlined_call_operand.vmem [shape: bf16[23040,51], index: 1, kind: input, shape index: {}]
  %s2 = inlined_call_operand.hbm [shape: f32[8,51], index: 2, kind: output, shape index: {}]
  %s3 = sld [smem:[#allocation0]]
  $region45: #{frequency_bias_forward.1} parent=0
    _
  %s5 = ssub.s32 1, %s3
  %s6 = scalar_select 0, %s5, %s3
  $region1: #{frequency_bias_forward.1} parent=0
    #allocation2 [shape = 'u8[4096]{0}', space=vmem, size = 0x1000, scoped, tag = 'output window, operand 0, single buffered']
    #allocation3 [shape = 's32[2]{0}', space=sflag, size = 0x8, scoped, tag = 'scoped memory for frequency_bias_forward.1']
    %7 = vsyncpa [#allocation3], 0
    loop: start=0, step=1, limit=4
    $region2: #{frequency_bias_forward.1} parent=1 // loop_pre_header
      _
    $region3: #{frequency_bias_forward.1} parent=1 // loop_header
      %s9 = sphi 0, %s13
      %p10 = scmp.ge.s32.totalorder %s9, 4
      %s19 = sphi 0, %s21
      %s22 = sphi 0, %s19
      %s23 = sphi 0, %s22
      %s39 = sphi 0, %s23
      %s45 = sphi 0, %s47
      %s48 = sphi 0, %s45
      %s49 = sphi 0, %s48
      %s65 = sphi 0, %s49
      %s69 = sphi 0, %s69
      %s71 = sphi 0, %s69
      %s72 = sphi 0, %s71
      %s86 = sphi 0, %s72
    $region4: #{frequency_bias_forward.1} parent=1 // loop_header_branch
      %12 = sbr.rel (%p10) target = $region8
    $region5: #{frequency_bias_forward.1} parent=1 // loop_body
      %s14 = ssub.s32 %s9, 1
      %s15 = ssub.s32 %s9, 2
      %s16 = sadd.s32 %s9, 1
      %s17 = ssub.s32 %s9, %s16
      %p18 = scmp.eq.s32.totalorder %s17, 0
      %s20 = sadd.s32 %s19, 1
      %s21 = scalar_select %p18, %s19, %s20
      %p24 = pneg %p18
      %p25 = scmp.eq.s32.totalorder %s9, 1
      %p26 = por %p24, %p25
      %p27 = scmp.ne.s32.totalorder %s19, %s22
      %p28 = scmp.eq.s32.totalorder %s9, 0
      %p29 = por %p27, %p28
      %p30 = scmp.ne.s32.totalorder %s19, %s22
      %p31 = scmp.eq.s32.totalorder %s14, 1
      %p32 = por %p30, %p31
      %p33 = scmp.ne.s32.totalorder %s22, %s23
      %p34 = scmp.eq.s32.totalorder %s14, 0
      %p35 = por %p33, %p34
      %p36 = scmp.ne.s32.totalorder %s22, %s23
      %p37 = scmp.eq.s32.totalorder %s15, 1
      %p38 = por %p36, %p37
      %p40 = scmp.ne.s32.totalorder %s23, %s39
      %p41 = scmp.eq.s32.totalorder %s15, 0
      %p42 = por %p40, %p41
      %s43 = ssub.s32 %s9, %s16
      %p44 = scmp.eq.s32.totalorder %s43, 0
      %s46 = sadd.s32 %s45, 1
      %s47 = scalar_select %p44, %s45, %s46
      %p50 = pneg %p44
      %p51 = scmp.eq.s32.totalorder %s9, 1
      %p52 = por %p50, %p51
      %p53 = scmp.ne.s32.totalorder %s45, %s48
      %p54 = scmp.eq.s32.totalorder %s9, 0
      %p55 = por %p53, %p54
      %p56 = scmp.ne.s32.totalorder %s45, %s48
      %p57 = scmp.eq.s32.totalorder %s14, 1
      %p58 = por %p56, %p57
      %p59 = scmp.ne.s32.totalorder %s48, %s49
      %p60 = scmp.eq.s32.totalorder %s14, 0
      %p61 = por %p59, %p60
      %p62 = scmp.ne.s32.totalorder %s48, %s49
      %p63 = scmp.eq.s32.totalorder %s15, 1
      %p64 = por %p62, %p63
      %p66 = scmp.ne.s32.totalorder %s49, %s65
      %p67 = scmp.eq.s32.totalorder %s15, 0
      %p68 = por %p66, %p67
      %s70 = sadd.s32 %s69, 1
      %p73 = scmp.eq.s32.totalorder %s9, 1
      %p74 = scmp.ne.s32.totalorder %s69, %s71
      %p75 = scmp.eq.s32.totalorder %s9, 0
      %p76 = por %p74, %p75
      %p77 = scmp.ne.s32.totalorder %s69, %s71
      %p78 = scmp.eq.s32.totalorder %s14, 1
      %p79 = por %p77, %p78
      %p80 = scmp.ne.s32.totalorder %s71, %s72
      %p81 = scmp.eq.s32.totalorder %s14, 0
      %p82 = por %p80, %p81
      %p83 = scmp.ne.s32.totalorder %s71, %s72
      %p84 = scmp.eq.s32.totalorder %s15, 1
      %p85 = por %p83, %p84
      %p87 = scmp.ne.s32.totalorder %s72, %s86
      %p88 = scmp.eq.s32.totalorder %s15, 0
      %p89 = por %p87, %p88
      %p90 = scmp.le.s32.totalorder 1, %s9
      %p91 = scmp.lt.s32.totalorder %s9, 3
      %p92 = pnand %p90, %p91
      %p93 = pneg %p92
      // Predicated region
      $region9: #{frequency_bias_forward.1} parent=5 // pred_check
        _
      $region10: #{frequency_bias_forward.1} parent=5 // pred_check_branch
        %95 = sbr.rel (%p92) target = $region12
      $region11: #{frequency_bias_forward.1} parent=5 // pred_region
        %s96 = ssub.s32 %s9, 1
      $region12: #{frequency_bias_forward.1} parent=5 // pred_fallthru
        _
      %p97 = scmp.lt.s32.totalorder %s9, 2
      // Predicated region
      $region13: #{frequency_bias_forward.1} parent=5 // pred_check
        %p98 = pneg %p97
      $region14: #{frequency_bias_forward.1} parent=5 // pred_check_branch
        %100 = sbr.rel (%p98) target = $region16
      $region15: #{frequency_bias_forward.1} parent=5 // pred_region
        // Predicated region
        $region17: #{frequency_bias_forward.1} parent=15 // pred_check
          %p101 = pneg %p29
        $region18: #{frequency_bias_forward.1} parent=15 // pred_check_branch
          %103 = sbr.rel (%p101) target = $region20
        $region19: #{frequency_bias_forward.1} parent=15 // pred_region
          %s104 = smul.u32 90, %s9
          %p105 = scmp.lt.s32.totalorder %s104, 179
          %s106 = scalar_select %p105, %s104, 179
          %s107 = smul.addr %s106, 4
          %s108 = scalar_lea.vmem %s0, %s107
          %s109 = smul.u32 90, %s9
        $region20: #{frequency_bias_forward.1} parent=15 // pred_fallthru
          _
        // Predicated region
        $region21: #{frequency_bias_forward.1} parent=15 // pred_check
          %p110 = pneg %p55
        $region22: #{frequency_bias_forward.1} parent=15 // pred_check_branch
          %112 = sbr.rel (%p110) target = $region24
        $region23: #{frequency_bias_forward.1} parent=15 // pred_region
          %s113 = smul.u32 1440, %s9
          %p114 = scmp.lt.s32.totalorder %s113, 2879
          %s115 = scalar_select %p114, %s113, 2879
          %s116 = smul.addr %s115, 4
          %s117 = scalar_lea.vmem %s1, %s116
          %s118 = smul.u32 1440, %s9
        $region24: #{frequency_bias_forward.1} parent=15 // pred_fallthru
          _
      $region16: #{frequency_bias_forward.1} parent=5 // pred_fallthru
        _
      %p119 = scmp.le.s32.totalorder 1, %s9
      %p120 = scmp.lt.s32.totalorder %s9, 3
      %p121 = pnand %p119, %p120
      %p122 = pneg %p121
      // Predicated region
      $region25: #{frequency_bias_forward.1} parent=5 // pred_check
        _
      $region26: #{frequency_bias_forward.1} parent=5 // pred_check_branch
        %124 = sbr.rel (%p121) target = $region28
      $region27: #{frequency_bias_forward.1} parent=5 // pred_region
        %s125 = ssub.s32 %s9, 1
        %s126 = smul.u32 90, %s14
        %p127 = scmp.lt.s32.totalorder %s126, 179
        %s128 = scalar_select %p127, %s126, 179
        %s129 = smul.addr %s128, 4
        %s130 = scalar_lea.vmem %s0, %s129
        %p131 = pneg %p35
        %p132 = pneg %p32
        %s133 = smul.u32 1440, %s14
        %p134 = scmp.lt.s32.totalorder %s133, 2879
        %s135 = scalar_select %p134, %s133, 2879
        %s136 = smul.addr %s135, 4
        %s137 = scalar_lea.vmem %s1, %s136
        %p138 = pneg %p61
        %p139 = pneg %p58
        %p140 = pneg %p82
        %p141 = pneg %p79
        %s142 = smul.u32 90, %s14
        %p143 = scmp.lt.s32.totalorder %s142, 179
        %s144 = scalar_select %p143, %s142, 179
        %s145 = smul.addr %s144, 4
        %s146 = scalar_lea.vmem %s0, %s145
        %s147 = smul.u32 90, %s14
        %s148 = smul.u32 1440, %s14
        %p149 = scmp.lt.s32.totalorder %s148, 2879
        %s150 = scalar_select %p149, %s148, 2879
        %s151 = smul.addr %s150, 4
        %s152 = scalar_lea.vmem %s1, %s151
        %s153 = smul.u32 1440, %s14
        %p155 = scmp.eq.s32.totalorder %s14, 0
        // Predicated region
        $region29: #{frequency_bias_forward.1} parent=27 // pred_check
          %p156 = pneg %p155
        $region30: #{frequency_bias_forward.1} parent=27 // pred_check_branch
          %158 = sbr.rel (%p156) target = $region32
        $region31: #{frequency_bias_forward.1} parent=27 // pred_region
          %vm159 = vcmask 416768
          %160 = vst.msk [vmem:[#allocation2] sm:$0xff] %vm159, 0.0
        $region32: #{frequency_bias_forward.1} parent=27 // pred_fallthru
          _
        %v161 = vld [vmem:[#allocation2] sm:$0xff]
        %v162 = vld [vmem:[%s146] sm:$0xff]
        %v163 = vld [vmem:[%s146 + $0x8] sm:$0xff]
        %v164 = vld [vmem:[%s146 + $0x10] sm:$0xff]
        %v165 = vld [vmem:[%s146 + $0x18] sm:$0xff]
        %v166 = vld [vmem:[%s146 + $0x20] sm:$0xff]
        %v167 = vld [vmem:[%s146 + $0x28] sm:$0xff]
        %v168 = vld [vmem:[%s146 + $0x30] sm:$0xff]
        %v169 = vld [vmem:[%s146 + $0x38] sm:$0xff]
        %v170 = vld [vmem:[%s146 + $0x40] sm:$0xff]
        %v171 = vld [vmem:[%s146 + $0x48] sm:$0xff]
        %v172 = vld [vmem:[%s146 + $0x50] sm:$0xff]
        %v173 = vld [vmem:[%s146 + $0x58] sm:$0xff]
        %v174 = vld [vmem:[%s146 + $0x60] sm:$0xff]
        %v175 = vld [vmem:[%s146 + $0x68] sm:$0xff]
        %v176 = vld [vmem:[%s146 + $0x70] sm:$0xff]
        %v177 = vld [vmem:[%s146 + $0x78] sm:$0xff]
        %v178 = vld [vmem:[%s146 + $0x80] sm:$0xff]
        %v179 = vld [vmem:[%s146 + $0x88] sm:$0xff]
        %v180 = vld [vmem:[%s146 + $0x90] sm:$0xff]
        %v181 = vld [vmem:[%s146 + $0x98] sm:$0xff]
        %v182 = vld [vmem:[%s146 + $0xa0] sm:$0xff]
        %v183 = vld [vmem:[%s146 + $0xa8] sm:$0xff]
        %v184 = vld [vmem:[%s146 + $0xb0] sm:$0xff]
        %v185 = vld [vmem:[%s146 + $0xb8] sm:$0xff]
        %v186 = vld [vmem:[%s146 + $0xc0] sm:$0xff]
        %v187 = vld [vmem:[%s146 + $0xc8] sm:$0xff]
        %v188 = vld [vmem:[%s146 + $0xd0] sm:$0xff]
        %v189 = vld [vmem:[%s146 + $0xd8] sm:$0xff]
        %v190 = vld [vmem:[%s146 + $0xe0] sm:$0xff]
        %v191 = vld [vmem:[%s146 + $0xe8] sm:$0xff]
        %v192 = vld [vmem:[%s146 + $0xf0] sm:$0xff]
        %v193 = vld [vmem:[%s146 + $0xf8] sm:$0xff]
        %v194 = vld [vmem:[%s146 + $0x100] sm:$0xff]
        %v195 = vld [vmem:[%s146 + $0x108] sm:$0xff]
        %v196 = vld [vmem:[%s146 + $0x110] sm:$0xff]
        %v197 = vld [vmem:[%s146 + $0x118] sm:$0xff]
        %v198 = vld [vmem:[%s146 + $0x120] sm:$0xff]
        %v199 = vld [vmem:[%s146 + $0x128] sm:$0xff]
        %v200 = vld [vmem:[%s146 + $0x130] sm:$0xff]
        %v201 = vld [vmem:[%s146 + $0x138] sm:$0xff]
        %v202 = vld [vmem:[%s146 + $0x140] sm:$0xff]
        %v203 = vld [vmem:[%s146 + $0x148] sm:$0xff]
        %v204 = vld [vmem:[%s146 + $0x150] sm:$0xff]
        %v205 = vld [vmem:[%s146 + $0x158] sm:$0xff]
        %v206 = vld [vmem:[%s146 + $0x160] sm:$0xff]
        %v207 = vld [vmem:[%s152] sm:$0xf]
        %v208 = vld [vmem:[%s152 + $0x4] sm:$0xf]
        %v209 = vld [vmem:[%s152 + $0x8] sm:$0xf]
        %v210 = vld [vmem:[%s152 + $0xc] sm:$0xf]
        %v211 = vld [vmem:[%s152 + $0x10] sm:$0xf]
        %v212 = vld [vmem:[%s152 + $0x14] sm:$0xf]
        %v213 = vld [vmem:[%s152 + $0x18] sm:$0xf]
        %v214 = vld [vmem:[%s152 + $0x1c] sm:$0xf]
        %v215 = vld [vmem:[%s152 + $0x20] sm:$0xf]
        %v216 = vld [vmem:[%s152 + $0x24] sm:$0xf]
        %v217 = vld [vmem:[%s152 + $0x28] sm:$0xf]
        %v218 = vld [vmem:[%s152 + $0x2c] sm:$0xf]
        %v219 = vld [vmem:[%s152 + $0x30] sm:$0xf]
        %v220 = vld [vmem:[%s152 + $0x34] sm:$0xf]
        %v221 = vld [vmem:[%s152 + $0x38] sm:$0xf]
        %v222 = vld [vmem:[%s152 + $0x3c] sm:$0xf]
        %v223 = vld [vmem:[%s152 + $0x40] sm:$0xf]
        %v224 = vld [vmem:[%s152 + $0x44] sm:$0xf]
        %v225 = vld [vmem:[%s152 + $0x48] sm:$0xf]
        %v226 = vld [vmem:[%s152 + $0x4c] sm:$0xf]
        %v227 = vld [vmem:[%s152 + $0x50] sm:$0xf]
        %v228 = vld [vmem:[%s152 + $0x54] sm:$0xf]
        %v229 = vld [vmem:[%s152 + $0x58] sm:$0xf]
        %v230 = vld [vmem:[%s152 + $0x5c] sm:$0xf]
        %v231 = vld [vmem:[%s152 + $0x60] sm:$0xf]
        %v232 = vld [vmem:[%s152 + $0x64] sm:$0xf]
        %v233 = vld [vmem:[%s152 + $0x68] sm:$0xf]
        %v234 = vld [vmem:[%s152 + $0x6c] sm:$0xf]
        %v235 = vld [vmem:[%s152 + $0x70] sm:$0xf]
        %v236 = vld [vmem:[%s152 + $0x74] sm:$0xf]
        %v237 = vld [vmem:[%s152 + $0x78] sm:$0xf]
        %v238 = vld [vmem:[%s152 + $0x7c] sm:$0xf]
        %v239 = vld [vmem:[%s152 + $0x80] sm:$0xf]
        %v240 = vld [vmem:[%s152 + $0x84] sm:$0xf]
        %v241 = vld [vmem:[%s152 + $0x88] sm:$0xf]
        %v242 = vld [vmem:[%s152 + $0x8c] sm:$0xf]
        %v243 = vld [vmem:[%s152 + $0x90] sm:$0xf]
        %v244 = vld [vmem:[%s152 + $0x94] sm:$0xf]
        %v245 = vld [vmem:[%s152 + $0x98] sm:$0xf]
        %v246 = vld [vmem:[%s152 + $0x9c] sm:$0xf]
        %v247 = vld [vmem:[%s152 + $0xa0] sm:$0xf]
        %v248 = vld [vmem:[%s152 + $0xa4] sm:$0xf]
        %v249 = vld [vmem:[%s152 + $0xa8] sm:$0xf]
        %v250 = vld [vmem:[%s152 + $0xac] sm:$0xf]
        %v251 = vld [vmem:[%s152 + $0xb0] sm:$0xf]
        %v252 = vld [vmem:[%s152 + $0xb4] sm:$0xf]
        %v253 = vld [vmem:[%s152 + $0xb8] sm:$0xf]
        %v254 = vld [vmem:[%s152 + $0xbc] sm:$0xf]
        %v255 = vld [vmem:[%s152 + $0xc0] sm:$0xf]
        %v256 = vld [vmem:[%s152 + $0xc4] sm:$0xf]
        %v257 = vld [vmem:[%s152 + $0xc8] sm:$0xf]
        %v258 = vld [vmem:[%s152 + $0xcc] sm:$0xf]
        %v259 = vld [vmem:[%s152 + $0xd0] sm:$0xf]
        %v260 = vld [vmem:[%s152 + $0xd4] sm:$0xf]
        %v261 = vld [vmem:[%s152 + $0xd8] sm:$0xf]
        %v262 = vld [vmem:[%s152 + $0xdc] sm:$0xf]
        %v263 = vld [vmem:[%s152 + $0xe0] sm:$0xf]
        %v264 = vld [vmem:[%s152 + $0xe4] sm:$0xf]
        %v265 = vld [vmem:[%s152 + $0xe8] sm:$0xf]
        %v266 = vld [vmem:[%s152 + $0xec] sm:$0xf]
        %v267 = vld [vmem:[%s152 + $0xf0] sm:$0xf]
        %v268 = vld [vmem:[%s152 + $0xf4] sm:$0xf]
        %v269 = vld [vmem:[%s152 + $0xf8] sm:$0xf]
        %v270 = vld [vmem:[%s152 + $0xfc] sm:$0xf]
        %v271 = vld [vmem:[%s152 + $0x100] sm:$0xf]
        %v272 = vld [vmem:[%s152 + $0x104] sm:$0xf]
        %v273 = vld [vmem:[%s152 + $0x108] sm:$0xf]
        %v274 = vld [vmem:[%s152 + $0x10c] sm:$0xf]
        %v275 = vld [vmem:[%s152 + $0x110] sm:$0xf]
        %v276 = vld [vmem:[%s152 + $0x114] sm:$0xf]
        %v277 = vld [vmem:[%s152 + $0x118] sm:$0xf]
        %v278 = vld [vmem:[%s152 + $0x11c] sm:$0xf]
        %v279 = vld [vmem:[%s152 + $0x120] sm:$0xf]
        %v280 = vld [vmem:[%s152 + $0x124] sm:$0xf]
        %v281 = vld [vmem:[%s152 + $0x128] sm:$0xf]
        %v282 = vld [vmem:[%s152 + $0x12c] sm:$0xf]
        %v283 = vld [vmem:[%s152 + $0x130] sm:$0xf]
        %v284 = vld [vmem:[%s152 + $0x134] sm:$0xf]
        %v285 = vld [vmem:[%s152 + $0x138] sm:$0xf]
        %v286 = vld [vmem:[%s152 + $0x13c] sm:$0xf]
        %v287 = vld [vmem:[%s152 + $0x140] sm:$0xf]
        %v288 = vld [vmem:[%s152 + $0x144] sm:$0xf]
        %v289 = vld [vmem:[%s152 + $0x148] sm:$0xf]
        %v290 = vld [vmem:[%s152 + $0x14c] sm:$0xf]
        %v291 = vld [vmem:[%s152 + $0x150] sm:$0xf]
        %v292 = vld [vmem:[%s152 + $0x154] sm:$0xf]
        %v293 = vld [vmem:[%s152 + $0x158] sm:$0xf]
        %v294 = vld [vmem:[%s152 + $0x15c] sm:$0xf]
        %v295 = vld [vmem:[%s152 + $0x160] sm:$0xf]
        %v296 = vld [vmem:[%s152 + $0x164] sm:$0xf]
        %v297 = vld [vmem:[%s152 + $0x168] sm:$0xf]
        %v298 = vld [vmem:[%s152 + $0x16c] sm:$0xf]
        %v299 = vld [vmem:[%s152 + $0x170] sm:$0xf]
        %v300 = vld [vmem:[%s152 + $0x174] sm:$0xf]
        %v301 = vld [vmem:[%s152 + $0x178] sm:$0xf]
        %v302 = vld [vmem:[%s152 + $0x17c] sm:$0xf]
        %v303 = vld [vmem:[%s152 + $0x180] sm:$0xf]
        %v304 = vld [vmem:[%s152 + $0x184] sm:$0xf]
        %v305 = vld [vmem:[%s152 + $0x188] sm:$0xf]
        %v306 = vld [vmem:[%s152 + $0x18c] sm:$0xf]
        %v307 = vld [vmem:[%s152 + $0x190] sm:$0xf]
        %v308 = vld [vmem:[%s152 + $0x194] sm:$0xf]
        %v309 = vld [vmem:[%s152 + $0x198] sm:$0xf]
        %v310 = vld [vmem:[%s152 + $0x19c] sm:$0xf]
        %v311 = vld [vmem:[%s152 + $0x1a0] sm:$0xf]
        %v312 = vld [vmem:[%s152 + $0x1a4] sm:$0xf]
        %v313 = vld [vmem:[%s152 + $0x1a8] sm:$0xf]
        %v314 = vld [vmem:[%s152 + $0x1ac] sm:$0xf]
        %v315 = vld [vmem:[%s152 + $0x1b0] sm:$0xf]
        %v316 = vld [vmem:[%s152 + $0x1b4] sm:$0xf]
        %v317 = vld [vmem:[%s152 + $0x1b8] sm:$0xf]
        %v318 = vld [vmem:[%s152 + $0x1bc] sm:$0xf]
        %v319 = vld [vmem:[%s152 + $0x1c0] sm:$0xf]
        %v320 = vld [vmem:[%s152 + $0x1c4] sm:$0xf]
        %v321 = vld [vmem:[%s152 + $0x1c8] sm:$0xf]
        %v322 = vld [vmem:[%s152 + $0x1cc] sm:$0xf]
        %v323 = vld [vmem:[%s152 + $0x1d0] sm:$0xf]
        %v324 = vld [vmem:[%s152 + $0x1d4] sm:$0xf]
        %v325 = vld [vmem:[%s152 + $0x1d8] sm:$0xf]
        %v326 = vld [vmem:[%s152 + $0x1dc] sm:$0xf]
        %v327 = vld [vmem:[%s152 + $0x1e0] sm:$0xf]
        %v328 = vld [vmem:[%s152 + $0x1e4] sm:$0xf]
        %v329 = vld [vmem:[%s152 + $0x1e8] sm:$0xf]
        %v330 = vld [vmem:[%s152 + $0x1ec] sm:$0xf]
        %v331 = vld [vmem:[%s152 + $0x1f0] sm:$0xf]
        %v332 = vld [vmem:[%s152 + $0x1f4] sm:$0xf]
        %v333 = vld [vmem:[%s152 + $0x1f8] sm:$0xf]
        %v334 = vld [vmem:[%s152 + $0x1fc] sm:$0xf]
        %v335 = vld [vmem:[%s152 + $0x200] sm:$0xf]
        %v336 = vld [vmem:[%s152 + $0x204] sm:$0xf]
        %v337 = vld [vmem:[%s152 + $0x208] sm:$0xf]
        %v338 = vld [vmem:[%s152 + $0x20c] sm:$0xf]
        %v339 = vld [vmem:[%s152 + $0x210] sm:$0xf]
        %v340 = vld [vmem:[%s152 + $0x214] sm:$0xf]
        %v341 = vld [vmem:[%s152 + $0x218] sm:$0xf]
        %v342 = vld [vmem:[%s152 + $0x21c] sm:$0xf]
        %v343 = vld [vmem:[%s152 + $0x220] sm:$0xf]
        %v344 = vld [vmem:[%s152 + $0x224] sm:$0xf]
        %v345 = vld [vmem:[%s152 + $0x228] sm:$0xf]
        %v346 = vld [vmem:[%s152 + $0x22c] sm:$0xf]
        %v347 = vld [vmem:[%s152 + $0x230] sm:$0xf]
        %v348 = vld [vmem:[%s152 + $0x234] sm:$0xf]
        %v349 = vld [vmem:[%s152 + $0x238] sm:$0xf]
        %v350 = vld [vmem:[%s152 + $0x23c] sm:$0xf]
        %v351 = vld [vmem:[%s152 + $0x240] sm:$0xf]
        %v352 = vld [vmem:[%s152 + $0x244] sm:$0xf]
        %v353 = vld [vmem:[%s152 + $0x248] sm:$0xf]
        %v354 = vld [vmem:[%s152 + $0x24c] sm:$0xf]
        %v355 = vld [vmem:[%s152 + $0x250] sm:$0xf]
        %v356 = vld [vmem:[%s152 + $0x254] sm:$0xf]
        %v357 = vld [vmem:[%s152 + $0x258] sm:$0xf]
        %v358 = vld [vmem:[%s152 + $0x25c] sm:$0xf]
        %v359 = vld [vmem:[%s152 + $0x260] sm:$0xf]
        %v360 = vld [vmem:[%s152 + $0x264] sm:$0xf]
        %v361 = vld [vmem:[%s152 + $0x268] sm:$0xf]
        %v362 = vld [vmem:[%s152 + $0x26c] sm:$0xf]
        %v363 = vld [vmem:[%s152 + $0x270] sm:$0xf]
        %v364 = vld [vmem:[%s152 + $0x274] sm:$0xf]
        %v365 = vld [vmem:[%s152 + $0x278] sm:$0xf]
        %v366 = vld [vmem:[%s152 + $0x27c] sm:$0xf]
        %v367 = vld [vmem:[%s152 + $0x280] sm:$0xf]
        %v368 = vld [vmem:[%s152 + $0x284] sm:$0xf]
        %v369 = vld [vmem:[%s152 + $0x288] sm:$0xf]
        %v370 = vld [vmem:[%s152 + $0x28c] sm:$0xf]
        %v371 = vld [vmem:[%s152 + $0x290] sm:$0xf]
        %v372 = vld [vmem:[%s152 + $0x294] sm:$0xf]
        %v373 = vld [vmem:[%s152 + $0x298] sm:$0xf]
        %v374 = vld [vmem:[%s152 + $0x29c] sm:$0xf]
        %v375 = vld [vmem:[%s152 + $0x2a0] sm:$0xf]
        %v376 = vld [vmem:[%s152 + $0x2a4] sm:$0xf]
        %v377 = vld [vmem:[%s152 + $0x2a8] sm:$0xf]
        %v378 = vld [vmem:[%s152 + $0x2ac] sm:$0xf]
        %v379 = vld [vmem:[%s152 + $0x2b0] sm:$0xf]
        %v380 = vld [vmem:[%s152 + $0x2b4] sm:$0xf]
        %v381 = vld [vmem:[%s152 + $0x2b8] sm:$0xf]
        %v382 = vld [vmem:[%s152 + $0x2bc] sm:$0xf]
        %v383 = vld [vmem:[%s152 + $0x2c0] sm:$0xf]
        %v384 = vld [vmem:[%s152 + $0x2c4] sm:$0xf]
        %v385 = vld [vmem:[%s152 + $0x2c8] sm:$0xf]
        %v386 = vld [vmem:[%s152 + $0x2cc] sm:$0xf]
        %v387 = vld [vmem:[%s152 + $0x2d0] sm:$0xf]
        %v388 = vld [vmem:[%s152 + $0x2d4] sm:$0xf]
        %v389 = vld [vmem:[%s152 + $0x2d8] sm:$0xf]
        %v390 = vld [vmem:[%s152 + $0x2dc] sm:$0xf]
        %v391 = vld [vmem:[%s152 + $0x2e0] sm:$0xf]
        %v392 = vld [vmem:[%s152 + $0x2e4] sm:$0xf]
        %v393 = vld [vmem:[%s152 + $0x2e8] sm:$0xf]
        %v394 = vld [vmem:[%s152 + $0x2ec] sm:$0xf]
        %v395 = vld [vmem:[%s152 + $0x2f0] sm:$0xf]
        %v396 = vld [vmem:[%s152 + $0x2f4] sm:$0xf]
        %v397 = vld [vmem:[%s152 + $0x2f8] sm:$0xf]
        %v398 = vld [vmem:[%s152 + $0x2fc] sm:$0xf]
        %v399 = vld [vmem:[%s152 + $0x300] sm:$0xf]
        %v400 = vld [vmem:[%s152 + $0x304] sm:$0xf]
        %v401 = vld [vmem:[%s152 + $0x308] sm:$0xf]
        %v402 = vld [vmem:[%s152 + $0x30c] sm:$0xf]
        %v403 = vld [vmem:[%s152 + $0x310] sm:$0xf]
        %v404 = vld [vmem:[%s152 + $0x314] sm:$0xf]
        %v405 = vld [vmem:[%s152 + $0x318] sm:$0xf]
        %v406 = vld [vmem:[%s152 + $0x31c] sm:$0xf]
        %v407 = vld [vmem:[%s152 + $0x320] sm:$0xf]
        %v408 = vld [vmem:[%s152 + $0x324] sm:$0xf]
        %v409 = vld [vmem:[%s152 + $0x328] sm:$0xf]
        %v410 = vld [vmem:[%s152 + $0x32c] sm:$0xf]
        %v411 = vld [vmem:[%s152 + $0x330] sm:$0xf]
        %v412 = vld [vmem:[%s152 + $0x334] sm:$0xf]
        %v413 = vld [vmem:[%s152 + $0x338] sm:$0xf]
        %v414 = vld [vmem:[%s152 + $0x33c] sm:$0xf]
        %v415 = vld [vmem:[%s152 + $0x340] sm:$0xf]
        %v416 = vld [vmem:[%s152 + $0x344] sm:$0xf]
        %v417 = vld [vmem:[%s152 + $0x348] sm:$0xf]
        %v418 = vld [vmem:[%s152 + $0x34c] sm:$0xf]
        %v419 = vld [vmem:[%s152 + $0x350] sm:$0xf]
        %v420 = vld [vmem:[%s152 + $0x354] sm:$0xf]
        %v421 = vld [vmem:[%s152 + $0x358] sm:$0xf]
        %v422 = vld [vmem:[%s152 + $0x35c] sm:$0xf]
        %v423 = vld [vmem:[%s152 + $0x360] sm:$0xf]
        %v424 = vld [vmem:[%s152 + $0x364] sm:$0xf]
        %v425 = vld [vmem:[%s152 + $0x368] sm:$0xf]
        %v426 = vld [vmem:[%s152 + $0x36c] sm:$0xf]
        %v427 = vld [vmem:[%s152 + $0x370] sm:$0xf]
        %v428 = vld [vmem:[%s152 + $0x374] sm:$0xf]
        %v429 = vld [vmem:[%s152 + $0x378] sm:$0xf]
        %v430 = vld [vmem:[%s152 + $0x37c] sm:$0xf]
        %v431 = vld [vmem:[%s152 + $0x380] sm:$0xf]
        %v432 = vld [vmem:[%s152 + $0x384] sm:$0xf]
        %v433 = vld [vmem:[%s152 + $0x388] sm:$0xf]
        %v434 = vld [vmem:[%s152 + $0x38c] sm:$0xf]
        %v435 = vld [vmem:[%s152 + $0x390] sm:$0xf]
        %v436 = vld [vmem:[%s152 + $0x394] sm:$0xf]
        %v437 = vld [vmem:[%s152 + $0x398] sm:$0xf]
        %v438 = vld [vmem:[%s152 + $0x39c] sm:$0xf]
        %v439 = vld [vmem:[%s152 + $0x3a0] sm:$0xf]
        %v440 = vld [vmem:[%s152 + $0x3a4] sm:$0xf]
        %v441 = vld [vmem:[%s152 + $0x3a8] sm:$0xf]
        %v442 = vld [vmem:[%s152 + $0x3ac] sm:$0xf]
        %v443 = vld [vmem:[%s152 + $0x3b0] sm:$0xf]
        %v444 = vld [vmem:[%s152 + $0x3b4] sm:$0xf]
        %v445 = vld [vmem:[%s152 + $0x3b8] sm:$0xf]
        %v446 = vld [vmem:[%s152 + $0x3bc] sm:$0xf]
        %v447 = vld [vmem:[%s152 + $0x3c0] sm:$0xf]
        %v448 = vld [vmem:[%s152 + $0x3c4] sm:$0xf]
        %v449 = vld [vmem:[%s152 + $0x3c8] sm:$0xf]
        %v450 = vld [vmem:[%s152 + $0x3cc] sm:$0xf]
        %v451 = vld [vmem:[%s152 + $0x3d0] sm:$0xf]
        %v452 = vld [vmem:[%s152 + $0x3d4] sm:$0xf]
        %v453 = vld [vmem:[%s152 + $0x3d8] sm:$0xf]
        %v454 = vld [vmem:[%s152 + $0x3dc] sm:$0xf]
        %v455 = vld [vmem:[%s152 + $0x3e0] sm:$0xf]
        %v456 = vld [vmem:[%s152 + $0x3e4] sm:$0xf]
        %v457 = vld [vmem:[%s152 + $0x3e8] sm:$0xf]
        %v458 = vld [vmem:[%s152 + $0x3ec] sm:$0xf]
        %v459 = vld [vmem:[%s152 + $0x3f0] sm:$0xf]
        %v460 = vld [vmem:[%s152 + $0x3f4] sm:$0xf]
        %v461 = vld [vmem:[%s152 + $0x3f8] sm:$0xf]
        %v462 = vld [vmem:[%s152 + $0x3fc] sm:$0xf]
        %v463 = vld [vmem:[%s152 + $0x400] sm:$0xf]
        %v464 = vld [vmem:[%s152 + $0x404] sm:$0xf]
        %v465 = vld [vmem:[%s152 + $0x408] sm:$0xf]
        %v466 = vld [vmem:[%s152 + $0x40c] sm:$0xf]
        %v467 = vld [vmem:[%s152 + $0x410] sm:$0xf]
        %v468 = vld [vmem:[%s152 + $0x414] sm:$0xf]
        %v469 = vld [vmem:[%s152 + $0x418] sm:$0xf]
        %v470 = vld [vmem:[%s152 + $0x41c] sm:$0xf]
        %v471 = vld [vmem:[%s152 + $0x420] sm:$0xf]
        %v472 = vld [vmem:[%s152 + $0x424] sm:$0xf]
        %v473 = vld [vmem:[%s152 + $0x428] sm:$0xf]
        %v474 = vld [vmem:[%s152 + $0x42c] sm:$0xf]
        %v475 = vld [vmem:[%s152 + $0x430] sm:$0xf]
        %v476 = vld [vmem:[%s152 + $0x434] sm:$0xf]
        %v477 = vld [vmem:[%s152 + $0x438] sm:$0xf]
        %v478 = vld [vmem:[%s152 + $0x43c] sm:$0xf]
        %v479 = vld [vmem:[%s152 + $0x440] sm:$0xf]
        %v480 = vld [vmem:[%s152 + $0x444] sm:$0xf]
        %v481 = vld [vmem:[%s152 + $0x448] sm:$0xf]
        %v482 = vld [vmem:[%s152 + $0x44c] sm:$0xf]
        %v483 = vld [vmem:[%s152 + $0x450] sm:$0xf]
        %v484 = vld [vmem:[%s152 + $0x454] sm:$0xf]
        %v485 = vld [vmem:[%s152 + $0x458] sm:$0xf]
        %v486 = vld [vmem:[%s152 + $0x45c] sm:$0xf]
        %v487 = vld [vmem:[%s152 + $0x460] sm:$0xf]
        %v488 = vld [vmem:[%s152 + $0x464] sm:$0xf]
        %v489 = vld [vmem:[%s152 + $0x468] sm:$0xf]
        %v490 = vld [vmem:[%s152 + $0x46c] sm:$0xf]
        %v491 = vld [vmem:[%s152 + $0x470] sm:$0xf]
        %v492 = vld [vmem:[%s152 + $0x474] sm:$0xf]
        %v493 = vld [vmem:[%s152 + $0x478] sm:$0xf]
        %v494 = vld [vmem:[%s152 + $0x47c] sm:$0xf]
        %v495 = vld [vmem:[%s152 + $0x480] sm:$0xf]
        %v496 = vld [vmem:[%s152 + $0x484] sm:$0xf]
        %v497 = vld [vmem:[%s152 + $0x488] sm:$0xf]
        %v498 = vld [vmem:[%s152 + $0x48c] sm:$0xf]
        %v499 = vld [vmem:[%s152 + $0x490] sm:$0xf]
        %v500 = vld [vmem:[%s152 + $0x494] sm:$0xf]
        %v501 = vld [vmem:[%s152 + $0x498] sm:$0xf]
        %v502 = vld [vmem:[%s152 + $0x49c] sm:$0xf]
        %v503 = vld [vmem:[%s152 + $0x4a0] sm:$0xf]
        %v504 = vld [vmem:[%s152 + $0x4a4] sm:$0xf]
        %v505 = vld [vmem:[%s152 + $0x4a8] sm:$0xf]
        %v506 = vld [vmem:[%s152 + $0x4ac] sm:$0xf]
        %v507 = vld [vmem:[%s152 + $0x4b0] sm:$0xf]
        %v508 = vld [vmem:[%s152 + $0x4b4] sm:$0xf]
        %v509 = vld [vmem:[%s152 + $0x4b8] sm:$0xf]
        %v510 = vld [vmem:[%s152 + $0x4bc] sm:$0xf]
        %v511 = vld [vmem:[%s152 + $0x4c0] sm:$0xf]
        %v512 = vld [vmem:[%s152 + $0x4c4] sm:$0xf]
        %v513 = vld [vmem:[%s152 + $0x4c8] sm:$0xf]
        %v514 = vld [vmem:[%s152 + $0x4cc] sm:$0xf]
        %v515 = vld [vmem:[%s152 + $0x4d0] sm:$0xf]
        %v516 = vld [vmem:[%s152 + $0x4d4] sm:$0xf]
        %v517 = vld [vmem:[%s152 + $0x4d8] sm:$0xf]
        %v518 = vld [vmem:[%s152 + $0x4dc] sm:$0xf]
        %v519 = vld [vmem:[%s152 + $0x4e0] sm:$0xf]
        %v520 = vld [vmem:[%s152 + $0x4e4] sm:$0xf]
        %v521 = vld [vmem:[%s152 + $0x4e8] sm:$0xf]
        %v522 = vld [vmem:[%s152 + $0x4ec] sm:$0xf]
        %v523 = vld [vmem:[%s152 + $0x4f0] sm:$0xf]
        %v524 = vld [vmem:[%s152 + $0x4f4] sm:$0xf]
        %v525 = vld [vmem:[%s152 + $0x4f8] sm:$0xf]
        %v526 = vld [vmem:[%s152 + $0x4fc] sm:$0xf]
        %v527 = vld [vmem:[%s152 + $0x500] sm:$0xf]
        %v528 = vld [vmem:[%s152 + $0x504] sm:$0xf]
        %v529 = vld [vmem:[%s152 + $0x508] sm:$0xf]
        %v530 = vld [vmem:[%s152 + $0x50c] sm:$0xf]
        %v531 = vld [vmem:[%s152 + $0x510] sm:$0xf]
        %v532 = vld [vmem:[%s152 + $0x514] sm:$0xf]
        %v533 = vld [vmem:[%s152 + $0x518] sm:$0xf]
        %v534 = vld [vmem:[%s152 + $0x51c] sm:$0xf]
        %v535 = vld [vmem:[%s152 + $0x520] sm:$0xf]
        %v536 = vld [vmem:[%s152 + $0x524] sm:$0xf]
        %v537 = vld [vmem:[%s152 + $0x528] sm:$0xf]
        %v538 = vld [vmem:[%s152 + $0x52c] sm:$0xf]
        %v539 = vld [vmem:[%s152 + $0x530] sm:$0xf]
        %v540 = vld [vmem:[%s152 + $0x534] sm:$0xf]
        %v541 = vld [vmem:[%s152 + $0x538] sm:$0xf]
        %v542 = vld [vmem:[%s152 + $0x53c] sm:$0xf]
        %v543 = vld [vmem:[%s152 + $0x540] sm:$0xf]
        %v544 = vld [vmem:[%s152 + $0x544] sm:$0xf]
        %v545 = vld [vmem:[%s152 + $0x548] sm:$0xf]
        %v546 = vld [vmem:[%s152 + $0x54c] sm:$0xf]
        %v547 = vld [vmem:[%s152 + $0x550] sm:$0xf]
        %v548 = vld [vmem:[%s152 + $0x554] sm:$0xf]
        %v549 = vld [vmem:[%s152 + $0x558] sm:$0xf]
        %v550 = vld [vmem:[%s152 + $0x55c] sm:$0xf]
        %v551 = vld [vmem:[%s152 + $0x560] sm:$0xf]
        %v552 = vld [vmem:[%s152 + $0x564] sm:$0xf]
        %v553 = vld [vmem:[%s152 + $0x568] sm:$0xf]
        %v554 = vld [vmem:[%s152 + $0x56c] sm:$0xf]
        %v555 = vld [vmem:[%s152 + $0x570] sm:$0xf]
        %v556 = vld [vmem:[%s152 + $0x574] sm:$0xf]
        %v557 = vld [vmem:[%s152 + $0x578] sm:$0xf]
        %v558 = vld [vmem:[%s152 + $0x57c] sm:$0xf]
        %v559 = vld [vmem:[%s152 + $0x580] sm:$0xf]
        %v560 = vld [vmem:[%s152 + $0x584] sm:$0xf]
        %v561 = vld [vmem:[%s152 + $0x588] sm:$0xf]
        %v562 = vld [vmem:[%s152 + $0x58c] sm:$0xf]
        %v563 = vld [vmem:[%s152 + $0x590] sm:$0xf]
        %v564 = vld [vmem:[%s152 + $0x594] sm:$0xf]
        %v565 = vld [vmem:[%s152 + $0x598] sm:$0xf]
        %v566 = vld [vmem:[%s152 + $0x59c] sm:$0xf]
        %v567 = vld [vmem:[%s152 + $0x5a0] sm:$0xf]
        %v568 = vld [vmem:[%s152 + $0x5a4] sm:$0xf]
        %v569 = vld [vmem:[%s152 + $0x5a8] sm:$0xf]
        %v570 = vld [vmem:[%s152 + $0x5ac] sm:$0xf]
        %v571 = vld [vmem:[%s152 + $0x5b0] sm:$0xf]
        %v572 = vld [vmem:[%s152 + $0x5b4] sm:$0xf]
        %v573 = vld [vmem:[%s152 + $0x5b8] sm:$0xf]
        %v574 = vld [vmem:[%s152 + $0x5bc] sm:$0xf]
        %v575 = vld [vmem:[%s152 + $0x5c0] sm:$0xf]
        %v576 = vld [vmem:[%s152 + $0x5c4] sm:$0xf]
        %v577 = vld [vmem:[%s152 + $0x5c8] sm:$0xf]
        %v578 = vld [vmem:[%s152 + $0x5cc] sm:$0xf]
        %v579 = vld [vmem:[%s152 + $0x5d0] sm:$0xf]
        %v580 = vld [vmem:[%s152 + $0x5d4] sm:$0xf]
        %v581 = vld [vmem:[%s152 + $0x5d8] sm:$0xf]
        %v582 = vld [vmem:[%s152 + $0x5dc] sm:$0xf]
        %v583 = vld [vmem:[%s152 + $0x5e0] sm:$0xf]
        %v584 = vld [vmem:[%s152 + $0x5e4] sm:$0xf]
        %v585 = vld [vmem:[%s152 + $0x5e8] sm:$0xf]
        %v586 = vld [vmem:[%s152 + $0x5ec] sm:$0xf]
        %v587 = vld [vmem:[%s152 + $0x5f0] sm:$0xf]
        %v588 = vld [vmem:[%s152 + $0x5f4] sm:$0xf]
        %v589 = vld [vmem:[%s152 + $0x5f8] sm:$0xf]
        %v590 = vld [vmem:[%s152 + $0x5fc] sm:$0xf]
        %v591 = vld [vmem:[%s152 + $0x600] sm:$0xf]
        %v592 = vld [vmem:[%s152 + $0x604] sm:$0xf]
        %v593 = vld [vmem:[%s152 + $0x608] sm:$0xf]
        %v594 = vld [vmem:[%s152 + $0x60c] sm:$0xf]
        %v595 = vld [vmem:[%s152 + $0x610] sm:$0xf]
        %v596 = vld [vmem:[%s152 + $0x614] sm:$0xf]
        %v597 = vld [vmem:[%s152 + $0x618] sm:$0xf]
        %v598 = vld [vmem:[%s152 + $0x61c] sm:$0xf]
        %v599 = vld [vmem:[%s152 + $0x620] sm:$0xf]
        %v600 = vld [vmem:[%s152 + $0x624] sm:$0xf]
        %v601 = vld [vmem:[%s152 + $0x628] sm:$0xf]
        %v602 = vld [vmem:[%s152 + $0x62c] sm:$0xf]
        %v603 = vld [vmem:[%s152 + $0x630] sm:$0xf]
        %v604 = vld [vmem:[%s152 + $0x634] sm:$0xf]
        %v605 = vld [vmem:[%s152 + $0x638] sm:$0xf]
        %v606 = vld [vmem:[%s152 + $0x63c] sm:$0xf]
        %v607 = vld [vmem:[%s152 + $0x640] sm:$0xf]
        %v608 = vld [vmem:[%s152 + $0x644] sm:$0xf]
        %v609 = vld [vmem:[%s152 + $0x648] sm:$0xf]
        %v610 = vld [vmem:[%s152 + $0x64c] sm:$0xf]
        %v611 = vld [vmem:[%s152 + $0x650] sm:$0xf]
        %v612 = vld [vmem:[%s152 + $0x654] sm:$0xf]
        %v613 = vld [vmem:[%s152 + $0x658] sm:$0xf]
        %v614 = vld [vmem:[%s152 + $0x65c] sm:$0xf]
        %v615 = vld [vmem:[%s152 + $0x660] sm:$0xf]
        %v616 = vld [vmem:[%s152 + $0x664] sm:$0xf]
        %v617 = vld [vmem:[%s152 + $0x668] sm:$0xf]
        %v618 = vld [vmem:[%s152 + $0x66c] sm:$0xf]
        %v619 = vld [vmem:[%s152 + $0x670] sm:$0xf]
        %v620 = vld [vmem:[%s152 + $0x674] sm:$0xf]
        %v621 = vld [vmem:[%s152 + $0x678] sm:$0xf]
        %v622 = vld [vmem:[%s152 + $0x67c] sm:$0xf]
        %v623 = vld [vmem:[%s152 + $0x680] sm:$0xf]
        %v624 = vld [vmem:[%s152 + $0x684] sm:$0xf]
        %v625 = vld [vmem:[%s152 + $0x688] sm:$0xf]
        %v626 = vld [vmem:[%s152 + $0x68c] sm:$0xf]
        %v627 = vld [vmem:[%s152 + $0x690] sm:$0xf]
        %v628 = vld [vmem:[%s152 + $0x694] sm:$0xf]
        %v629 = vld [vmem:[%s152 + $0x698] sm:$0xf]
        %v630 = vld [vmem:[%s152 + $0x69c] sm:$0xf]
        %v631 = vld [vmem:[%s152 + $0x6a0] sm:$0xf]
        %v632 = vld [vmem:[%s152 + $0x6a4] sm:$0xf]
        %v633 = vld [vmem:[%s152 + $0x6a8] sm:$0xf]
        %v634 = vld [vmem:[%s152 + $0x6ac] sm:$0xf]
        %v635 = vld [vmem:[%s152 + $0x6b0] sm:$0xf]
        %v636 = vld [vmem:[%s152 + $0x6b4] sm:$0xf]
        %v637 = vld [vmem:[%s152 + $0x6b8] sm:$0xf]
        %v638 = vld [vmem:[%s152 + $0x6bc] sm:$0xf]
        %v639 = vld [vmem:[%s152 + $0x6c0] sm:$0xf]
        %v640 = vld [vmem:[%s152 + $0x6c4] sm:$0xf]
        %v641 = vld [vmem:[%s152 + $0x6c8] sm:$0xf]
        %v642 = vld [vmem:[%s152 + $0x6cc] sm:$0xf]
        %v643 = vld [vmem:[%s152 + $0x6d0] sm:$0xf]
        %v644 = vld [vmem:[%s152 + $0x6d4] sm:$0xf]
        %v645 = vld [vmem:[%s152 + $0x6d8] sm:$0xf]
        %v646 = vld [vmem:[%s152 + $0x6dc] sm:$0xf]
        %v647 = vld [vmem:[%s152 + $0x6e0] sm:$0xf]
        %v648 = vld [vmem:[%s152 + $0x6e4] sm:$0xf]
        %v649 = vld [vmem:[%s152 + $0x6e8] sm:$0xf]
        %v650 = vld [vmem:[%s152 + $0x6ec] sm:$0xf]
        %v651 = vld [vmem:[%s152 + $0x6f0] sm:$0xf]
        %v652 = vld [vmem:[%s152 + $0x6f4] sm:$0xf]
        %v653 = vld [vmem:[%s152 + $0x6f8] sm:$0xf]
        %v654 = vld [vmem:[%s152 + $0x6fc] sm:$0xf]
        %v655 = vld [vmem:[%s152 + $0x700] sm:$0xf]
        %v656 = vld [vmem:[%s152 + $0x704] sm:$0xf]
        %v657 = vld [vmem:[%s152 + $0x708] sm:$0xf]
        %v658 = vld [vmem:[%s152 + $0x70c] sm:$0xf]
        %v659 = vld [vmem:[%s152 + $0x710] sm:$0xf]
        %v660 = vld [vmem:[%s152 + $0x714] sm:$0xf]
        %v661 = vld [vmem:[%s152 + $0x718] sm:$0xf]
        %v662 = vld [vmem:[%s152 + $0x71c] sm:$0xf]
        %v663 = vld [vmem:[%s152 + $0x720] sm:$0xf]
        %v664 = vld [vmem:[%s152 + $0x724] sm:$0xf]
        %v665 = vld [vmem:[%s152 + $0x728] sm:$0xf]
        %v666 = vld [vmem:[%s152 + $0x72c] sm:$0xf]
        %v667 = vld [vmem:[%s152 + $0x730] sm:$0xf]
        %v668 = vld [vmem:[%s152 + $0x734] sm:$0xf]
        %v669 = vld [vmem:[%s152 + $0x738] sm:$0xf]
        %v670 = vld [vmem:[%s152 + $0x73c] sm:$0xf]
        %v671 = vld [vmem:[%s152 + $0x740] sm:$0xf]
        %v672 = vld [vmem:[%s152 + $0x744] sm:$0xf]
        %v673 = vld [vmem:[%s152 + $0x748] sm:$0xf]
        %v674 = vld [vmem:[%s152 + $0x74c] sm:$0xf]
        %v675 = vld [vmem:[%s152 + $0x750] sm:$0xf]
        %v676 = vld [vmem:[%s152 + $0x754] sm:$0xf]
        %v677 = vld [vmem:[%s152 + $0x758] sm:$0xf]
        %v678 = vld [vmem:[%s152 + $0x75c] sm:$0xf]
        %v679 = vld [vmem:[%s152 + $0x760] sm:$0xf]
        %v680 = vld [vmem:[%s152 + $0x764] sm:$0xf]
        %v681 = vld [vmem:[%s152 + $0x768] sm:$0xf]
        %v682 = vld [vmem:[%s152 + $0x76c] sm:$0xf]
        %v683 = vld [vmem:[%s152 + $0x770] sm:$0xf]
        %v684 = vld [vmem:[%s152 + $0x774] sm:$0xf]
        %v685 = vld [vmem:[%s152 + $0x778] sm:$0xf]
        %v686 = vld [vmem:[%s152 + $0x77c] sm:$0xf]
        %v687 = vld [vmem:[%s152 + $0x780] sm:$0xf]
        %v688 = vld [vmem:[%s152 + $0x784] sm:$0xf]
        %v689 = vld [vmem:[%s152 + $0x788] sm:$0xf]
        %v690 = vld [vmem:[%s152 + $0x78c] sm:$0xf]
        %v691 = vld [vmem:[%s152 + $0x790] sm:$0xf]
        %v692 = vld [vmem:[%s152 + $0x794] sm:$0xf]
        %v693 = vld [vmem:[%s152 + $0x798] sm:$0xf]
        %v694 = vld [vmem:[%s152 + $0x79c] sm:$0xf]
        %v695 = vld [vmem:[%s152 + $0x7a0] sm:$0xf]
        %v696 = vld [vmem:[%s152 + $0x7a4] sm:$0xf]
        %v697 = vld [vmem:[%s152 + $0x7a8] sm:$0xf]
        %v698 = vld [vmem:[%s152 + $0x7ac] sm:$0xf]
        %v699 = vld [vmem:[%s152 + $0x7b0] sm:$0xf]
        %v700 = vld [vmem:[%s152 + $0x7b4] sm:$0xf]
        %v701 = vld [vmem:[%s152 + $0x7b8] sm:$0xf]
        %v702 = vld [vmem:[%s152 + $0x7bc] sm:$0xf]
        %v703 = vld [vmem:[%s152 + $0x7c0] sm:$0xf]
        %v704 = vld [vmem:[%s152 + $0x7c4] sm:$0xf]
        %v705 = vld [vmem:[%s152 + $0x7c8] sm:$0xf]
        %v706 = vld [vmem:[%s152 + $0x7cc] sm:$0xf]
        %v707 = vld [vmem:[%s152 + $0x7d0] sm:$0xf]
        %v708 = vld [vmem:[%s152 + $0x7d4] sm:$0xf]
        %v709 = vld [vmem:[%s152 + $0x7d8] sm:$0xf]
        %v710 = vld [vmem:[%s152 + $0x7dc] sm:$0xf]
        %v711 = vld [vmem:[%s152 + $0x7e0] sm:$0xf]
        %v712 = vld [vmem:[%s152 + $0x7e4] sm:$0xf]
        %v713 = vld [vmem:[%s152 + $0x7e8] sm:$0xf]
        %v714 = vld [vmem:[%s152 + $0x7ec] sm:$0xf]
        %v715 = vld [vmem:[%s152 + $0x7f0] sm:$0xf]
        %v716 = vld [vmem:[%s152 + $0x7f4] sm:$0xf]
        %v717 = vld [vmem:[%s152 + $0x7f8] sm:$0xf]
        %v718 = vld [vmem:[%s152 + $0x7fc] sm:$0xf]
        %v719 = vld [vmem:[%s152 + $0x800] sm:$0xf]
        %v720 = vld [vmem:[%s152 + $0x804] sm:$0xf]
        %v721 = vld [vmem:[%s152 + $0x808] sm:$0xf]
        %v722 = vld [vmem:[%s152 + $0x80c] sm:$0xf]
        %v723 = vld [vmem:[%s152 + $0x810] sm:$0xf]
        %v724 = vld [vmem:[%s152 + $0x814] sm:$0xf]
        %v725 = vld [vmem:[%s152 + $0x818] sm:$0xf]
        %v726 = vld [vmem:[%s152 + $0x81c] sm:$0xf]
        %v727 = vld [vmem:[%s152 + $0x820] sm:$0xf]
        %v728 = vld [vmem:[%s152 + $0x824] sm:$0xf]
        %v729 = vld [vmem:[%s152 + $0x828] sm:$0xf]
        %v730 = vld [vmem:[%s152 + $0x82c] sm:$0xf]
        %v731 = vld [vmem:[%s152 + $0x830] sm:$0xf]
        %v732 = vld [vmem:[%s152 + $0x834] sm:$0xf]
        %v733 = vld [vmem:[%s152 + $0x838] sm:$0xf]
        %v734 = vld [vmem:[%s152 + $0x83c] sm:$0xf]
        %v735 = vld [vmem:[%s152 + $0x840] sm:$0xf]
        %v736 = vld [vmem:[%s152 + $0x844] sm:$0xf]
        %v737 = vld [vmem:[%s152 + $0x848] sm:$0xf]
        %v738 = vld [vmem:[%s152 + $0x84c] sm:$0xf]
        %v739 = vld [vmem:[%s152 + $0x850] sm:$0xf]
        %v740 = vld [vmem:[%s152 + $0x854] sm:$0xf]
        %v741 = vld [vmem:[%s152 + $0x858] sm:$0xf]
        %v742 = vld [vmem:[%s152 + $0x85c] sm:$0xf]
        %v743 = vld [vmem:[%s152 + $0x860] sm:$0xf]
        %v744 = vld [vmem:[%s152 + $0x864] sm:$0xf]
        %v745 = vld [vmem:[%s152 + $0x868] sm:$0xf]
        %v746 = vld [vmem:[%s152 + $0x86c] sm:$0xf]
        %v747 = vld [vmem:[%s152 + $0x870] sm:$0xf]
        %v748 = vld [vmem:[%s152 + $0x874] sm:$0xf]
        %v749 = vld [vmem:[%s152 + $0x878] sm:$0xf]
        %v750 = vld [vmem:[%s152 + $0x87c] sm:$0xf]
        %v751 = vld [vmem:[%s152 + $0x880] sm:$0xf]
        %v752 = vld [vmem:[%s152 + $0x884] sm:$0xf]
        %v753 = vld [vmem:[%s152 + $0x888] sm:$0xf]
        %v754 = vld [vmem:[%s152 + $0x88c] sm:$0xf]
        %v755 = vld [vmem:[%s152 + $0x890] sm:$0xf]
        %v756 = vld [vmem:[%s152 + $0x894] sm:$0xf]
        %v757 = vld [vmem:[%s152 + $0x898] sm:$0xf]
        %v758 = vld [vmem:[%s152 + $0x89c] sm:$0xf]
        %v759 = vld [vmem:[%s152 + $0x8a0] sm:$0xf]
        %v760 = vld [vmem:[%s152 + $0x8a4] sm:$0xf]
        %v761 = vld [vmem:[%s152 + $0x8a8] sm:$0xf]
        %v762 = vld [vmem:[%s152 + $0x8ac] sm:$0xf]
        %v763 = vld [vmem:[%s152 + $0x8b0] sm:$0xf]
        %v764 = vld [vmem:[%s152 + $0x8b4] sm:$0xf]
        %v765 = vld [vmem:[%s152 + $0x8b8] sm:$0xf]
        %v766 = vld [vmem:[%s152 + $0x8bc] sm:$0xf]
        %v767 = vld [vmem:[%s152 + $0x8c0] sm:$0xf]
        %v768 = vld [vmem:[%s152 + $0x8c4] sm:$0xf]
        %v769 = vld [vmem:[%s152 + $0x8c8] sm:$0xf]
        %v770 = vld [vmem:[%s152 + $0x8cc] sm:$0xf]
        %v771 = vld [vmem:[%s152 + $0x8d0] sm:$0xf]
        %v772 = vld [vmem:[%s152 + $0x8d4] sm:$0xf]
        %v773 = vld [vmem:[%s152 + $0x8d8] sm:$0xf]
        %v774 = vld [vmem:[%s152 + $0x8dc] sm:$0xf]
        %v775 = vld [vmem:[%s152 + $0x8e0] sm:$0xf]
        %v776 = vld [vmem:[%s152 + $0x8e4] sm:$0xf]
        %v777 = vld [vmem:[%s152 + $0x8e8] sm:$0xf]
        %v778 = vld [vmem:[%s152 + $0x8ec] sm:$0xf]
        %v779 = vld [vmem:[%s152 + $0x8f0] sm:$0xf]
        %v780 = vld [vmem:[%s152 + $0x8f4] sm:$0xf]
        %v781 = vld [vmem:[%s152 + $0x8f8] sm:$0xf]
        %v782 = vld [vmem:[%s152 + $0x8fc] sm:$0xf]
        %v783 = vld [vmem:[%s152 + $0x900] sm:$0xf]
        %v784 = vld [vmem:[%s152 + $0x904] sm:$0xf]
        %v785 = vld [vmem:[%s152 + $0x908] sm:$0xf]
        %v786 = vld [vmem:[%s152 + $0x90c] sm:$0xf]
        %v787 = vld [vmem:[%s152 + $0x910] sm:$0xf]
        %v788 = vld [vmem:[%s152 + $0x914] sm:$0xf]
        %v789 = vld [vmem:[%s152 + $0x918] sm:$0xf]
        %v790 = vld [vmem:[%s152 + $0x91c] sm:$0xf]
        %v791 = vld [vmem:[%s152 + $0x920] sm:$0xf]
        %v792 = vld [vmem:[%s152 + $0x924] sm:$0xf]
        %v793 = vld [vmem:[%s152 + $0x928] sm:$0xf]
        %v794 = vld [vmem:[%s152 + $0x92c] sm:$0xf]
        %v795 = vld [vmem:[%s152 + $0x930] sm:$0xf]
        %v796 = vld [vmem:[%s152 + $0x934] sm:$0xf]
        %v797 = vld [vmem:[%s152 + $0x938] sm:$0xf]
        %v798 = vld [vmem:[%s152 + $0x93c] sm:$0xf]
        %v799 = vld [vmem:[%s152 + $0x940] sm:$0xf]
        %v800 = vld [vmem:[%s152 + $0x944] sm:$0xf]
        %v801 = vld [vmem:[%s152 + $0x948] sm:$0xf]
        %v802 = vld [vmem:[%s152 + $0x94c] sm:$0xf]
        %v803 = vld [vmem:[%s152 + $0x950] sm:$0xf]
        %v804 = vld [vmem:[%s152 + $0x954] sm:$0xf]
        %v805 = vld [vmem:[%s152 + $0x958] sm:$0xf]
        %v806 = vld [vmem:[%s152 + $0x95c] sm:$0xf]
        %v807 = vld [vmem:[%s152 + $0x960] sm:$0xf]
        %v808 = vld [vmem:[%s152 + $0x964] sm:$0xf]
        %v809 = vld [vmem:[%s152 + $0x968] sm:$0xf]
        %v810 = vld [vmem:[%s152 + $0x96c] sm:$0xf]
        %v811 = vld [vmem:[%s152 + $0x970] sm:$0xf]
        %v812 = vld [vmem:[%s152 + $0x974] sm:$0xf]
        %v813 = vld [vmem:[%s152 + $0x978] sm:$0xf]
        %v814 = vld [vmem:[%s152 + $0x97c] sm:$0xf]
        %v815 = vld [vmem:[%s152 + $0x980] sm:$0xf]
        %v816 = vld [vmem:[%s152 + $0x984] sm:$0xf]
        %v817 = vld [vmem:[%s152 + $0x988] sm:$0xf]
        %v818 = vld [vmem:[%s152 + $0x98c] sm:$0xf]
        %v819 = vld [vmem:[%s152 + $0x990] sm:$0xf]
        %v820 = vld [vmem:[%s152 + $0x994] sm:$0xf]
        %v821 = vld [vmem:[%s152 + $0x998] sm:$0xf]
        %v822 = vld [vmem:[%s152 + $0x99c] sm:$0xf]
        %v823 = vld [vmem:[%s152 + $0x9a0] sm:$0xf]
        %v824 = vld [vmem:[%s152 + $0x9a4] sm:$0xf]
        %v825 = vld [vmem:[%s152 + $0x9a8] sm:$0xf]
        %v826 = vld [vmem:[%s152 + $0x9ac] sm:$0xf]
        %v827 = vld [vmem:[%s152 + $0x9b0] sm:$0xf]
        %v828 = vld [vmem:[%s152 + $0x9b4] sm:$0xf]
        %v829 = vld [vmem:[%s152 + $0x9b8] sm:$0xf]
        %v830 = vld [vmem:[%s152 + $0x9bc] sm:$0xf]
        %v831 = vld [vmem:[%s152 + $0x9c0] sm:$0xf]
        %v832 = vld [vmem:[%s152 + $0x9c4] sm:$0xf]
        %v833 = vld [vmem:[%s152 + $0x9c8] sm:$0xf]
        %v834 = vld [vmem:[%s152 + $0x9cc] sm:$0xf]
        %v835 = vld [vmem:[%s152 + $0x9d0] sm:$0xf]
        %v836 = vld [vmem:[%s152 + $0x9d4] sm:$0xf]
        %v837 = vld [vmem:[%s152 + $0x9d8] sm:$0xf]
        %v838 = vld [vmem:[%s152 + $0x9dc] sm:$0xf]
        %v839 = vld [vmem:[%s152 + $0x9e0] sm:$0xf]
        %v840 = vld [vmem:[%s152 + $0x9e4] sm:$0xf]
        %v841 = vld [vmem:[%s152 + $0x9e8] sm:$0xf]
        %v842 = vld [vmem:[%s152 + $0x9ec] sm:$0xf]
        %v843 = vld [vmem:[%s152 + $0x9f0] sm:$0xf]
        %v844 = vld [vmem:[%s152 + $0x9f4] sm:$0xf]
        %v845 = vld [vmem:[%s152 + $0x9f8] sm:$0xf]
        %v846 = vld [vmem:[%s152 + $0x9fc] sm:$0xf]
        %v847 = vld [vmem:[%s152 + $0xa00] sm:$0xf]
        %v848 = vld [vmem:[%s152 + $0xa04] sm:$0xf]
        %v849 = vld [vmem:[%s152 + $0xa08] sm:$0xf]
        %v850 = vld [vmem:[%s152 + $0xa0c] sm:$0xf]
        %v851 = vld [vmem:[%s152 + $0xa10] sm:$0xf]
        %v852 = vld [vmem:[%s152 + $0xa14] sm:$0xf]
        %v853 = vld [vmem:[%s152 + $0xa18] sm:$0xf]
        %v854 = vld [vmem:[%s152 + $0xa1c] sm:$0xf]
        %v855 = vld [vmem:[%s152 + $0xa20] sm:$0xf]
        %v856 = vld [vmem:[%s152 + $0xa24] sm:$0xf]
        %v857 = vld [vmem:[%s152 + $0xa28] sm:$0xf]
        %v858 = vld [vmem:[%s152 + $0xa2c] sm:$0xf]
        %v859 = vld [vmem:[%s152 + $0xa30] sm:$0xf]
        %v860 = vld [vmem:[%s152 + $0xa34] sm:$0xf]
        %v861 = vld [vmem:[%s152 + $0xa38] sm:$0xf]
        %v862 = vld [vmem:[%s152 + $0xa3c] sm:$0xf]
        %v863 = vld [vmem:[%s152 + $0xa40] sm:$0xf]
        %v864 = vld [vmem:[%s152 + $0xa44] sm:$0xf]
        %v865 = vld [vmem:[%s152 + $0xa48] sm:$0xf]
        %v866 = vld [vmem:[%s152 + $0xa4c] sm:$0xf]
        %v867 = vld [vmem:[%s152 + $0xa50] sm:$0xf]
        %v868 = vld [vmem:[%s152 + $0xa54] sm:$0xf]
        %v869 = vld [vmem:[%s152 + $0xa58] sm:$0xf]
        %v870 = vld [vmem:[%s152 + $0xa5c] sm:$0xf]
        %v871 = vld [vmem:[%s152 + $0xa60] sm:$0xf]
        %v872 = vld [vmem:[%s152 + $0xa64] sm:$0xf]
        %v873 = vld [vmem:[%s152 + $0xa68] sm:$0xf]
        %v874 = vld [vmem:[%s152 + $0xa6c] sm:$0xf]
        %v875 = vld [vmem:[%s152 + $0xa70] sm:$0xf]
        %v876 = vld [vmem:[%s152 + $0xa74] sm:$0xf]
        %v877 = vld [vmem:[%s152 + $0xa78] sm:$0xf]
        %v878 = vld [vmem:[%s152 + $0xa7c] sm:$0xf]
        %v879 = vld [vmem:[%s152 + $0xa80] sm:$0xf]
        %v880 = vld [vmem:[%s152 + $0xa84] sm:$0xf]
        %v881 = vld [vmem:[%s152 + $0xa88] sm:$0xf]
        %v882 = vld [vmem:[%s152 + $0xa8c] sm:$0xf]
        %v883 = vld [vmem:[%s152 + $0xa90] sm:$0xf]
        %v884 = vld [vmem:[%s152 + $0xa94] sm:$0xf]
        %v885 = vld [vmem:[%s152 + $0xa98] sm:$0xf]
        %v886 = vld [vmem:[%s152 + $0xa9c] sm:$0xf]
        %v887 = vld [vmem:[%s152 + $0xaa0] sm:$0xf]
        %v888 = vld [vmem:[%s152 + $0xaa4] sm:$0xf]
        %v889 = vld [vmem:[%s152 + $0xaa8] sm:$0xf]
        %v890 = vld [vmem:[%s152 + $0xaac] sm:$0xf]
        %v891 = vld [vmem:[%s152 + $0xab0] sm:$0xf]
        %v892 = vld [vmem:[%s152 + $0xab4] sm:$0xf]
        %v893 = vld [vmem:[%s152 + $0xab8] sm:$0xf]
        %v894 = vld [vmem:[%s152 + $0xabc] sm:$0xf]
        %v895 = vld [vmem:[%s152 + $0xac0] sm:$0xf]
        %v896 = vld [vmem:[%s152 + $0xac4] sm:$0xf]
        %v897 = vld [vmem:[%s152 + $0xac8] sm:$0xf]
        %v898 = vld [vmem:[%s152 + $0xacc] sm:$0xf]
        %v899 = vld [vmem:[%s152 + $0xad0] sm:$0xf]
        %v900 = vld [vmem:[%s152 + $0xad4] sm:$0xf]
        %v901 = vld [vmem:[%s152 + $0xad8] sm:$0xf]
        %v902 = vld [vmem:[%s152 + $0xadc] sm:$0xf]
        %v903 = vld [vmem:[%s152 + $0xae0] sm:$0xf]
        %v904 = vld [vmem:[%s152 + $0xae4] sm:$0xf]
        %v905 = vld [vmem:[%s152 + $0xae8] sm:$0xf]
        %v906 = vld [vmem:[%s152 + $0xaec] sm:$0xf]
        %v907 = vld [vmem:[%s152 + $0xaf0] sm:$0xf]
        %v908 = vld [vmem:[%s152 + $0xaf4] sm:$0xf]
        %v909 = vld [vmem:[%s152 + $0xaf8] sm:$0xf]
        %v910 = vld [vmem:[%s152 + $0xafc] sm:$0xf]
        %v911 = vld [vmem:[%s152 + $0xb00] sm:$0xf]
        %v912 = vld [vmem:[%s152 + $0xb04] sm:$0xf]
        %v913 = vld [vmem:[%s152 + $0xb08] sm:$0xf]
        %v914 = vld [vmem:[%s152 + $0xb0c] sm:$0xf]
        %v915 = vld [vmem:[%s152 + $0xb10] sm:$0xf]
        %v916 = vld [vmem:[%s152 + $0xb14] sm:$0xf]
        %v917 = vld [vmem:[%s152 + $0xb18] sm:$0xf]
        %v918 = vld [vmem:[%s152 + $0xb1c] sm:$0xf]
        %v919 = vld [vmem:[%s152 + $0xb20] sm:$0xf]
        %v920 = vld [vmem:[%s152 + $0xb24] sm:$0xf]
        %v921 = vld [vmem:[%s152 + $0xb28] sm:$0xf]
        %v922 = vld [vmem:[%s152 + $0xb2c] sm:$0xf]
        %v923 = vld [vmem:[%s152 + $0xb30] sm:$0xf]
        %v924 = vld [vmem:[%s152 + $0xb34] sm:$0xf]
        %v925 = vld [vmem:[%s152 + $0xb38] sm:$0xf]
        %v926 = vld [vmem:[%s152 + $0xb3c] sm:$0xf]
        %v927 = vld [vmem:[%s152 + $0xb40] sm:$0xf]
        %v928 = vld [vmem:[%s152 + $0xb44] sm:$0xf]
        %v929 = vld [vmem:[%s152 + $0xb48] sm:$0xf]
        %v930 = vld [vmem:[%s152 + $0xb4c] sm:$0xf]
        %v931 = vld [vmem:[%s152 + $0xb50] sm:$0xf]
        %v932 = vld [vmem:[%s152 + $0xb54] sm:$0xf]
        %v933 = vld [vmem:[%s152 + $0xb58] sm:$0xf]
        %v934 = vld [vmem:[%s152 + $0xb5c] sm:$0xf]
        %v935 = vld [vmem:[%s152 + $0xb60] sm:$0xf]
        %v936 = vld [vmem:[%s152 + $0xb64] sm:$0xf]
        %v937 = vld [vmem:[%s152 + $0xb68] sm:$0xf]
        %v938 = vld [vmem:[%s152 + $0xb6c] sm:$0xf]
        %v939 = vld [vmem:[%s152 + $0xb70] sm:$0xf]
        %v940 = vld [vmem:[%s152 + $0xb74] sm:$0xf]
        %v941 = vld [vmem:[%s152 + $0xb78] sm:$0xf]
        %v942 = vld [vmem:[%s152 + $0xb7c] sm:$0xf]
        %v943 = vld [vmem:[%s152 + $0xb80] sm:$0xf]
        %v944 = vld [vmem:[%s152 + $0xb84] sm:$0xf]
        %v945 = vld [vmem:[%s152 + $0xb88] sm:$0xf]
        %v946 = vld [vmem:[%s152 + $0xb8c] sm:$0xf]
        %v947 = vld [vmem:[%s152 + $0xb90] sm:$0xf]
        %v948 = vld [vmem:[%s152 + $0xb94] sm:$0xf]
        %v949 = vld [vmem:[%s152 + $0xb98] sm:$0xf]
        %v950 = vld [vmem:[%s152 + $0xb9c] sm:$0xf]
        %v951 = vld [vmem:[%s152 + $0xba0] sm:$0xf]
        %v952 = vld [vmem:[%s152 + $0xba4] sm:$0xf]
        %v953 = vld [vmem:[%s152 + $0xba8] sm:$0xf]
        %v954 = vld [vmem:[%s152 + $0xbac] sm:$0xf]
        %v955 = vld [vmem:[%s152 + $0xbb0] sm:$0xf]
        %v956 = vld [vmem:[%s152 + $0xbb4] sm:$0xf]
        %v957 = vld [vmem:[%s152 + $0xbb8] sm:$0xf]
        %v958 = vld [vmem:[%s152 + $0xbbc] sm:$0xf]
        %v959 = vld [vmem:[%s152 + $0xbc0] sm:$0xf]
        %v960 = vld [vmem:[%s152 + $0xbc4] sm:$0xf]
        %v961 = vld [vmem:[%s152 + $0xbc8] sm:$0xf]
        %v962 = vld [vmem:[%s152 + $0xbcc] sm:$0xf]
        %v963 = vld [vmem:[%s152 + $0xbd0] sm:$0xf]
        %v964 = vld [vmem:[%s152 + $0xbd4] sm:$0xf]
        %v965 = vld [vmem:[%s152 + $0xbd8] sm:$0xf]
        %v966 = vld [vmem:[%s152 + $0xbdc] sm:$0xf]
        %v967 = vld [vmem:[%s152 + $0xbe0] sm:$0xf]
        %v968 = vld [vmem:[%s152 + $0xbe4] sm:$0xf]
        %v969 = vld [vmem:[%s152 + $0xbe8] sm:$0xf]
        %v970 = vld [vmem:[%s152 + $0xbec] sm:$0xf]
        %v971 = vld [vmem:[%s152 + $0xbf0] sm:$0xf]
        %v972 = vld [vmem:[%s152 + $0xbf4] sm:$0xf]
        %v973 = vld [vmem:[%s152 + $0xbf8] sm:$0xf]
        %v974 = vld [vmem:[%s152 + $0xbfc] sm:$0xf]
        %v975 = vld [vmem:[%s152 + $0xc00] sm:$0xf]
        %v976 = vld [vmem:[%s152 + $0xc04] sm:$0xf]
        %v977 = vld [vmem:[%s152 + $0xc08] sm:$0xf]
        %v978 = vld [vmem:[%s152 + $0xc0c] sm:$0xf]
        %v979 = vld [vmem:[%s152 + $0xc10] sm:$0xf]
        %v980 = vld [vmem:[%s152 + $0xc14] sm:$0xf]
        %v981 = vld [vmem:[%s152 + $0xc18] sm:$0xf]
        %v982 = vld [vmem:[%s152 + $0xc1c] sm:$0xf]
        %v983 = vld [vmem:[%s152 + $0xc20] sm:$0xf]
        %v984 = vld [vmem:[%s152 + $0xc24] sm:$0xf]
        %v985 = vld [vmem:[%s152 + $0xc28] sm:$0xf]
        %v986 = vld [vmem:[%s152 + $0xc2c] sm:$0xf]
        %v987 = vld [vmem:[%s152 + $0xc30] sm:$0xf]
        %v988 = vld [vmem:[%s152 + $0xc34] sm:$0xf]
        %v989 = vld [vmem:[%s152 + $0xc38] sm:$0xf]
        %v990 = vld [vmem:[%s152 + $0xc3c] sm:$0xf]
        %v991 = vld [vmem:[%s152 + $0xc40] sm:$0xf]
        %v992 = vld [vmem:[%s152 + $0xc44] sm:$0xf]
        %v993 = vld [vmem:[%s152 + $0xc48] sm:$0xf]
        %v994 = vld [vmem:[%s152 + $0xc4c] sm:$0xf]
        %v995 = vld [vmem:[%s152 + $0xc50] sm:$0xf]
        %v996 = vld [vmem:[%s152 + $0xc54] sm:$0xf]
        %v997 = vld [vmem:[%s152 + $0xc58] sm:$0xf]
        %v998 = vld [vmem:[%s152 + $0xc5c] sm:$0xf]
        %v999 = vld [vmem:[%s152 + $0xc60] sm:$0xf]
        %v1000 = vld [vmem:[%s152 + $0xc64] sm:$0xf]
        %v1001 = vld [vmem:[%s152 + $0xc68] sm:$0xf]
        %v1002 = vld [vmem:[%s152 + $0xc6c] sm:$0xf]
        %v1003 = vld [vmem:[%s152 + $0xc70] sm:$0xf]
        %v1004 = vld [vmem:[%s152 + $0xc74] sm:$0xf]
        %v1005 = vld [vmem:[%s152 + $0xc78] sm:$0xf]
        %v1006 = vld [vmem:[%s152 + $0xc7c] sm:$0xf]
        %v1007 = vld [vmem:[%s152 + $0xc80] sm:$0xf]
        %v1008 = vld [vmem:[%s152 + $0xc84] sm:$0xf]
        %v1009 = vld [vmem:[%s152 + $0xc88] sm:$0xf]
        %v1010 = vld [vmem:[%s152 + $0xc8c] sm:$0xf]
        %v1011 = vld [vmem:[%s152 + $0xc90] sm:$0xf]
        %v1012 = vld [vmem:[%s152 + $0xc94] sm:$0xf]
        %v1013 = vld [vmem:[%s152 + $0xc98] sm:$0xf]
        %v1014 = vld [vmem:[%s152 + $0xc9c] sm:$0xf]
        %v1015 = vld [vmem:[%s152 + $0xca0] sm:$0xf]
        %v1016 = vld [vmem:[%s152 + $0xca4] sm:$0xf]
        %v1017 = vld [vmem:[%s152 + $0xca8] sm:$0xf]
        %v1018 = vld [vmem:[%s152 + $0xcac] sm:$0xf]
        %v1019 = vld [vmem:[%s152 + $0xcb0] sm:$0xf]
        %v1020 = vld [vmem:[%s152 + $0xcb4] sm:$0xf]
        %v1021 = vld [vmem:[%s152 + $0xcb8] sm:$0xf]
        %v1022 = vld [vmem:[%s152 + $0xcbc] sm:$0xf]
        %v1023 = vld [vmem:[%s152 + $0xcc0] sm:$0xf]
        %v1024 = vld [vmem:[%s152 + $0xcc4] sm:$0xf]
        %v1025 = vld [vmem:[%s152 + $0xcc8] sm:$0xf]
        %v1026 = vld [vmem:[%s152 + $0xccc] sm:$0xf]
        %v1027 = vld [vmem:[%s152 + $0xcd0] sm:$0xf]
        %v1028 = vld [vmem:[%s152 + $0xcd4] sm:$0xf]
        %v1029 = vld [vmem:[%s152 + $0xcd8] sm:$0xf]
        %v1030 = vld [vmem:[%s152 + $0xcdc] sm:$0xf]
        %v1031 = vld [vmem:[%s152 + $0xce0] sm:$0xf]
        %v1032 = vld [vmem:[%s152 + $0xce4] sm:$0xf]
        %v1033 = vld [vmem:[%s152 + $0xce8] sm:$0xf]
        %v1034 = vld [vmem:[%s152 + $0xcec] sm:$0xf]
        %v1035 = vld [vmem:[%s152 + $0xcf0] sm:$0xf]
        %v1036 = vld [vmem:[%s152 + $0xcf4] sm:$0xf]
        %v1037 = vld [vmem:[%s152 + $0xcf8] sm:$0xf]
        %v1038 = vld [vmem:[%s152 + $0xcfc] sm:$0xf]
        %v1039 = vld [vmem:[%s152 + $0xd00] sm:$0xf]
        %v1040 = vld [vmem:[%s152 + $0xd04] sm:$0xf]
        %v1041 = vld [vmem:[%s152 + $0xd08] sm:$0xf]
        %v1042 = vld [vmem:[%s152 + $0xd0c] sm:$0xf]
        %v1043 = vld [vmem:[%s152 + $0xd10] sm:$0xf]
        %v1044 = vld [vmem:[%s152 + $0xd14] sm:$0xf]
        %v1045 = vld [vmem:[%s152 + $0xd18] sm:$0xf]
        %v1046 = vld [vmem:[%s152 + $0xd1c] sm:$0xf]
        %v1047 = vld [vmem:[%s152 + $0xd20] sm:$0xf]
        %v1048 = vld [vmem:[%s152 + $0xd24] sm:$0xf]
        %v1049 = vld [vmem:[%s152 + $0xd28] sm:$0xf]
        %v1050 = vld [vmem:[%s152 + $0xd2c] sm:$0xf]
        %v1051 = vld [vmem:[%s152 + $0xd30] sm:$0xf]
        %v1052 = vld [vmem:[%s152 + $0xd34] sm:$0xf]
        %v1053 = vld [vmem:[%s152 + $0xd38] sm:$0xf]
        %v1054 = vld [vmem:[%s152 + $0xd3c] sm:$0xf]
        %v1055 = vld [vmem:[%s152 + $0xd40] sm:$0xf]
        %v1056 = vld [vmem:[%s152 + $0xd44] sm:$0xf]
        %v1057 = vld [vmem:[%s152 + $0xd48] sm:$0xf]
        %v1058 = vld [vmem:[%s152 + $0xd4c] sm:$0xf]
        %v1059 = vld [vmem:[%s152 + $0xd50] sm:$0xf]
        %v1060 = vld [vmem:[%s152 + $0xd54] sm:$0xf]
        %v1061 = vld [vmem:[%s152 + $0xd58] sm:$0xf]
        %v1062 = vld [vmem:[%s152 + $0xd5c] sm:$0xf]
        %v1063 = vld [vmem:[%s152 + $0xd60] sm:$0xf]
        %v1064 = vld [vmem:[%s152 + $0xd64] sm:$0xf]
        %v1065 = vld [vmem:[%s152 + $0xd68] sm:$0xf]
        %v1066 = vld [vmem:[%s152 + $0xd6c] sm:$0xf]
        %v1067 = vld [vmem:[%s152 + $0xd70] sm:$0xf]
        %v1068 = vld [vmem:[%s152 + $0xd74] sm:$0xf]
        %v1069 = vld [vmem:[%s152 + $0xd78] sm:$0xf]
        %v1070 = vld [vmem:[%s152 + $0xd7c] sm:$0xf]
        %v1071 = vld [vmem:[%s152 + $0xd80] sm:$0xf]
        %v1072 = vld [vmem:[%s152 + $0xd84] sm:$0xf]
        %v1073 = vld [vmem:[%s152 + $0xd88] sm:$0xf]
        %v1074 = vld [vmem:[%s152 + $0xd8c] sm:$0xf]
        %v1075 = vld [vmem:[%s152 + $0xd90] sm:$0xf]
        %v1076 = vld [vmem:[%s152 + $0xd94] sm:$0xf]
        %v1077 = vld [vmem:[%s152 + $0xd98] sm:$0xf]
        %v1078 = vld [vmem:[%s152 + $0xd9c] sm:$0xf]
        %v1079 = vld [vmem:[%s152 + $0xda0] sm:$0xf]
        %v1080 = vld [vmem:[%s152 + $0xda4] sm:$0xf]
        %v1081 = vld [vmem:[%s152 + $0xda8] sm:$0xf]
        %v1082 = vld [vmem:[%s152 + $0xdac] sm:$0xf]
        %v1083 = vld [vmem:[%s152 + $0xdb0] sm:$0xf]
        %v1084 = vld [vmem:[%s152 + $0xdb4] sm:$0xf]
        %v1085 = vld [vmem:[%s152 + $0xdb8] sm:$0xf]
        %v1086 = vld [vmem:[%s152 + $0xdbc] sm:$0xf]
        %v1087 = vld [vmem:[%s152 + $0xdc0] sm:$0xf]
        %v1088 = vld [vmem:[%s152 + $0xdc4] sm:$0xf]
        %v1089 = vld [vmem:[%s152 + $0xdc8] sm:$0xf]
        %v1090 = vld [vmem:[%s152 + $0xdcc] sm:$0xf]
        %v1091 = vld [vmem:[%s152 + $0xdd0] sm:$0xf]
        %v1092 = vld [vmem:[%s152 + $0xdd4] sm:$0xf]
        %v1093 = vld [vmem:[%s152 + $0xdd8] sm:$0xf]
        %v1094 = vld [vmem:[%s152 + $0xddc] sm:$0xf]
        %v1095 = vld [vmem:[%s152 + $0xde0] sm:$0xf]
        %v1096 = vld [vmem:[%s152 + $0xde4] sm:$0xf]
        %v1097 = vld [vmem:[%s152 + $0xde8] sm:$0xf]
        %v1098 = vld [vmem:[%s152 + $0xdec] sm:$0xf]
        %v1099 = vld [vmem:[%s152 + $0xdf0] sm:$0xf]
        %v1100 = vld [vmem:[%s152 + $0xdf4] sm:$0xf]
        %v1101 = vld [vmem:[%s152 + $0xdf8] sm:$0xf]
        %v1102 = vld [vmem:[%s152 + $0xdfc] sm:$0xf]
        %v1103 = vld [vmem:[%s152 + $0xe00] sm:$0xf]
        %v1104 = vld [vmem:[%s152 + $0xe04] sm:$0xf]
        %v1105 = vld [vmem:[%s152 + $0xe08] sm:$0xf]
        %v1106 = vld [vmem:[%s152 + $0xe0c] sm:$0xf]
        %v1107 = vld [vmem:[%s152 + $0xe10] sm:$0xf]
        %v1108 = vld [vmem:[%s152 + $0xe14] sm:$0xf]
        %v1109 = vld [vmem:[%s152 + $0xe18] sm:$0xf]
        %v1110 = vld [vmem:[%s152 + $0xe1c] sm:$0xf]
        %v1111 = vld [vmem:[%s152 + $0xe20] sm:$0xf]
        %v1112 = vld [vmem:[%s152 + $0xe24] sm:$0xf]
        %v1113 = vld [vmem:[%s152 + $0xe28] sm:$0xf]
        %v1114 = vld [vmem:[%s152 + $0xe2c] sm:$0xf]
        %v1115 = vld [vmem:[%s152 + $0xe30] sm:$0xf]
        %v1116 = vld [vmem:[%s152 + $0xe34] sm:$0xf]
        %v1117 = vld [vmem:[%s152 + $0xe38] sm:$0xf]
        %v1118 = vld [vmem:[%s152 + $0xe3c] sm:$0xf]
        %v1119 = vld [vmem:[%s152 + $0xe40] sm:$0xf]
        %v1120 = vld [vmem:[%s152 + $0xe44] sm:$0xf]
        %v1121 = vld [vmem:[%s152 + $0xe48] sm:$0xf]
        %v1122 = vld [vmem:[%s152 + $0xe4c] sm:$0xf]
        %v1123 = vld [vmem:[%s152 + $0xe50] sm:$0xf]
        %v1124 = vld [vmem:[%s152 + $0xe54] sm:$0xf]
        %v1125 = vld [vmem:[%s152 + $0xe58] sm:$0xf]
        %v1126 = vld [vmem:[%s152 + $0xe5c] sm:$0xf]
        %v1127 = vld [vmem:[%s152 + $0xe60] sm:$0xf]
        %v1128 = vld [vmem:[%s152 + $0xe64] sm:$0xf]
        %v1129 = vld [vmem:[%s152 + $0xe68] sm:$0xf]
        %v1130 = vld [vmem:[%s152 + $0xe6c] sm:$0xf]
        %v1131 = vld [vmem:[%s152 + $0xe70] sm:$0xf]
        %v1132 = vld [vmem:[%s152 + $0xe74] sm:$0xf]
        %v1133 = vld [vmem:[%s152 + $0xe78] sm:$0xf]
        %v1134 = vld [vmem:[%s152 + $0xe7c] sm:$0xf]
        %v1135 = vld [vmem:[%s152 + $0xe80] sm:$0xf]
        %v1136 = vld [vmem:[%s152 + $0xe84] sm:$0xf]
        %v1137 = vld [vmem:[%s152 + $0xe88] sm:$0xf]
        %v1138 = vld [vmem:[%s152 + $0xe8c] sm:$0xf]
        %v1139 = vld [vmem:[%s152 + $0xe90] sm:$0xf]
        %v1140 = vld [vmem:[%s152 + $0xe94] sm:$0xf]
        %v1141 = vld [vmem:[%s152 + $0xe98] sm:$0xf]
        %v1142 = vld [vmem:[%s152 + $0xe9c] sm:$0xf]
        %v1143 = vld [vmem:[%s152 + $0xea0] sm:$0xf]
        %v1144 = vld [vmem:[%s152 + $0xea4] sm:$0xf]
        %v1145 = vld [vmem:[%s152 + $0xea8] sm:$0xf]
        %v1146 = vld [vmem:[%s152 + $0xeac] sm:$0xf]
        %v1147 = vld [vmem:[%s152 + $0xeb0] sm:$0xf]
        %v1148 = vld [vmem:[%s152 + $0xeb4] sm:$0xf]
        %v1149 = vld [vmem:[%s152 + $0xeb8] sm:$0xf]
        %v1150 = vld [vmem:[%s152 + $0xebc] sm:$0xf]
        %v1151 = vld [vmem:[%s152 + $0xec0] sm:$0xf]
        %v1152 = vld [vmem:[%s152 + $0xec4] sm:$0xf]
        %v1153 = vld [vmem:[%s152 + $0xec8] sm:$0xf]
        %v1154 = vld [vmem:[%s152 + $0xecc] sm:$0xf]
        %v1155 = vld [vmem:[%s152 + $0xed0] sm:$0xf]
        %v1156 = vld [vmem:[%s152 + $0xed4] sm:$0xf]
        %v1157 = vld [vmem:[%s152 + $0xed8] sm:$0xf]
        %v1158 = vld [vmem:[%s152 + $0xedc] sm:$0xf]
        %v1159 = vld [vmem:[%s152 + $0xee0] sm:$0xf]
        %v1160 = vld [vmem:[%s152 + $0xee4] sm:$0xf]
        %v1161 = vld [vmem:[%s152 + $0xee8] sm:$0xf]
        %v1162 = vld [vmem:[%s152 + $0xeec] sm:$0xf]
        %v1163 = vld [vmem:[%s152 + $0xef0] sm:$0xf]
        %v1164 = vld [vmem:[%s152 + $0xef4] sm:$0xf]
        %v1165 = vld [vmem:[%s152 + $0xef8] sm:$0xf]
        %v1166 = vld [vmem:[%s152 + $0xefc] sm:$0xf]
        %v1167 = vld [vmem:[%s152 + $0xf00] sm:$0xf]
        %v1168 = vld [vmem:[%s152 + $0xf04] sm:$0xf]
        %v1169 = vld [vmem:[%s152 + $0xf08] sm:$0xf]
        %v1170 = vld [vmem:[%s152 + $0xf0c] sm:$0xf]
        %v1171 = vld [vmem:[%s152 + $0xf10] sm:$0xf]
        %v1172 = vld [vmem:[%s152 + $0xf14] sm:$0xf]
        %v1173 = vld [vmem:[%s152 + $0xf18] sm:$0xf]
        %v1174 = vld [vmem:[%s152 + $0xf1c] sm:$0xf]
        %v1175 = vld [vmem:[%s152 + $0xf20] sm:$0xf]
        %v1176 = vld [vmem:[%s152 + $0xf24] sm:$0xf]
        %v1177 = vld [vmem:[%s152 + $0xf28] sm:$0xf]
        %v1178 = vld [vmem:[%s152 + $0xf2c] sm:$0xf]
        %v1179 = vld [vmem:[%s152 + $0xf30] sm:$0xf]
        %v1180 = vld [vmem:[%s152 + $0xf34] sm:$0xf]
        %v1181 = vld [vmem:[%s152 + $0xf38] sm:$0xf]
        %v1182 = vld [vmem:[%s152 + $0xf3c] sm:$0xf]
        %v1183 = vld [vmem:[%s152 + $0xf40] sm:$0xf]
        %v1184 = vld [vmem:[%s152 + $0xf44] sm:$0xf]
        %v1185 = vld [vmem:[%s152 + $0xf48] sm:$0xf]
        %v1186 = vld [vmem:[%s152 + $0xf4c] sm:$0xf]
        %v1187 = vld [vmem:[%s152 + $0xf50] sm:$0xf]
        %v1188 = vld [vmem:[%s152 + $0xf54] sm:$0xf]
        %v1189 = vld [vmem:[%s152 + $0xf58] sm:$0xf]
        %v1190 = vld [vmem:[%s152 + $0xf5c] sm:$0xf]
        %v1191 = vld [vmem:[%s152 + $0xf60] sm:$0xf]
        %v1192 = vld [vmem:[%s152 + $0xf64] sm:$0xf]
        %v1193 = vld [vmem:[%s152 + $0xf68] sm:$0xf]
        %v1194 = vld [vmem:[%s152 + $0xf6c] sm:$0xf]
        %v1195 = vld [vmem:[%s152 + $0xf70] sm:$0xf]
        %v1196 = vld [vmem:[%s152 + $0xf74] sm:$0xf]
        %v1197 = vld [vmem:[%s152 + $0xf78] sm:$0xf]
        %v1198 = vld [vmem:[%s152 + $0xf7c] sm:$0xf]
        %v1199 = vld [vmem:[%s152 + $0xf80] sm:$0xf]
        %v1200 = vld [vmem:[%s152 + $0xf84] sm:$0xf]
        %v1201 = vld [vmem:[%s152 + $0xf88] sm:$0xf]
        %v1202 = vld [vmem:[%s152 + $0xf8c] sm:$0xf]
        %v1203 = vld [vmem:[%s152 + $0xf90] sm:$0xf]
        %v1204 = vld [vmem:[%s152 + $0xf94] sm:$0xf]
        %v1205 = vld [vmem:[%s152 + $0xf98] sm:$0xf]
        %v1206 = vld [vmem:[%s152 + $0xf9c] sm:$0xf]
        %v1207 = vld [vmem:[%s152 + $0xfa0] sm:$0xf]
        %v1208 = vld [vmem:[%s152 + $0xfa4] sm:$0xf]
        %v1209 = vld [vmem:[%s152 + $0xfa8] sm:$0xf]
        %v1210 = vld [vmem:[%s152 + $0xfac] sm:$0xf]
        %v1211 = vld [vmem:[%s152 + $0xfb0] sm:$0xf]
        %v1212 = vld [vmem:[%s152 + $0xfb4] sm:$0xf]
        %v1213 = vld [vmem:[%s152 + $0xfb8] sm:$0xf]
        %v1214 = vld [vmem:[%s152 + $0xfbc] sm:$0xf]
        %v1215 = vld [vmem:[%s152 + $0xfc0] sm:$0xf]
        %v1216 = vld [vmem:[%s152 + $0xfc4] sm:$0xf]
        %v1217 = vld [vmem:[%s152 + $0xfc8] sm:$0xf]
        %v1218 = vld [vmem:[%s152 + $0xfcc] sm:$0xf]
        %v1219 = vld [vmem:[%s152 + $0xfd0] sm:$0xf]
        %v1220 = vld [vmem:[%s152 + $0xfd4] sm:$0xf]
        %v1221 = vld [vmem:[%s152 + $0xfd8] sm:$0xf]
        %v1222 = vld [vmem:[%s152 + $0xfdc] sm:$0xf]
        %v1223 = vld [vmem:[%s152 + $0xfe0] sm:$0xf]
        %v1224 = vld [vmem:[%s152 + $0xfe4] sm:$0xf]
        %v1225 = vld [vmem:[%s152 + $0xfe8] sm:$0xf]
        %v1226 = vld [vmem:[%s152 + $0xfec] sm:$0xf]
        %v1227 = vld [vmem:[%s152 + $0xff0] sm:$0xf]
        %v1228 = vld [vmem:[%s152 + $0xff4] sm:$0xf]
        %v1229 = vld [vmem:[%s152 + $0xff8] sm:$0xf]
        %v1230 = vld [vmem:[%s152 + $0xffc] sm:$0xf]
        %v1231 = vld [vmem:[%s152 + $0x1000] sm:$0xf]
        %v1232 = vld [vmem:[%s152 + $0x1004] sm:$0xf]
        %v1233 = vld [vmem:[%s152 + $0x1008] sm:$0xf]
        %v1234 = vld [vmem:[%s152 + $0x100c] sm:$0xf]
        %v1235 = vld [vmem:[%s152 + $0x1010] sm:$0xf]
        %v1236 = vld [vmem:[%s152 + $0x1014] sm:$0xf]
        %v1237 = vld [vmem:[%s152 + $0x1018] sm:$0xf]
        %v1238 = vld [vmem:[%s152 + $0x101c] sm:$0xf]
        %v1239 = vld [vmem:[%s152 + $0x1020] sm:$0xf]
        %v1240 = vld [vmem:[%s152 + $0x1024] sm:$0xf]
        %v1241 = vld [vmem:[%s152 + $0x1028] sm:$0xf]
        %v1242 = vld [vmem:[%s152 + $0x102c] sm:$0xf]
        %v1243 = vld [vmem:[%s152 + $0x1030] sm:$0xf]
        %v1244 = vld [vmem:[%s152 + $0x1034] sm:$0xf]
        %v1245 = vld [vmem:[%s152 + $0x1038] sm:$0xf]
        %v1246 = vld [vmem:[%s152 + $0x103c] sm:$0xf]
        %v1247 = vld [vmem:[%s152 + $0x1040] sm:$0xf]
        %v1248 = vld [vmem:[%s152 + $0x1044] sm:$0xf]
        %v1249 = vld [vmem:[%s152 + $0x1048] sm:$0xf]
        %v1250 = vld [vmem:[%s152 + $0x104c] sm:$0xf]
        %v1251 = vld [vmem:[%s152 + $0x1050] sm:$0xf]
        %v1252 = vld [vmem:[%s152 + $0x1054] sm:$0xf]
        %v1253 = vld [vmem:[%s152 + $0x1058] sm:$0xf]
        %v1254 = vld [vmem:[%s152 + $0x105c] sm:$0xf]
        %v1255 = vld [vmem:[%s152 + $0x1060] sm:$0xf]
        %v1256 = vld [vmem:[%s152 + $0x1064] sm:$0xf]
        %v1257 = vld [vmem:[%s152 + $0x1068] sm:$0xf]
        %v1258 = vld [vmem:[%s152 + $0x106c] sm:$0xf]
        %v1259 = vld [vmem:[%s152 + $0x1070] sm:$0xf]
        %v1260 = vld [vmem:[%s152 + $0x1074] sm:$0xf]
        %v1261 = vld [vmem:[%s152 + $0x1078] sm:$0xf]
        %v1262 = vld [vmem:[%s152 + $0x107c] sm:$0xf]
        %v1263 = vld [vmem:[%s152 + $0x1080] sm:$0xf]
        %v1264 = vld [vmem:[%s152 + $0x1084] sm:$0xf]
        %v1265 = vld [vmem:[%s152 + $0x1088] sm:$0xf]
        %v1266 = vld [vmem:[%s152 + $0x108c] sm:$0xf]
        %v1267 = vld [vmem:[%s152 + $0x1090] sm:$0xf]
        %v1268 = vld [vmem:[%s152 + $0x1094] sm:$0xf]
        %v1269 = vld [vmem:[%s152 + $0x1098] sm:$0xf]
        %v1270 = vld [vmem:[%s152 + $0x109c] sm:$0xf]
        %v1271 = vld [vmem:[%s152 + $0x10a0] sm:$0xf]
        %v1272 = vld [vmem:[%s152 + $0x10a4] sm:$0xf]
        %v1273 = vld [vmem:[%s152 + $0x10a8] sm:$0xf]
        %v1274 = vld [vmem:[%s152 + $0x10ac] sm:$0xf]
        %v1275 = vld [vmem:[%s152 + $0x10b0] sm:$0xf]
        %v1276 = vld [vmem:[%s152 + $0x10b4] sm:$0xf]
        %v1277 = vld [vmem:[%s152 + $0x10b8] sm:$0xf]
        %v1278 = vld [vmem:[%s152 + $0x10bc] sm:$0xf]
        %v1279 = vld [vmem:[%s152 + $0x10c0] sm:$0xf]
        %v1280 = vld [vmem:[%s152 + $0x10c4] sm:$0xf]
        %v1281 = vld [vmem:[%s152 + $0x10c8] sm:$0xf]
        %v1282 = vld [vmem:[%s152 + $0x10cc] sm:$0xf]
        %v1283 = vld [vmem:[%s152 + $0x10d0] sm:$0xf]
        %v1284 = vld [vmem:[%s152 + $0x10d4] sm:$0xf]
        %v1285 = vld [vmem:[%s152 + $0x10d8] sm:$0xf]
        %v1286 = vld [vmem:[%s152 + $0x10dc] sm:$0xf]
        %v1287 = vld [vmem:[%s152 + $0x10e0] sm:$0xf]
        %v1288 = vld [vmem:[%s152 + $0x10e4] sm:$0xf]
        %v1289 = vld [vmem:[%s152 + $0x10e8] sm:$0xf]
        %v1290 = vld [vmem:[%s152 + $0x10ec] sm:$0xf]
        %v1291 = vld [vmem:[%s152 + $0x10f0] sm:$0xf]
        %v1292 = vld [vmem:[%s152 + $0x10f4] sm:$0xf]
        %v1293 = vld [vmem:[%s152 + $0x10f8] sm:$0xf]
        %v1294 = vld [vmem:[%s152 + $0x10fc] sm:$0xf]
        %v1295 = vld [vmem:[%s152 + $0x1100] sm:$0xf]
        %v1296 = vld [vmem:[%s152 + $0x1104] sm:$0xf]
        %v1297 = vld [vmem:[%s152 + $0x1108] sm:$0xf]
        %v1298 = vld [vmem:[%s152 + $0x110c] sm:$0xf]
        %v1299 = vld [vmem:[%s152 + $0x1110] sm:$0xf]
        %v1300 = vld [vmem:[%s152 + $0x1114] sm:$0xf]
        %v1301 = vld [vmem:[%s152 + $0x1118] sm:$0xf]
        %v1302 = vld [vmem:[%s152 + $0x111c] sm:$0xf]
        %v1303 = vld [vmem:[%s152 + $0x1120] sm:$0xf]
        %v1304 = vld [vmem:[%s152 + $0x1124] sm:$0xf]
        %v1305 = vld [vmem:[%s152 + $0x1128] sm:$0xf]
        %v1306 = vld [vmem:[%s152 + $0x112c] sm:$0xf]
        %v1307 = vld [vmem:[%s152 + $0x1130] sm:$0xf]
        %v1308 = vld [vmem:[%s152 + $0x1134] sm:$0xf]
        %v1309 = vld [vmem:[%s152 + $0x1138] sm:$0xf]
        %v1310 = vld [vmem:[%s152 + $0x113c] sm:$0xf]
        %v1311 = vld [vmem:[%s152 + $0x1140] sm:$0xf]
        %v1312 = vld [vmem:[%s152 + $0x1144] sm:$0xf]
        %v1313 = vld [vmem:[%s152 + $0x1148] sm:$0xf]
        %v1314 = vld [vmem:[%s152 + $0x114c] sm:$0xf]
        %v1315 = vld [vmem:[%s152 + $0x1150] sm:$0xf]
        %v1316 = vld [vmem:[%s152 + $0x1154] sm:$0xf]
        %v1317 = vld [vmem:[%s152 + $0x1158] sm:$0xf]
        %v1318 = vld [vmem:[%s152 + $0x115c] sm:$0xf]
        %v1319 = vld [vmem:[%s152 + $0x1160] sm:$0xf]
        %v1320 = vld [vmem:[%s152 + $0x1164] sm:$0xf]
        %v1321 = vld [vmem:[%s152 + $0x1168] sm:$0xf]
        %v1322 = vld [vmem:[%s152 + $0x116c] sm:$0xf]
        %v1323 = vld [vmem:[%s152 + $0x1170] sm:$0xf]
        %v1324 = vld [vmem:[%s152 + $0x1174] sm:$0xf]
        %v1325 = vld [vmem:[%s152 + $0x1178] sm:$0xf]
        %v1326 = vld [vmem:[%s152 + $0x117c] sm:$0xf]
        %v1327 = vld [vmem:[%s152 + $0x1180] sm:$0xf]
        %v1328 = vld [vmem:[%s152 + $0x1184] sm:$0xf]
        %v1329 = vld [vmem:[%s152 + $0x1188] sm:$0xf]
        %v1330 = vld [vmem:[%s152 + $0x118c] sm:$0xf]
        %v1331 = vld [vmem:[%s152 + $0x1190] sm:$0xf]
        %v1332 = vld [vmem:[%s152 + $0x1194] sm:$0xf]
        %v1333 = vld [vmem:[%s152 + $0x1198] sm:$0xf]
        %v1334 = vld [vmem:[%s152 + $0x119c] sm:$0xf]
        %v1335 = vld [vmem:[%s152 + $0x11a0] sm:$0xf]
        %v1336 = vld [vmem:[%s152 + $0x11a4] sm:$0xf]
        %v1337 = vld [vmem:[%s152 + $0x11a8] sm:$0xf]
        %v1338 = vld [vmem:[%s152 + $0x11ac] sm:$0xf]
        %v1339 = vld [vmem:[%s152 + $0x11b0] sm:$0xf]
        %v1340 = vld [vmem:[%s152 + $0x11b4] sm:$0xf]
        %v1341 = vld [vmem:[%s152 + $0x11b8] sm:$0xf]
        %v1342 = vld [vmem:[%s152 + $0x11bc] sm:$0xf]
        %v1343 = vld [vmem:[%s152 + $0x11c0] sm:$0xf]
        %v1344 = vld [vmem:[%s152 + $0x11c4] sm:$0xf]
        %v1345 = vld [vmem:[%s152 + $0x11c8] sm:$0xf]
        %v1346 = vld [vmem:[%s152 + $0x11cc] sm:$0xf]
        %v1347 = vld [vmem:[%s152 + $0x11d0] sm:$0xf]
        %v1348 = vld [vmem:[%s152 + $0x11d4] sm:$0xf]
        %v1349 = vld [vmem:[%s152 + $0x11d8] sm:$0xf]
        %v1350 = vld [vmem:[%s152 + $0x11dc] sm:$0xf]
        %v1351 = vld [vmem:[%s152 + $0x11e0] sm:$0xf]
        %v1352 = vld [vmem:[%s152 + $0x11e4] sm:$0xf]
        %v1353 = vld [vmem:[%s152 + $0x11e8] sm:$0xf]
        %v1354 = vld [vmem:[%s152 + $0x11ec] sm:$0xf]
        %v1355 = vld [vmem:[%s152 + $0x11f0] sm:$0xf]
        %v1356 = vld [vmem:[%s152 + $0x11f4] sm:$0xf]
        %v1357 = vld [vmem:[%s152 + $0x11f8] sm:$0xf]
        %v1358 = vld [vmem:[%s152 + $0x11fc] sm:$0xf]
        %v1359 = vld [vmem:[%s152 + $0x1200] sm:$0xf]
        %v1360 = vld [vmem:[%s152 + $0x1204] sm:$0xf]
        %v1361 = vld [vmem:[%s152 + $0x1208] sm:$0xf]
        %v1362 = vld [vmem:[%s152 + $0x120c] sm:$0xf]
        %v1363 = vld [vmem:[%s152 + $0x1210] sm:$0xf]
        %v1364 = vld [vmem:[%s152 + $0x1214] sm:$0xf]
        %v1365 = vld [vmem:[%s152 + $0x1218] sm:$0xf]
        %v1366 = vld [vmem:[%s152 + $0x121c] sm:$0xf]
        %v1367 = vld [vmem:[%s152 + $0x1220] sm:$0xf]
        %v1368 = vld [vmem:[%s152 + $0x1224] sm:$0xf]
        %v1369 = vld [vmem:[%s152 + $0x1228] sm:$0xf]
        %v1370 = vld [vmem:[%s152 + $0x122c] sm:$0xf]
        %v1371 = vld [vmem:[%s152 + $0x1230] sm:$0xf]
        %v1372 = vld [vmem:[%s152 + $0x1234] sm:$0xf]
        %v1373 = vld [vmem:[%s152 + $0x1238] sm:$0xf]
        %v1374 = vld [vmem:[%s152 + $0x123c] sm:$0xf]
        %v1375 = vld [vmem:[%s152 + $0x1240] sm:$0xf]
        %v1376 = vld [vmem:[%s152 + $0x1244] sm:$0xf]
        %v1377 = vld [vmem:[%s152 + $0x1248] sm:$0xf]
        %v1378 = vld [vmem:[%s152 + $0x124c] sm:$0xf]
        %v1379 = vld [vmem:[%s152 + $0x1250] sm:$0xf]
        %v1380 = vld [vmem:[%s152 + $0x1254] sm:$0xf]
        %v1381 = vld [vmem:[%s152 + $0x1258] sm:$0xf]
        %v1382 = vld [vmem:[%s152 + $0x125c] sm:$0xf]
        %v1383 = vld [vmem:[%s152 + $0x1260] sm:$0xf]
        %v1384 = vld [vmem:[%s152 + $0x1264] sm:$0xf]
        %v1385 = vld [vmem:[%s152 + $0x1268] sm:$0xf]
        %v1386 = vld [vmem:[%s152 + $0x126c] sm:$0xf]
        %v1387 = vld [vmem:[%s152 + $0x1270] sm:$0xf]
        %v1388 = vld [vmem:[%s152 + $0x1274] sm:$0xf]
        %v1389 = vld [vmem:[%s152 + $0x1278] sm:$0xf]
        %v1390 = vld [vmem:[%s152 + $0x127c] sm:$0xf]
        %v1391 = vld [vmem:[%s152 + $0x1280] sm:$0xf]
        %v1392 = vld [vmem:[%s152 + $0x1284] sm:$0xf]
        %v1393 = vld [vmem:[%s152 + $0x1288] sm:$0xf]
        %v1394 = vld [vmem:[%s152 + $0x128c] sm:$0xf]
        %v1395 = vld [vmem:[%s152 + $0x1290] sm:$0xf]
        %v1396 = vld [vmem:[%s152 + $0x1294] sm:$0xf]
        %v1397 = vld [vmem:[%s152 + $0x1298] sm:$0xf]
        %v1398 = vld [vmem:[%s152 + $0x129c] sm:$0xf]
        %v1399 = vld [vmem:[%s152 + $0x12a0] sm:$0xf]
        %v1400 = vld [vmem:[%s152 + $0x12a4] sm:$0xf]
        %v1401 = vld [vmem:[%s152 + $0x12a8] sm:$0xf]
        %v1402 = vld [vmem:[%s152 + $0x12ac] sm:$0xf]
        %v1403 = vld [vmem:[%s152 + $0x12b0] sm:$0xf]
        %v1404 = vld [vmem:[%s152 + $0x12b4] sm:$0xf]
        %v1405 = vld [vmem:[%s152 + $0x12b8] sm:$0xf]
        %v1406 = vld [vmem:[%s152 + $0x12bc] sm:$0xf]
        %v1407 = vld [vmem:[%s152 + $0x12c0] sm:$0xf]
        %v1408 = vld [vmem:[%s152 + $0x12c4] sm:$0xf]
        %v1409 = vld [vmem:[%s152 + $0x12c8] sm:$0xf]
        %v1410 = vld [vmem:[%s152 + $0x12cc] sm:$0xf]
        %v1411 = vld [vmem:[%s152 + $0x12d0] sm:$0xf]
        %v1412 = vld [vmem:[%s152 + $0x12d4] sm:$0xf]
        %v1413 = vld [vmem:[%s152 + $0x12d8] sm:$0xf]
        %v1414 = vld [vmem:[%s152 + $0x12dc] sm:$0xf]
        %v1415 = vld [vmem:[%s152 + $0x12e0] sm:$0xf]
        %v1416 = vld [vmem:[%s152 + $0x12e4] sm:$0xf]
        %v1417 = vld [vmem:[%s152 + $0x12e8] sm:$0xf]
        %v1418 = vld [vmem:[%s152 + $0x12ec] sm:$0xf]
        %v1419 = vld [vmem:[%s152 + $0x12f0] sm:$0xf]
        %v1420 = vld [vmem:[%s152 + $0x12f4] sm:$0xf]
        %v1421 = vld [vmem:[%s152 + $0x12f8] sm:$0xf]
        %v1422 = vld [vmem:[%s152 + $0x12fc] sm:$0xf]
        %v1423 = vld [vmem:[%s152 + $0x1300] sm:$0xf]
        %v1424 = vld [vmem:[%s152 + $0x1304] sm:$0xf]
        %v1425 = vld [vmem:[%s152 + $0x1308] sm:$0xf]
        %v1426 = vld [vmem:[%s152 + $0x130c] sm:$0xf]
        %v1427 = vld [vmem:[%s152 + $0x1310] sm:$0xf]
        %v1428 = vld [vmem:[%s152 + $0x1314] sm:$0xf]
        %v1429 = vld [vmem:[%s152 + $0x1318] sm:$0xf]
        %v1430 = vld [vmem:[%s152 + $0x131c] sm:$0xf]
        %v1431 = vld [vmem:[%s152 + $0x1320] sm:$0xf]
        %v1432 = vld [vmem:[%s152 + $0x1324] sm:$0xf]
        %v1433 = vld [vmem:[%s152 + $0x1328] sm:$0xf]
        %v1434 = vld [vmem:[%s152 + $0x132c] sm:$0xf]
        %v1435 = vld [vmem:[%s152 + $0x1330] sm:$0xf]
        %v1436 = vld [vmem:[%s152 + $0x1334] sm:$0xf]
        %v1437 = vld [vmem:[%s152 + $0x1338] sm:$0xf]
        %v1438 = vld [vmem:[%s152 + $0x133c] sm:$0xf]
        %v1439 = vld [vmem:[%s152 + $0x1340] sm:$0xf]
        %v1440 = vld [vmem:[%s152 + $0x1344] sm:$0xf]
        %v1441 = vld [vmem:[%s152 + $0x1348] sm:$0xf]
        %v1442 = vld [vmem:[%s152 + $0x134c] sm:$0xf]
        %v1443 = vld [vmem:[%s152 + $0x1350] sm:$0xf]
        %v1444 = vld [vmem:[%s152 + $0x1354] sm:$0xf]
        %v1445 = vld [vmem:[%s152 + $0x1358] sm:$0xf]
        %v1446 = vld [vmem:[%s152 + $0x135c] sm:$0xf]
        %v1447 = vld [vmem:[%s152 + $0x1360] sm:$0xf]
        %v1448 = vld [vmem:[%s152 + $0x1364] sm:$0xf]
        %v1449 = vld [vmem:[%s152 + $0x1368] sm:$0xf]
        %v1450 = vld [vmem:[%s152 + $0x136c] sm:$0xf]
        %v1451 = vld [vmem:[%s152 + $0x1370] sm:$0xf]
        %v1452 = vld [vmem:[%s152 + $0x1374] sm:$0xf]
        %v1453 = vld [vmem:[%s152 + $0x1378] sm:$0xf]
        %v1454 = vld [vmem:[%s152 + $0x137c] sm:$0xf]
        %v1455 = vld [vmem:[%s152 + $0x1380] sm:$0xf]
        %v1456 = vld [vmem:[%s152 + $0x1384] sm:$0xf]
        %v1457 = vld [vmem:[%s152 + $0x1388] sm:$0xf]
        %v1458 = vld [vmem:[%s152 + $0x138c] sm:$0xf]
        %v1459 = vld [vmem:[%s152 + $0x1390] sm:$0xf]
        %v1460 = vld [vmem:[%s152 + $0x1394] sm:$0xf]
        %v1461 = vld [vmem:[%s152 + $0x1398] sm:$0xf]
        %v1462 = vld [vmem:[%s152 + $0x139c] sm:$0xf]
        %v1463 = vld [vmem:[%s152 + $0x13a0] sm:$0xf]
        %v1464 = vld [vmem:[%s152 + $0x13a4] sm:$0xf]
        %v1465 = vld [vmem:[%s152 + $0x13a8] sm:$0xf]
        %v1466 = vld [vmem:[%s152 + $0x13ac] sm:$0xf]
        %v1467 = vld [vmem:[%s152 + $0x13b0] sm:$0xf]
        %v1468 = vld [vmem:[%s152 + $0x13b4] sm:$0xf]
        %v1469 = vld [vmem:[%s152 + $0x13b8] sm:$0xf]
        %v1470 = vld [vmem:[%s152 + $0x13bc] sm:$0xf]
        %v1471 = vld [vmem:[%s152 + $0x13c0] sm:$0xf]
        %v1472 = vld [vmem:[%s152 + $0x13c4] sm:$0xf]
        %v1473 = vld [vmem:[%s152 + $0x13c8] sm:$0xf]
        %v1474 = vld [vmem:[%s152 + $0x13cc] sm:$0xf]
        %v1475 = vld [vmem:[%s152 + $0x13d0] sm:$0xf]
        %v1476 = vld [vmem:[%s152 + $0x13d4] sm:$0xf]
        %v1477 = vld [vmem:[%s152 + $0x13d8] sm:$0xf]
        %v1478 = vld [vmem:[%s152 + $0x13dc] sm:$0xf]
        %v1479 = vld [vmem:[%s152 + $0x13e0] sm:$0xf]
        %v1480 = vld [vmem:[%s152 + $0x13e4] sm:$0xf]
        %v1481 = vld [vmem:[%s152 + $0x13e8] sm:$0xf]
        %v1482 = vld [vmem:[%s152 + $0x13ec] sm:$0xf]
        %v1483 = vld [vmem:[%s152 + $0x13f0] sm:$0xf]
        %v1484 = vld [vmem:[%s152 + $0x13f4] sm:$0xf]
        %v1485 = vld [vmem:[%s152 + $0x13f8] sm:$0xf]
        %v1486 = vld [vmem:[%s152 + $0x13fc] sm:$0xf]
        %v1487 = vld [vmem:[%s152 + $0x1400] sm:$0xf]
        %v1488 = vld [vmem:[%s152 + $0x1404] sm:$0xf]
        %v1489 = vld [vmem:[%s152 + $0x1408] sm:$0xf]
        %v1490 = vld [vmem:[%s152 + $0x140c] sm:$0xf]
        %v1491 = vld [vmem:[%s152 + $0x1410] sm:$0xf]
        %v1492 = vld [vmem:[%s152 + $0x1414] sm:$0xf]
        %v1493 = vld [vmem:[%s152 + $0x1418] sm:$0xf]
        %v1494 = vld [vmem:[%s152 + $0x141c] sm:$0xf]
        %v1495 = vld [vmem:[%s152 + $0x1420] sm:$0xf]
        %v1496 = vld [vmem:[%s152 + $0x1424] sm:$0xf]
        %v1497 = vld [vmem:[%s152 + $0x1428] sm:$0xf]
        %v1498 = vld [vmem:[%s152 + $0x142c] sm:$0xf]
        %v1499 = vld [vmem:[%s152 + $0x1430] sm:$0xf]
        %v1500 = vld [vmem:[%s152 + $0x1434] sm:$0xf]
        %v1501 = vld [vmem:[%s152 + $0x1438] sm:$0xf]
        %v1502 = vld [vmem:[%s152 + $0x143c] sm:$0xf]
        %v1503 = vld [vmem:[%s152 + $0x1440] sm:$0xf]
        %v1504 = vld [vmem:[%s152 + $0x1444] sm:$0xf]
        %v1505 = vld [vmem:[%s152 + $0x1448] sm:$0xf]
        %v1506 = vld [vmem:[%s152 + $0x144c] sm:$0xf]
        %v1507 = vld [vmem:[%s152 + $0x1450] sm:$0xf]
        %v1508 = vld [vmem:[%s152 + $0x1454] sm:$0xf]
        %v1509 = vld [vmem:[%s152 + $0x1458] sm:$0xf]
        %v1510 = vld [vmem:[%s152 + $0x145c] sm:$0xf]
        %v1511 = vld [vmem:[%s152 + $0x1460] sm:$0xf]
        %v1512 = vld [vmem:[%s152 + $0x1464] sm:$0xf]
        %v1513 = vld [vmem:[%s152 + $0x1468] sm:$0xf]
        %v1514 = vld [vmem:[%s152 + $0x146c] sm:$0xf]
        %v1515 = vld [vmem:[%s152 + $0x1470] sm:$0xf]
        %v1516 = vld [vmem:[%s152 + $0x1474] sm:$0xf]
        %v1517 = vld [vmem:[%s152 + $0x1478] sm:$0xf]
        %v1518 = vld [vmem:[%s152 + $0x147c] sm:$0xf]
        %v1519 = vld [vmem:[%s152 + $0x1480] sm:$0xf]
        %v1520 = vld [vmem:[%s152 + $0x1484] sm:$0xf]
        %v1521 = vld [vmem:[%s152 + $0x1488] sm:$0xf]
        %v1522 = vld [vmem:[%s152 + $0x148c] sm:$0xf]
        %v1523 = vld [vmem:[%s152 + $0x1490] sm:$0xf]
        %v1524 = vld [vmem:[%s152 + $0x1494] sm:$0xf]
        %v1525 = vld [vmem:[%s152 + $0x1498] sm:$0xf]
        %v1526 = vld [vmem:[%s152 + $0x149c] sm:$0xf]
        %v1527 = vld [vmem:[%s152 + $0x14a0] sm:$0xf]
        %v1528 = vld [vmem:[%s152 + $0x14a4] sm:$0xf]
        %v1529 = vld [vmem:[%s152 + $0x14a8] sm:$0xf]
        %v1530 = vld [vmem:[%s152 + $0x14ac] sm:$0xf]
        %v1531 = vld [vmem:[%s152 + $0x14b0] sm:$0xf]
        %v1532 = vld [vmem:[%s152 + $0x14b4] sm:$0xf]
        %v1533 = vld [vmem:[%s152 + $0x14b8] sm:$0xf]
        %v1534 = vld [vmem:[%s152 + $0x14bc] sm:$0xf]
        %v1535 = vld [vmem:[%s152 + $0x14c0] sm:$0xf]
        %v1536 = vld [vmem:[%s152 + $0x14c4] sm:$0xf]
        %v1537 = vld [vmem:[%s152 + $0x14c8] sm:$0xf]
        %v1538 = vld [vmem:[%s152 + $0x14cc] sm:$0xf]
        %v1539 = vld [vmem:[%s152 + $0x14d0] sm:$0xf]
        %v1540 = vld [vmem:[%s152 + $0x14d4] sm:$0xf]
        %v1541 = vld [vmem:[%s152 + $0x14d8] sm:$0xf]
        %v1542 = vld [vmem:[%s152 + $0x14dc] sm:$0xf]
        %v1543 = vld [vmem:[%s152 + $0x14e0] sm:$0xf]
        %v1544 = vld [vmem:[%s152 + $0x14e4] sm:$0xf]
        %v1545 = vld [vmem:[%s152 + $0x14e8] sm:$0xf]
        %v1546 = vld [vmem:[%s152 + $0x14ec] sm:$0xf]
        %v1547 = vld [vmem:[%s152 + $0x14f0] sm:$0xf]
        %v1548 = vld [vmem:[%s152 + $0x14f4] sm:$0xf]
        %v1549 = vld [vmem:[%s152 + $0x14f8] sm:$0xf]
        %v1550 = vld [vmem:[%s152 + $0x14fc] sm:$0xf]
        %v1551 = vld [vmem:[%s152 + $0x1500] sm:$0xf]
        %v1552 = vld [vmem:[%s152 + $0x1504] sm:$0xf]
        %v1553 = vld [vmem:[%s152 + $0x1508] sm:$0xf]
        %v1554 = vld [vmem:[%s152 + $0x150c] sm:$0xf]
        %v1555 = vld [vmem:[%s152 + $0x1510] sm:$0xf]
        %v1556 = vld [vmem:[%s152 + $0x1514] sm:$0xf]
        %v1557 = vld [vmem:[%s152 + $0x1518] sm:$0xf]
        %v1558 = vld [vmem:[%s152 + $0x151c] sm:$0xf]
        %v1559 = vld [vmem:[%s152 + $0x1520] sm:$0xf]
        %v1560 = vld [vmem:[%s152 + $0x1524] sm:$0xf]
        %v1561 = vld [vmem:[%s152 + $0x1528] sm:$0xf]
        %v1562 = vld [vmem:[%s152 + $0x152c] sm:$0xf]
        %v1563 = vld [vmem:[%s152 + $0x1530] sm:$0xf]
        %v1564 = vld [vmem:[%s152 + $0x1534] sm:$0xf]
        %v1565 = vld [vmem:[%s152 + $0x1538] sm:$0xf]
        %v1566 = vld [vmem:[%s152 + $0x153c] sm:$0xf]
        %v1567 = vld [vmem:[%s152 + $0x1540] sm:$0xf]
        %v1568 = vld [vmem:[%s152 + $0x1544] sm:$0xf]
        %v1569 = vld [vmem:[%s152 + $0x1548] sm:$0xf]
        %v1570 = vld [vmem:[%s152 + $0x154c] sm:$0xf]
        %v1571 = vld [vmem:[%s152 + $0x1550] sm:$0xf]
        %v1572 = vld [vmem:[%s152 + $0x1554] sm:$0xf]
        %v1573 = vld [vmem:[%s152 + $0x1558] sm:$0xf]
        %v1574 = vld [vmem:[%s152 + $0x155c] sm:$0xf]
        %v1575 = vld [vmem:[%s152 + $0x1560] sm:$0xf]
        %v1576 = vld [vmem:[%s152 + $0x1564] sm:$0xf]
        %v1577 = vld [vmem:[%s152 + $0x1568] sm:$0xf]
        %v1578 = vld [vmem:[%s152 + $0x156c] sm:$0xf]
        %v1579 = vld [vmem:[%s152 + $0x1570] sm:$0xf]
        %v1580 = vld [vmem:[%s152 + $0x1574] sm:$0xf]
        %v1581 = vld [vmem:[%s152 + $0x1578] sm:$0xf]
        %v1582 = vld [vmem:[%s152 + $0x157c] sm:$0xf]
        %v1583 = vld [vmem:[%s152 + $0x1580] sm:$0xf]
        %v1584 = vld [vmem:[%s152 + $0x1584] sm:$0xf]
        %v1585 = vld [vmem:[%s152 + $0x1588] sm:$0xf]
        %v1586 = vld [vmem:[%s152 + $0x158c] sm:$0xf]
        %v1587 = vld [vmem:[%s152 + $0x1590] sm:$0xf]
        %v1588 = vld [vmem:[%s152 + $0x1594] sm:$0xf]
        %v1589 = vld [vmem:[%s152 + $0x1598] sm:$0xf]
        %v1590 = vld [vmem:[%s152 + $0x159c] sm:$0xf]
        %v1591 = vld [vmem:[%s152 + $0x15a0] sm:$0xf]
        %v1592 = vld [vmem:[%s152 + $0x15a4] sm:$0xf]
        %v1593 = vld [vmem:[%s152 + $0x15a8] sm:$0xf]
        %v1594 = vld [vmem:[%s152 + $0x15ac] sm:$0xf]
        %v1595 = vld [vmem:[%s152 + $0x15b0] sm:$0xf]
        %v1596 = vld [vmem:[%s152 + $0x15b4] sm:$0xf]
        %v1597 = vld [vmem:[%s152 + $0x15b8] sm:$0xf]
        %v1598 = vld [vmem:[%s152 + $0x15bc] sm:$0xf]
        %v1599 = vld [vmem:[%s152 + $0x15c0] sm:$0xf]
        %v1600 = vld [vmem:[%s152 + $0x15c4] sm:$0xf]
        %v1601 = vld [vmem:[%s152 + $0x15c8] sm:$0xf]
        %v1602 = vld [vmem:[%s152 + $0x15cc] sm:$0xf]
        %v1603 = vld [vmem:[%s152 + $0x15d0] sm:$0xf]
        %v1604 = vld [vmem:[%s152 + $0x15d4] sm:$0xf]
        %v1605 = vld [vmem:[%s152 + $0x15d8] sm:$0xf]
        %v1606 = vld [vmem:[%s152 + $0x15dc] sm:$0xf]
        %v1607 = vld [vmem:[%s152 + $0x15e0] sm:$0xf]
        %v1608 = vld [vmem:[%s152 + $0x15e4] sm:$0xf]
        %v1609 = vld [vmem:[%s152 + $0x15e8] sm:$0xf]
        %v1610 = vld [vmem:[%s152 + $0x15ec] sm:$0xf]
        %v1611 = vld [vmem:[%s152 + $0x15f0] sm:$0xf]
        %v1612 = vld [vmem:[%s152 + $0x15f4] sm:$0xf]
        %v1613 = vld [vmem:[%s152 + $0x15f8] sm:$0xf]
        %v1614 = vld [vmem:[%s152 + $0x15fc] sm:$0xf]
        %v1615 = vld [vmem:[%s152 + $0x1600] sm:$0xf]
        %v1616 = vld [vmem:[%s152 + $0x1604] sm:$0xf]
        %v1617 = vld [vmem:[%s152 + $0x1608] sm:$0xf]
        %v1618 = vld [vmem:[%s152 + $0x160c] sm:$0xf]
        %v1619 = vld [vmem:[%s152 + $0x1610] sm:$0xf]
        %v1620 = vld [vmem:[%s152 + $0x1614] sm:$0xf]
        %v1621 = vld [vmem:[%s152 + $0x1618] sm:$0xf]
        %v1622 = vld [vmem:[%s152 + $0x161c] sm:$0xf]
        %v1623 = vld [vmem:[%s152 + $0x1620] sm:$0xf]
        %v1624 = vld [vmem:[%s152 + $0x1624] sm:$0xf]
        %v1625 = vld [vmem:[%s152 + $0x1628] sm:$0xf]
        %v1626 = vld [vmem:[%s152 + $0x162c] sm:$0xf]
        %v1627 = vld [vmem:[%s152 + $0x1630] sm:$0xf]
        %v1628 = vld [vmem:[%s152 + $0x1634] sm:$0xf]
        %v1629 = vld [vmem:[%s152 + $0x1638] sm:$0xf]
        %v1630 = vld [vmem:[%s152 + $0x163c] sm:$0xf]
        %v1631 = vld [vmem:[%s152 + $0x1640] sm:$0xf]
        %v1632 = vld [vmem:[%s152 + $0x1644] sm:$0xf]
        %v1633 = vld [vmem:[%s152 + $0x1648] sm:$0xf]
        %v1634 = vld [vmem:[%s152 + $0x164c] sm:$0xf]
        %v1635 = vld [vmem:[%s152 + $0x1650] sm:$0xf]
        %v1636 = vld [vmem:[%s152 + $0x1654] sm:$0xf]
        %v1637 = vld [vmem:[%s152 + $0x1658] sm:$0xf]
        %v1638 = vld [vmem:[%s152 + $0x165c] sm:$0xf]
        %v1639 = vld [vmem:[%s152 + $0x1660] sm:$0xf]
        %v1640 = vld [vmem:[%s152 + $0x1664] sm:$0xf]
        %v1641 = vld [vmem:[%s152 + $0x1668] sm:$0xf]
        %v1642 = vld [vmem:[%s152 + $0x166c] sm:$0xf]
        %v1643 = vld [vmem:[%s152 + $0x1670] sm:$0xf]
        %v1644 = vld [vmem:[%s152 + $0x1674] sm:$0xf]
        %v1645 = vld [vmem:[%s152 + $0x1678] sm:$0xf]
        %v1646 = vld [vmem:[%s152 + $0x167c] sm:$0xf]
        %v1692 = vunpack.c.l.b16 %v162
        %v1693 = vunpack.c.h.b16 %v162
        %v1694 = vunpack.c.l.b16 %v163
        %v1695 = vunpack.c.h.b16 %v163
        %v1696 = vunpack.c.l.b16 %v164
        %v1697 = vunpack.c.h.b16 %v164
        %v1698 = vunpack.c.l.b16 %v165
        %v1699 = vunpack.c.h.b16 %v165
        %v1700 = vunpack.c.l.b16 %v166
        %v1701 = vunpack.c.h.b16 %v166
        %v1702 = vunpack.c.l.b16 %v167
        %v1703 = vunpack.c.h.b16 %v167
        %v1704 = vunpack.c.l.b16 %v168
        %v1705 = vunpack.c.h.b16 %v168
        %v1706 = vunpack.c.l.b16 %v169
        %v1707 = vunpack.c.h.b16 %v169
        %v1708 = vunpack.c.l.b16 %v170
        %v1709 = vunpack.c.h.b16 %v170
        %v1710 = vunpack.c.l.b16 %v171
        %v1711 = vunpack.c.h.b16 %v171
        %v1712 = vunpack.c.l.b16 %v172
        %v1713 = vunpack.c.h.b16 %v172
        %v1714 = vunpack.c.l.b16 %v173
        %v1715 = vunpack.c.h.b16 %v173
        %v1716 = vunpack.c.l.b16 %v174
        %v1717 = vunpack.c.h.b16 %v174
        %v1718 = vunpack.c.l.b16 %v175
        %v1719 = vunpack.c.h.b16 %v175
        %v1720 = vunpack.c.l.b16 %v176
        %v1721 = vunpack.c.h.b16 %v176
        %v1722 = vunpack.c.l.b16 %v177
        %v1723 = vunpack.c.h.b16 %v177
        %v1724 = vunpack.c.l.b16 %v178
        %v1725 = vunpack.c.h.b16 %v178
        %v1726 = vunpack.c.l.b16 %v179
        %v1727 = vunpack.c.h.b16 %v179
        %v1728 = vunpack.c.l.b16 %v180
        %v1729 = vunpack.c.h.b16 %v180
        %v1730 = vunpack.c.l.b16 %v181
        %v1731 = vunpack.c.h.b16 %v181
        %v1732 = vunpack.c.l.b16 %v182
        %v1733 = vunpack.c.h.b16 %v182
        %v1734 = vunpack.c.l.b16 %v183
        %v1735 = vunpack.c.h.b16 %v183
        %v1736 = vunpack.c.l.b16 %v184
        %v1737 = vunpack.c.h.b16 %v184
        %v1738 = vunpack.c.l.b16 %v185
        %v1739 = vunpack.c.h.b16 %v185
        %v1740 = vunpack.c.l.b16 %v186
        %v1741 = vunpack.c.h.b16 %v186
        %v1742 = vunpack.c.l.b16 %v187
        %v1743 = vunpack.c.h.b16 %v187
        %v1744 = vunpack.c.l.b16 %v188
        %v1745 = vunpack.c.h.b16 %v188
        %v1746 = vunpack.c.l.b16 %v189
        %v1747 = vunpack.c.h.b16 %v189
        %v1748 = vunpack.c.l.b16 %v190
        %v1749 = vunpack.c.h.b16 %v190
        %v1750 = vunpack.c.l.b16 %v191
        %v1751 = vunpack.c.h.b16 %v191
        %v1752 = vunpack.c.l.b16 %v192
        %v1753 = vunpack.c.h.b16 %v192
        %v1754 = vunpack.c.l.b16 %v193
        %v1755 = vunpack.c.h.b16 %v193
        %v1756 = vunpack.c.l.b16 %v194
        %v1757 = vunpack.c.h.b16 %v194
        %v1758 = vunpack.c.l.b16 %v195
        %v1759 = vunpack.c.h.b16 %v195
        %v1760 = vunpack.c.l.b16 %v196
        %v1761 = vunpack.c.h.b16 %v196
        %v1762 = vunpack.c.l.b16 %v197
        %v1763 = vunpack.c.h.b16 %v197
        %v1764 = vunpack.c.l.b16 %v198
        %v1765 = vunpack.c.h.b16 %v198
        %v1766 = vunpack.c.l.b16 %v199
        %v1767 = vunpack.c.h.b16 %v199
        %v1768 = vunpack.c.l.b16 %v200
        %v1769 = vunpack.c.h.b16 %v200
        %v1770 = vunpack.c.l.b16 %v201
        %v1771 = vunpack.c.h.b16 %v201
        %v1772 = vunpack.c.l.b16 %v202
        %v1773 = vunpack.c.h.b16 %v202
        %v1774 = vunpack.c.l.b16 %v203
        %v1775 = vunpack.c.h.b16 %v203
        %v1776 = vunpack.c.l.b16 %v204
        %v1777 = vunpack.c.h.b16 %v204
        %v1778 = vunpack.c.l.b16 %v205
        %v1779 = vunpack.c.h.b16 %v205
        %v1780 = vunpack.c.l.b16 %v206
        %v1781 = vunpack.c.h.b16 %v206
        %v1782 = vpack.c.b16 %v1692, %v1692
        %v1783 = vpack.c.b16 %v1693, %v1693
        %v1784 = vpack.c.b16 %v1694, %v1694
        %v1785 = vpack.c.b16 %v1695, %v1695
        %v1786 = vpack.c.b16 %v1696, %v1696
        %v1787 = vpack.c.b16 %v1697, %v1697
        %v1788 = vpack.c.b16 %v1698, %v1698
        %v1789 = vpack.c.b16 %v1699, %v1699
        %v1790 = vpack.c.b16 %v1700, %v1700
        %v1791 = vpack.c.b16 %v1701, %v1701
        %v1792 = vpack.c.b16 %v1702, %v1702
        %v1793 = vpack.c.b16 %v1703, %v1703
        %v1794 = vpack.c.b16 %v1704, %v1704
        %v1795 = vpack.c.b16 %v1705, %v1705
        %v1796 = vpack.c.b16 %v1706, %v1706
        %v1797 = vpack.c.b16 %v1707, %v1707
        %v1798 = vpack.c.b16 %v1708, %v1708
        %v1799 = vpack.c.b16 %v1709, %v1709
        %v1800 = vpack.c.b16 %v1710, %v1710
        %v1801 = vpack.c.b16 %v1711, %v1711
        %v1802 = vpack.c.b16 %v1712, %v1712
        %v1803 = vpack.c.b16 %v1713, %v1713
        %v1804 = vpack.c.b16 %v1714, %v1714
        %v1805 = vpack.c.b16 %v1715, %v1715
        %v1806 = vpack.c.b16 %v1716, %v1716
        %v1807 = vpack.c.b16 %v1717, %v1717
        %v1808 = vpack.c.b16 %v1718, %v1718
        %v1809 = vpack.c.b16 %v1719, %v1719
        %v1810 = vpack.c.b16 %v1720, %v1720
        %v1811 = vpack.c.b16 %v1721, %v1721
        %v1812 = vpack.c.b16 %v1722, %v1722
        %v1813 = vpack.c.b16 %v1723, %v1723
        %v1814 = vpack.c.b16 %v1724, %v1724
        %v1815 = vpack.c.b16 %v1725, %v1725
        %v1816 = vpack.c.b16 %v1726, %v1726
        %v1817 = vpack.c.b16 %v1727, %v1727
        %v1818 = vpack.c.b16 %v1728, %v1728
        %v1819 = vpack.c.b16 %v1729, %v1729
        %v1820 = vpack.c.b16 %v1730, %v1730
        %v1821 = vpack.c.b16 %v1731, %v1731
        %v1822 = vpack.c.b16 %v1732, %v1732
        %v1823 = vpack.c.b16 %v1733, %v1733
        %v1824 = vpack.c.b16 %v1734, %v1734
        %v1825 = vpack.c.b16 %v1735, %v1735
        %v1826 = vpack.c.b16 %v1736, %v1736
        %v1827 = vpack.c.b16 %v1737, %v1737
        %v1828 = vpack.c.b16 %v1738, %v1738
        %v1829 = vpack.c.b16 %v1739, %v1739
        %v1830 = vpack.c.b16 %v1740, %v1740
        %v1831 = vpack.c.b16 %v1741, %v1741
        %v1832 = vpack.c.b16 %v1742, %v1742
        %v1833 = vpack.c.b16 %v1743, %v1743
        %v1834 = vpack.c.b16 %v1744, %v1744
        %v1835 = vpack.c.b16 %v1745, %v1745
        %v1836 = vpack.c.b16 %v1746, %v1746
        %v1837 = vpack.c.b16 %v1747, %v1747
        %v1838 = vpack.c.b16 %v1748, %v1748
        %v1839 = vpack.c.b16 %v1749, %v1749
        %v1840 = vpack.c.b16 %v1750, %v1750
        %v1841 = vpack.c.b16 %v1751, %v1751
        %v1842 = vpack.c.b16 %v1752, %v1752
        %v1843 = vpack.c.b16 %v1753, %v1753
        %v1844 = vpack.c.b16 %v1754, %v1754
        %v1845 = vpack.c.b16 %v1755, %v1755
        %v1846 = vpack.c.b16 %v1756, %v1756
        %v1847 = vpack.c.b16 %v1757, %v1757
        %v1848 = vpack.c.b16 %v1758, %v1758
        %v1849 = vpack.c.b16 %v1759, %v1759
        %v1850 = vpack.c.b16 %v1760, %v1760
        %v1851 = vpack.c.b16 %v1761, %v1761
        %v1852 = vpack.c.b16 %v1762, %v1762
        %v1853 = vpack.c.b16 %v1763, %v1763
        %v1854 = vpack.c.b16 %v1764, %v1764
        %v1855 = vpack.c.b16 %v1765, %v1765
        %v1856 = vpack.c.b16 %v1766, %v1766
        %v1857 = vpack.c.b16 %v1767, %v1767
        %v1858 = vpack.c.b16 %v1768, %v1768
        %v1859 = vpack.c.b16 %v1769, %v1769
        %v1860 = vpack.c.b16 %v1770, %v1770
        %v1861 = vpack.c.b16 %v1771, %v1771
        %v1862 = vpack.c.b16 %v1772, %v1772
        %v1863 = vpack.c.b16 %v1773, %v1773
        %v1864 = vpack.c.b16 %v1774, %v1774
        %v1865 = vpack.c.b16 %v1775, %v1775
        %v1866 = vpack.c.b16 %v1776, %v1776
        %v1867 = vpack.c.b16 %v1777, %v1777
        %v1868 = vpack.c.b16 %v1778, %v1778
        %v1869 = vpack.c.b16 %v1779, %v1779
        %v1870 = vpack.c.b16 %v1780, %v1780
        %v1871 = vpack.c.b16 %v1781, %v1781
        %v3402 = vunpack.c.l.b16 %v207
        %v3403 = vunpack.c.l.b16 %v208
        %v3404 = vunpack.c.l.b16 %v209
        %v3405 = vunpack.c.l.b16 %v210
        %v3406 = vunpack.c.l.b16 %v211
        %v3407 = vunpack.c.l.b16 %v212
        %v3408 = vunpack.c.l.b16 %v213
        %v3409 = vunpack.c.l.b16 %v214
        %v3410 = vunpack.c.l.b16 %v215
        %v3411 = vunpack.c.l.b16 %v216
        %v3412 = vunpack.c.l.b16 %v217
        %v3413 = vunpack.c.l.b16 %v218
        %v3414 = vunpack.c.l.b16 %v219
        %v3415 = vunpack.c.l.b16 %v220
        %v3416 = vunpack.c.l.b16 %v221
        %v3417 = vunpack.c.l.b16 %v222
        %v3418 = vunpack.c.l.b16 %v223
        %v3419 = vunpack.c.l.b16 %v224
        %v3420 = vunpack.c.l.b16 %v225
        %v3421 = vunpack.c.l.b16 %v226
        %v3422 = vunpack.c.l.b16 %v227
        %v3423 = vunpack.c.l.b16 %v228
        %v3424 = vunpack.c.l.b16 %v229
        %v3425 = vunpack.c.l.b16 %v230
        %v3426 = vunpack.c.l.b16 %v231
        %v3427 = vunpack.c.l.b16 %v232
        %v3428 = vunpack.c.l.b16 %v233
        %v3429 = vunpack.c.l.b16 %v234
        %v3430 = vunpack.c.l.b16 %v235
        %v3431 = vunpack.c.l.b16 %v236
        %v3432 = vunpack.c.l.b16 %v237
        %v3433 = vunpack.c.l.b16 %v238
        %v3434 = vunpack.c.l.b16 %v239
        %v3435 = vunpack.c.l.b16 %v240
        %v3436 = vunpack.c.l.b16 %v241
        %v3437 = vunpack.c.l.b16 %v242
        %v3438 = vunpack.c.l.b16 %v243
        %v3439 = vunpack.c.l.b16 %v244
        %v3440 = vunpack.c.l.b16 %v245
        %v3441 = vunpack.c.l.b16 %v246
        %v3442 = vunpack.c.l.b16 %v247
        %v3443 = vunpack.c.l.b16 %v248
        %v3444 = vunpack.c.l.b16 %v249
        %v3445 = vunpack.c.l.b16 %v250
        %v3446 = vunpack.c.l.b16 %v251
        %v3447 = vunpack.c.l.b16 %v252
        %v3448 = vunpack.c.l.b16 %v253
        %v3449 = vunpack.c.l.b16 %v254
        %v3450 = vunpack.c.l.b16 %v255
        %v3451 = vunpack.c.l.b16 %v256
        %v3452 = vunpack.c.l.b16 %v257
        %v3453 = vunpack.c.l.b16 %v258
        %v3454 = vunpack.c.l.b16 %v259
        %v3455 = vunpack.c.l.b16 %v260
        %v3456 = vunpack.c.l.b16 %v261
        %v3457 = vunpack.c.l.b16 %v262
        %v3458 = vunpack.c.l.b16 %v263
        %v3459 = vunpack.c.l.b16 %v264
        %v3460 = vunpack.c.l.b16 %v265
        %v3461 = vunpack.c.l.b16 %v266
        %v3462 = vunpack.c.l.b16 %v267
        %v3463 = vunpack.c.l.b16 %v268
        %v3464 = vunpack.c.l.b16 %v269
        %v3465 = vunpack.c.l.b16 %v270
        %v3466 = vunpack.c.l.b16 %v271
        %v3467 = vunpack.c.l.b16 %v272
        %v3468 = vunpack.c.l.b16 %v273
        %v3469 = vunpack.c.l.b16 %v274
        %v3470 = vunpack.c.l.b16 %v275
        %v3471 = vunpack.c.l.b16 %v276
        %v3472 = vunpack.c.l.b16 %v277
        %v3473 = vunpack.c.l.b16 %v278
        %v3474 = vunpack.c.l.b16 %v279
        %v3475 = vunpack.c.l.b16 %v280
        %v3476 = vunpack.c.l.b16 %v281
        %v3477 = vunpack.c.l.b16 %v282
        %v3478 = vunpack.c.l.b16 %v283
        %v3479 = vunpack.c.l.b16 %v284
        %v3480 = vunpack.c.l.b16 %v285
        %v3481 = vunpack.c.l.b16 %v286
        %v3482 = vunpack.c.l.b16 %v287
        %v3483 = vunpack.c.l.b16 %v288
        %v3484 = vunpack.c.l.b16 %v289
        %v3485 = vunpack.c.l.b16 %v290
        %v3486 = vunpack.c.l.b16 %v291
        %v3487 = vunpack.c.l.b16 %v292
        %v3488 = vunpack.c.l.b16 %v293
        %v3489 = vunpack.c.l.b16 %v294
        %v3490 = vunpack.c.l.b16 %v295
        %v3491 = vunpack.c.l.b16 %v296
        %v3492 = vunpack.c.l.b16 %v297
        %v3493 = vunpack.c.l.b16 %v298
        %v3494 = vunpack.c.l.b16 %v299
        %v3495 = vunpack.c.l.b16 %v300
        %v3496 = vunpack.c.l.b16 %v301
        %v3497 = vunpack.c.l.b16 %v302
        %v3498 = vunpack.c.l.b16 %v303
        %v3499 = vunpack.c.l.b16 %v304
        %v3500 = vunpack.c.l.b16 %v305
        %v3501 = vunpack.c.l.b16 %v306
        %v3502 = vunpack.c.l.b16 %v307
        %v3503 = vunpack.c.l.b16 %v308
        %v3504 = vunpack.c.l.b16 %v309
        %v3505 = vunpack.c.l.b16 %v310
        %v3506 = vunpack.c.l.b16 %v311
        %v3507 = vunpack.c.l.b16 %v312
        %v3508 = vunpack.c.l.b16 %v313
        %v3509 = vunpack.c.l.b16 %v314
        %v3510 = vunpack.c.l.b16 %v315
        %v3511 = vunpack.c.l.b16 %v316
        %v3512 = vunpack.c.l.b16 %v317
        %v3513 = vunpack.c.l.b16 %v318
        %v3514 = vunpack.c.l.b16 %v319
        %v3515 = vunpack.c.l.b16 %v320
        %v3516 = vunpack.c.l.b16 %v321
        %v3517 = vunpack.c.l.b16 %v322
        %v3518 = vunpack.c.l.b16 %v323
        %v3519 = vunpack.c.l.b16 %v324
        %v3520 = vunpack.c.l.b16 %v325
        %v3521 = vunpack.c.l.b16 %v326
        %v3522 = vunpack.c.l.b16 %v327
        %v3523 = vunpack.c.l.b16 %v328
        %v3524 = vunpack.c.l.b16 %v329
        %v3525 = vunpack.c.l.b16 %v330
        %v3526 = vunpack.c.l.b16 %v331
        %v3527 = vunpack.c.l.b16 %v332
        %v3528 = vunpack.c.l.b16 %v333
        %v3529 = vunpack.c.l.b16 %v334
        %v3530 = vunpack.c.l.b16 %v335
        %v3531 = vunpack.c.l.b16 %v336
        %v3532 = vunpack.c.l.b16 %v337
        %v3533 = vunpack.c.l.b16 %v338
        %v3534 = vunpack.c.l.b16 %v339
        %v3535 = vunpack.c.l.b16 %v340
        %v3536 = vunpack.c.l.b16 %v341
        %v3537 = vunpack.c.l.b16 %v342
        %v3538 = vunpack.c.l.b16 %v343
        %v3539 = vunpack.c.l.b16 %v344
        %v3540 = vunpack.c.l.b16 %v345
        %v3541 = vunpack.c.l.b16 %v346
        %v3542 = vunpack.c.l.b16 %v347
        %v3543 = vunpack.c.l.b16 %v348
        %v3544 = vunpack.c.l.b16 %v349
        %v3545 = vunpack.c.l.b16 %v350
        %v3546 = vunpack.c.l.b16 %v351
        %v3547 = vunpack.c.l.b16 %v352
        %v3548 = vunpack.c.l.b16 %v353
        %v3549 = vunpack.c.l.b16 %v354
        %v3550 = vunpack.c.l.b16 %v355
        %v3551 = vunpack.c.l.b16 %v356
        %v3552 = vunpack.c.l.b16 %v357
        %v3553 = vunpack.c.l.b16 %v358
        %v3554 = vunpack.c.l.b16 %v359
        %v3555 = vunpack.c.l.b16 %v360
        %v3556 = vunpack.c.l.b16 %v361
        %v3557 = vunpack.c.l.b16 %v362
        %v3558 = vunpack.c.l.b16 %v363
        %v3559 = vunpack.c.l.b16 %v364
        %v3560 = vunpack.c.l.b16 %v365
        %v3561 = vunpack.c.l.b16 %v366
        %v3562 = vunpack.c.l.b16 %v367
        %v3563 = vunpack.c.l.b16 %v368
        %v3564 = vunpack.c.l.b16 %v369
        %v3565 = vunpack.c.l.b16 %v370
        %v3566 = vunpack.c.l.b16 %v371
        %v3567 = vunpack.c.l.b16 %v372
        %v3568 = vunpack.c.l.b16 %v373
        %v3569 = vunpack.c.l.b16 %v374
        %v3570 = vunpack.c.l.b16 %v375
        %v3571 = vunpack.c.l.b16 %v376
        %v3572 = vunpack.c.l.b16 %v377
        %v3573 = vunpack.c.l.b16 %v378
        %v3574 = vunpack.c.l.b16 %v379
        %v3575 = vunpack.c.l.b16 %v380
        %v3576 = vunpack.c.l.b16 %v381
        %v3577 = vunpack.c.l.b16 %v382
        %v3578 = vunpack.c.l.b16 %v383
        %v3579 = vunpack.c.l.b16 %v384
        %v3580 = vunpack.c.l.b16 %v385
        %v3581 = vunpack.c.l.b16 %v386
        %v3582 = vunpack.c.l.b16 %v387
        %v3583 = vunpack.c.l.b16 %v388
        %v3584 = vunpack.c.l.b16 %v389
        %v3585 = vunpack.c.l.b16 %v390
        %v3586 = vunpack.c.l.b16 %v391
        %v3587 = vunpack.c.l.b16 %v392
        %v3588 = vunpack.c.l.b16 %v393
        %v3589 = vunpack.c.l.b16 %v394
        %v3590 = vunpack.c.l.b16 %v395
        %v3591 = vunpack.c.l.b16 %v396
        %v3592 = vunpack.c.l.b16 %v397
        %v3593 = vunpack.c.l.b16 %v398
        %v3594 = vunpack.c.l.b16 %v399
        %v3595 = vunpack.c.l.b16 %v400
        %v3596 = vunpack.c.l.b16 %v401
        %v3597 = vunpack.c.l.b16 %v402
        %v3598 = vunpack.c.l.b16 %v403
        %v3599 = vunpack.c.l.b16 %v404
        %v3600 = vunpack.c.l.b16 %v405
        %v3601 = vunpack.c.l.b16 %v406
        %v3602 = vunpack.c.l.b16 %v407
        %v3603 = vunpack.c.l.b16 %v408
        %v3604 = vunpack.c.l.b16 %v409
        %v3605 = vunpack.c.l.b16 %v410
        %v3606 = vunpack.c.l.b16 %v411
        %v3607 = vunpack.c.l.b16 %v412
        %v3608 = vunpack.c.l.b16 %v413
        %v3609 = vunpack.c.l.b16 %v414
        %v3610 = vunpack.c.l.b16 %v415
        %v3611 = vunpack.c.l.b16 %v416
        %v3612 = vunpack.c.l.b16 %v417
        %v3613 = vunpack.c.l.b16 %v418
        %v3614 = vunpack.c.l.b16 %v419
        %v3615 = vunpack.c.l.b16 %v420
        %v3616 = vunpack.c.l.b16 %v421
        %v3617 = vunpack.c.l.b16 %v422
        %v3618 = vunpack.c.l.b16 %v423
        %v3619 = vunpack.c.l.b16 %v424
        %v3620 = vunpack.c.l.b16 %v425
        %v3621 = vunpack.c.l.b16 %v426
        %v3622 = vunpack.c.l.b16 %v427
        %v3623 = vunpack.c.l.b16 %v428
        %v3624 = vunpack.c.l.b16 %v429
        %v3625 = vunpack.c.l.b16 %v430
        %v3626 = vunpack.c.l.b16 %v431
        %v3627 = vunpack.c.l.b16 %v432
        %v3628 = vunpack.c.l.b16 %v433
        %v3629 = vunpack.c.l.b16 %v434
        %v3630 = vunpack.c.l.b16 %v435
        %v3631 = vunpack.c.l.b16 %v436
        %v3632 = vunpack.c.l.b16 %v437
        %v3633 = vunpack.c.l.b16 %v438
        %v3634 = vunpack.c.l.b16 %v439
        %v3635 = vunpack.c.l.b16 %v440
        %v3636 = vunpack.c.l.b16 %v441
        %v3637 = vunpack.c.l.b16 %v442
        %v3638 = vunpack.c.l.b16 %v443
        %v3639 = vunpack.c.l.b16 %v444
        %v3640 = vunpack.c.l.b16 %v445
        %v3641 = vunpack.c.l.b16 %v446
        %v3642 = vunpack.c.l.b16 %v447
        %v3643 = vunpack.c.l.b16 %v448
        %v3644 = vunpack.c.l.b16 %v449
        %v3645 = vunpack.c.l.b16 %v450
        %v3646 = vunpack.c.l.b16 %v451
        %v3647 = vunpack.c.l.b16 %v452
        %v3648 = vunpack.c.l.b16 %v453
        %v3649 = vunpack.c.l.b16 %v454
        %v3650 = vunpack.c.l.b16 %v455
        %v3651 = vunpack.c.l.b16 %v456
        %v3652 = vunpack.c.l.b16 %v457
        %v3653 = vunpack.c.l.b16 %v458
        %v3654 = vunpack.c.l.b16 %v459
        %v3655 = vunpack.c.l.b16 %v460
        %v3656 = vunpack.c.l.b16 %v461
        %v3657 = vunpack.c.l.b16 %v462
        %v3658 = vunpack.c.l.b16 %v463
        %v3659 = vunpack.c.l.b16 %v464
        %v3660 = vunpack.c.l.b16 %v465
        %v3661 = vunpack.c.l.b16 %v466
        %v3662 = vunpack.c.l.b16 %v467
        %v3663 = vunpack.c.l.b16 %v468
        %v3664 = vunpack.c.l.b16 %v469
        %v3665 = vunpack.c.l.b16 %v470
        %v3666 = vunpack.c.l.b16 %v471
        %v3667 = vunpack.c.l.b16 %v472
        %v3668 = vunpack.c.l.b16 %v473
        %v3669 = vunpack.c.l.b16 %v474
        %v3670 = vunpack.c.l.b16 %v475
        %v3671 = vunpack.c.l.b16 %v476
        %v3672 = vunpack.c.l.b16 %v477
        %v3673 = vunpack.c.l.b16 %v478
        %v3674 = vunpack.c.l.b16 %v479
        %v3675 = vunpack.c.l.b16 %v480
        %v3676 = vunpack.c.l.b16 %v481
        %v3677 = vunpack.c.l.b16 %v482
        %v3678 = vunpack.c.l.b16 %v483
        %v3679 = vunpack.c.l.b16 %v484
        %v3680 = vunpack.c.l.b16 %v485
        %v3681 = vunpack.c.l.b16 %v486
        %v3682 = vunpack.c.l.b16 %v487
        %v3683 = vunpack.c.l.b16 %v488
        %v3684 = vunpack.c.l.b16 %v489
        %v3685 = vunpack.c.l.b16 %v490
        %v3686 = vunpack.c.l.b16 %v491
        %v3687 = vunpack.c.l.b16 %v492
        %v3688 = vunpack.c.l.b16 %v493
        %v3689 = vunpack.c.l.b16 %v494
        %v3690 = vunpack.c.l.b16 %v495
        %v3691 = vunpack.c.l.b16 %v496
        %v3692 = vunpack.c.l.b16 %v497
        %v3693 = vunpack.c.l.b16 %v498
        %v3694 = vunpack.c.l.b16 %v499
        %v3695 = vunpack.c.l.b16 %v500
        %v3696 = vunpack.c.l.b16 %v501
        %v3697 = vunpack.c.l.b16 %v502
        %v3698 = vunpack.c.l.b16 %v503
        %v3699 = vunpack.c.l.b16 %v504
        %v3700 = vunpack.c.l.b16 %v505
        %v3701 = vunpack.c.l.b16 %v506
        %v3702 = vunpack.c.l.b16 %v507
        %v3703 = vunpack.c.l.b16 %v508
        %v3704 = vunpack.c.l.b16 %v509
        %v3705 = vunpack.c.l.b16 %v510
        %v3706 = vunpack.c.l.b16 %v511
        %v3707 = vunpack.c.l.b16 %v512
        %v3708 = vunpack.c.l.b16 %v513
        %v3709 = vunpack.c.l.b16 %v514
        %v3710 = vunpack.c.l.b16 %v515
        %v3711 = vunpack.c.l.b16 %v516
        %v3712 = vunpack.c.l.b16 %v517
        %v3713 = vunpack.c.l.b16 %v518
        %v3714 = vunpack.c.l.b16 %v519
        %v3715 = vunpack.c.l.b16 %v520
        %v3716 = vunpack.c.l.b16 %v521
        %v3717 = vunpack.c.l.b16 %v522
        %v3718 = vunpack.c.l.b16 %v523
        %v3719 = vunpack.c.l.b16 %v524
        %v3720 = vunpack.c.l.b16 %v525
        %v3721 = vunpack.c.l.b16 %v526
        %v3722 = vunpack.c.l.b16 %v527
        %v3723 = vunpack.c.l.b16 %v528
        %v3724 = vunpack.c.l.b16 %v529
        %v3725 = vunpack.c.l.b16 %v530
        %v3726 = vunpack.c.l.b16 %v531
        %v3727 = vunpack.c.l.b16 %v532
        %v3728 = vunpack.c.l.b16 %v533
        %v3729 = vunpack.c.l.b16 %v534
        %v3730 = vunpack.c.l.b16 %v535
        %v3731 = vunpack.c.l.b16 %v536
        %v3732 = vunpack.c.l.b16 %v537
        %v3733 = vunpack.c.l.b16 %v538
        %v3734 = vunpack.c.l.b16 %v539
        %v3735 = vunpack.c.l.b16 %v540
        %v3736 = vunpack.c.l.b16 %v541
        %v3737 = vunpack.c.l.b16 %v542
        %v3738 = vunpack.c.l.b16 %v543
        %v3739 = vunpack.c.l.b16 %v544
        %v3740 = vunpack.c.l.b16 %v545
        %v3741 = vunpack.c.l.b16 %v546
        %v3742 = vunpack.c.l.b16 %v547
        %v3743 = vunpack.c.l.b16 %v548
        %v3744 = vunpack.c.l.b16 %v549
        %v3745 = vunpack.c.l.b16 %v550
        %v3746 = vunpack.c.l.b16 %v551
        %v3747 = vunpack.c.l.b16 %v552
        %v3748 = vunpack.c.l.b16 %v553
        %v3749 = vunpack.c.l.b16 %v554
        %v3750 = vunpack.c.l.b16 %v555
        %v3751 = vunpack.c.l.b16 %v556
        %v3752 = vunpack.c.l.b16 %v557
        %v3753 = vunpack.c.l.b16 %v558
        %v3754 = vunpack.c.l.b16 %v559
        %v3755 = vunpack.c.l.b16 %v560
        %v3756 = vunpack.c.l.b16 %v561
        %v3757 = vunpack.c.l.b16 %v562
        %v3758 = vunpack.c.l.b16 %v563
        %v3759 = vunpack.c.l.b16 %v564
        %v3760 = vunpack.c.l.b16 %v565
        %v3761 = vunpack.c.l.b16 %v566
        %v3762 = vunpack.c.l.b16 %v567
        %v3763 = vunpack.c.l.b16 %v568
        %v3764 = vunpack.c.l.b16 %v569
        %v3765 = vunpack.c.l.b16 %v570
        %v3766 = vunpack.c.l.b16 %v571
        %v3767 = vunpack.c.l.b16 %v572
        %v3768 = vunpack.c.l.b16 %v573
        %v3769 = vunpack.c.l.b16 %v574
        %v3770 = vunpack.c.l.b16 %v575
        %v3771 = vunpack.c.l.b16 %v576
        %v3772 = vunpack.c.l.b16 %v577
        %v3773 = vunpack.c.l.b16 %v578
        %v3774 = vunpack.c.l.b16 %v579
        %v3775 = vunpack.c.l.b16 %v580
        %v3776 = vunpack.c.l.b16 %v581
        %v3777 = vunpack.c.l.b16 %v582
        %v3778 = vunpack.c.l.b16 %v583
        %v3779 = vunpack.c.l.b16 %v584
        %v3780 = vunpack.c.l.b16 %v585
        %v3781 = vunpack.c.l.b16 %v586
        %v3782 = vunpack.c.l.b16 %v587
        %v3783 = vunpack.c.l.b16 %v588
        %v3784 = vunpack.c.l.b16 %v589
        %v3785 = vunpack.c.l.b16 %v590
        %v3786 = vunpack.c.l.b16 %v591
        %v3787 = vunpack.c.l.b16 %v592
        %v3788 = vunpack.c.l.b16 %v593
        %v3789 = vunpack.c.l.b16 %v594
        %v3790 = vunpack.c.l.b16 %v595
        %v3791 = vunpack.c.l.b16 %v596
        %v3792 = vunpack.c.l.b16 %v597
        %v3793 = vunpack.c.l.b16 %v598
        %v3794 = vunpack.c.l.b16 %v599
        %v3795 = vunpack.c.l.b16 %v600
        %v3796 = vunpack.c.l.b16 %v601
        %v3797 = vunpack.c.l.b16 %v602
        %v3798 = vunpack.c.l.b16 %v603
        %v3799 = vunpack.c.l.b16 %v604
        %v3800 = vunpack.c.l.b16 %v605
        %v3801 = vunpack.c.l.b16 %v606
        %v3802 = vunpack.c.l.b16 %v607
        %v3803 = vunpack.c.l.b16 %v608
        %v3804 = vunpack.c.l.b16 %v609
        %v3805 = vunpack.c.l.b16 %v610
        %v3806 = vunpack.c.l.b16 %v611
        %v3807 = vunpack.c.l.b16 %v612
        %v3808 = vunpack.c.l.b16 %v613
        %v3809 = vunpack.c.l.b16 %v614
        %v3810 = vunpack.c.l.b16 %v615
        %v3811 = vunpack.c.l.b16 %v616
        %v3812 = vunpack.c.l.b16 %v617
        %v3813 = vunpack.c.l.b16 %v618
        %v3814 = vunpack.c.l.b16 %v619
        %v3815 = vunpack.c.l.b16 %v620
        %v3816 = vunpack.c.l.b16 %v621
        %v3817 = vunpack.c.l.b16 %v622
        %v3818 = vunpack.c.l.b16 %v623
        %v3819 = vunpack.c.l.b16 %v624
        %v3820 = vunpack.c.l.b16 %v625
        %v3821 = vunpack.c.l.b16 %v626
        %v3822 = vunpack.c.l.b16 %v627
        %v3823 = vunpack.c.l.b16 %v628
        %v3824 = vunpack.c.l.b16 %v629
        %v3825 = vunpack.c.l.b16 %v630
        %v3826 = vunpack.c.l.b16 %v631
        %v3827 = vunpack.c.l.b16 %v632
        %v3828 = vunpack.c.l.b16 %v633
        %v3829 = vunpack.c.l.b16 %v634
        %v3830 = vunpack.c.l.b16 %v635
        %v3831 = vunpack.c.l.b16 %v636
        %v3832 = vunpack.c.l.b16 %v637
        %v3833 = vunpack.c.l.b16 %v638
        %v3834 = vunpack.c.l.b16 %v639
        %v3835 = vunpack.c.l.b16 %v640
        %v3836 = vunpack.c.l.b16 %v641
        %v3837 = vunpack.c.l.b16 %v642
        %v3838 = vunpack.c.l.b16 %v643
        %v3839 = vunpack.c.l.b16 %v644
        %v3840 = vunpack.c.l.b16 %v645
        %v3841 = vunpack.c.l.b16 %v646
        %v3842 = vunpack.c.l.b16 %v647
        %v3843 = vunpack.c.l.b16 %v648
        %v3844 = vunpack.c.l.b16 %v649
        %v3845 = vunpack.c.l.b16 %v650
        %v3846 = vunpack.c.l.b16 %v651
        %v3847 = vunpack.c.l.b16 %v652
        %v3848 = vunpack.c.l.b16 %v653
        %v3849 = vunpack.c.l.b16 %v654
        %v3850 = vunpack.c.l.b16 %v655
        %v3851 = vunpack.c.l.b16 %v656
        %v3852 = vunpack.c.l.b16 %v657
        %v3853 = vunpack.c.l.b16 %v658
        %v3854 = vunpack.c.l.b16 %v659
        %v3855 = vunpack.c.l.b16 %v660
        %v3856 = vunpack.c.l.b16 %v661
        %v3857 = vunpack.c.l.b16 %v662
        %v3858 = vunpack.c.l.b16 %v663
        %v3859 = vunpack.c.l.b16 %v664
        %v3860 = vunpack.c.l.b16 %v665
        %v3861 = vunpack.c.l.b16 %v666
        %v3862 = vunpack.c.l.b16 %v667
        %v3863 = vunpack.c.l.b16 %v668
        %v3864 = vunpack.c.l.b16 %v669
        %v3865 = vunpack.c.l.b16 %v670
        %v3866 = vunpack.c.l.b16 %v671
        %v3867 = vunpack.c.l.b16 %v672
        %v3868 = vunpack.c.l.b16 %v673
        %v3869 = vunpack.c.l.b16 %v674
        %v3870 = vunpack.c.l.b16 %v675
        %v3871 = vunpack.c.l.b16 %v676
        %v3872 = vunpack.c.l.b16 %v677
        %v3873 = vunpack.c.l.b16 %v678
        %v3874 = vunpack.c.l.b16 %v679
        %v3875 = vunpack.c.l.b16 %v680
        %v3876 = vunpack.c.l.b16 %v681
        %v3877 = vunpack.c.l.b16 %v682
        %v3878 = vunpack.c.l.b16 %v683
        %v3879 = vunpack.c.l.b16 %v684
        %v3880 = vunpack.c.l.b16 %v685
        %v3881 = vunpack.c.l.b16 %v686
        %v3882 = vunpack.c.l.b16 %v687
        %v3883 = vunpack.c.l.b16 %v688
        %v3884 = vunpack.c.l.b16 %v689
        %v3885 = vunpack.c.l.b16 %v690
        %v3886 = vunpack.c.l.b16 %v691
        %v3887 = vunpack.c.l.b16 %v692
        %v3888 = vunpack.c.l.b16 %v693
        %v3889 = vunpack.c.l.b16 %v694
        %v3890 = vunpack.c.l.b16 %v695
        %v3891 = vunpack.c.l.b16 %v696
        %v3892 = vunpack.c.l.b16 %v697
        %v3893 = vunpack.c.l.b16 %v698
        %v3894 = vunpack.c.l.b16 %v699
        %v3895 = vunpack.c.l.b16 %v700
        %v3896 = vunpack.c.l.b16 %v701
        %v3897 = vunpack.c.l.b16 %v702
        %v3898 = vunpack.c.l.b16 %v703
        %v3899 = vunpack.c.l.b16 %v704
        %v3900 = vunpack.c.l.b16 %v705
        %v3901 = vunpack.c.l.b16 %v706
        %v3902 = vunpack.c.l.b16 %v707
        %v3903 = vunpack.c.l.b16 %v708
        %v3904 = vunpack.c.l.b16 %v709
        %v3905 = vunpack.c.l.b16 %v710
        %v3906 = vunpack.c.l.b16 %v711
        %v3907 = vunpack.c.l.b16 %v712
        %v3908 = vunpack.c.l.b16 %v713
        %v3909 = vunpack.c.l.b16 %v714
        %v3910 = vunpack.c.l.b16 %v715
        %v3911 = vunpack.c.l.b16 %v716
        %v3912 = vunpack.c.l.b16 %v717
        %v3913 = vunpack.c.l.b16 %v718
        %v3914 = vunpack.c.l.b16 %v719
        %v3915 = vunpack.c.l.b16 %v720
        %v3916 = vunpack.c.l.b16 %v721
        %v3917 = vunpack.c.l.b16 %v722
        %v3918 = vunpack.c.l.b16 %v723
        %v3919 = vunpack.c.l.b16 %v724
        %v3920 = vunpack.c.l.b16 %v725
        %v3921 = vunpack.c.l.b16 %v726
        %v3922 = vunpack.c.l.b16 %v727
        %v3923 = vunpack.c.l.b16 %v728
        %v3924 = vunpack.c.l.b16 %v729
        %v3925 = vunpack.c.l.b16 %v730
        %v3926 = vunpack.c.l.b16 %v731
        %v3927 = vunpack.c.l.b16 %v732
        %v3928 = vunpack.c.l.b16 %v733
        %v3929 = vunpack.c.l.b16 %v734
        %v3930 = vunpack.c.l.b16 %v735
        %v3931 = vunpack.c.l.b16 %v736
        %v3932 = vunpack.c.l.b16 %v737
        %v3933 = vunpack.c.l.b16 %v738
        %v3934 = vunpack.c.l.b16 %v739
        %v3935 = vunpack.c.l.b16 %v740
        %v3936 = vunpack.c.l.b16 %v741
        %v3937 = vunpack.c.l.b16 %v742
        %v3938 = vunpack.c.l.b16 %v743
        %v3939 = vunpack.c.l.b16 %v744
        %v3940 = vunpack.c.l.b16 %v745
        %v3941 = vunpack.c.l.b16 %v746
        %v3942 = vunpack.c.l.b16 %v747
        %v3943 = vunpack.c.l.b16 %v748
        %v3944 = vunpack.c.l.b16 %v749
        %v3945 = vunpack.c.l.b16 %v750
        %v3946 = vunpack.c.l.b16 %v751
        %v3947 = vunpack.c.l.b16 %v752
        %v3948 = vunpack.c.l.b16 %v753
        %v3949 = vunpack.c.l.b16 %v754
        %v3950 = vunpack.c.l.b16 %v755
        %v3951 = vunpack.c.l.b16 %v756
        %v3952 = vunpack.c.l.b16 %v757
        %v3953 = vunpack.c.l.b16 %v758
        %v3954 = vunpack.c.l.b16 %v759
        %v3955 = vunpack.c.l.b16 %v760
        %v3956 = vunpack.c.l.b16 %v761
        %v3957 = vunpack.c.l.b16 %v762
        %v3958 = vunpack.c.l.b16 %v763
        %v3959 = vunpack.c.l.b16 %v764
        %v3960 = vunpack.c.l.b16 %v765
        %v3961 = vunpack.c.l.b16 %v766
        %v3962 = vunpack.c.l.b16 %v767
        %v3963 = vunpack.c.l.b16 %v768
        %v3964 = vunpack.c.l.b16 %v769
        %v3965 = vunpack.c.l.b16 %v770
        %v3966 = vunpack.c.l.b16 %v771
        %v3967 = vunpack.c.l.b16 %v772
        %v3968 = vunpack.c.l.b16 %v773
        %v3969 = vunpack.c.l.b16 %v774
        %v3970 = vunpack.c.l.b16 %v775
        %v3971 = vunpack.c.l.b16 %v776
        %v3972 = vunpack.c.l.b16 %v777
        %v3973 = vunpack.c.l.b16 %v778
        %v3974 = vunpack.c.l.b16 %v779
        %v3975 = vunpack.c.l.b16 %v780
        %v3976 = vunpack.c.l.b16 %v781
        %v3977 = vunpack.c.l.b16 %v782
        %v3978 = vunpack.c.l.b16 %v783
        %v3979 = vunpack.c.l.b16 %v784
        %v3980 = vunpack.c.l.b16 %v785
        %v3981 = vunpack.c.l.b16 %v786
        %v3982 = vunpack.c.l.b16 %v787
        %v3983 = vunpack.c.l.b16 %v788
        %v3984 = vunpack.c.l.b16 %v789
        %v3985 = vunpack.c.l.b16 %v790
        %v3986 = vunpack.c.l.b16 %v791
        %v3987 = vunpack.c.l.b16 %v792
        %v3988 = vunpack.c.l.b16 %v793
        %v3989 = vunpack.c.l.b16 %v794
        %v3990 = vunpack.c.l.b16 %v795
        %v3991 = vunpack.c.l.b16 %v796
        %v3992 = vunpack.c.l.b16 %v797
        %v3993 = vunpack.c.l.b16 %v798
        %v3994 = vunpack.c.l.b16 %v799
        %v3995 = vunpack.c.l.b16 %v800
        %v3996 = vunpack.c.l.b16 %v801
        %v3997 = vunpack.c.l.b16 %v802
        %v3998 = vunpack.c.l.b16 %v803
        %v3999 = vunpack.c.l.b16 %v804
        %v4000 = vunpack.c.l.b16 %v805
        %v4001 = vunpack.c.l.b16 %v806
        %v4002 = vunpack.c.l.b16 %v807
        %v4003 = vunpack.c.l.b16 %v808
        %v4004 = vunpack.c.l.b16 %v809
        %v4005 = vunpack.c.l.b16 %v810
        %v4006 = vunpack.c.l.b16 %v811
        %v4007 = vunpack.c.l.b16 %v812
        %v4008 = vunpack.c.l.b16 %v813
        %v4009 = vunpack.c.l.b16 %v814
        %v4010 = vunpack.c.l.b16 %v815
        %v4011 = vunpack.c.l.b16 %v816
        %v4012 = vunpack.c.l.b16 %v817
        %v4013 = vunpack.c.l.b16 %v818
        %v4014 = vunpack.c.l.b16 %v819
        %v4015 = vunpack.c.l.b16 %v820
        %v4016 = vunpack.c.l.b16 %v821
        %v4017 = vunpack.c.l.b16 %v822
        %v4018 = vunpack.c.l.b16 %v823
        %v4019 = vunpack.c.l.b16 %v824
        %v4020 = vunpack.c.l.b16 %v825
        %v4021 = vunpack.c.l.b16 %v826
        %v4022 = vunpack.c.l.b16 %v827
        %v4023 = vunpack.c.l.b16 %v828
        %v4024 = vunpack.c.l.b16 %v829
        %v4025 = vunpack.c.l.b16 %v830
        %v4026 = vunpack.c.l.b16 %v831
        %v4027 = vunpack.c.l.b16 %v832
        %v4028 = vunpack.c.l.b16 %v833
        %v4029 = vunpack.c.l.b16 %v834
        %v4030 = vunpack.c.l.b16 %v835
        %v4031 = vunpack.c.l.b16 %v836
        %v4032 = vunpack.c.l.b16 %v837
        %v4033 = vunpack.c.l.b16 %v838
        %v4034 = vunpack.c.l.b16 %v839
        %v4035 = vunpack.c.l.b16 %v840
        %v4036 = vunpack.c.l.b16 %v841
        %v4037 = vunpack.c.l.b16 %v842
        %v4038 = vunpack.c.l.b16 %v843
        %v4039 = vunpack.c.l.b16 %v844
        %v4040 = vunpack.c.l.b16 %v845
        %v4041 = vunpack.c.l.b16 %v846
        %v4042 = vunpack.c.l.b16 %v847
        %v4043 = vunpack.c.l.b16 %v848
        %v4044 = vunpack.c.l.b16 %v849
        %v4045 = vunpack.c.l.b16 %v850
        %v4046 = vunpack.c.l.b16 %v851
        %v4047 = vunpack.c.l.b16 %v852
        %v4048 = vunpack.c.l.b16 %v853
        %v4049 = vunpack.c.l.b16 %v854
        %v4050 = vunpack.c.l.b16 %v855
        %v4051 = vunpack.c.l.b16 %v856
        %v4052 = vunpack.c.l.b16 %v857
        %v4053 = vunpack.c.l.b16 %v858
        %v4054 = vunpack.c.l.b16 %v859
        %v4055 = vunpack.c.l.b16 %v860
        %v4056 = vunpack.c.l.b16 %v861
        %v4057 = vunpack.c.l.b16 %v862
        %v4058 = vunpack.c.l.b16 %v863
        %v4059 = vunpack.c.l.b16 %v864
        %v4060 = vunpack.c.l.b16 %v865
        %v4061 = vunpack.c.l.b16 %v866
        %v4062 = vunpack.c.l.b16 %v867
        %v4063 = vunpack.c.l.b16 %v868
        %v4064 = vunpack.c.l.b16 %v869
        %v4065 = vunpack.c.l.b16 %v870
        %v4066 = vunpack.c.l.b16 %v871
        %v4067 = vunpack.c.l.b16 %v872
        %v4068 = vunpack.c.l.b16 %v873
        %v4069 = vunpack.c.l.b16 %v874
        %v4070 = vunpack.c.l.b16 %v875
        %v4071 = vunpack.c.l.b16 %v876
        %v4072 = vunpack.c.l.b16 %v877
        %v4073 = vunpack.c.l.b16 %v878
        %v4074 = vunpack.c.l.b16 %v879
        %v4075 = vunpack.c.l.b16 %v880
        %v4076 = vunpack.c.l.b16 %v881
        %v4077 = vunpack.c.l.b16 %v882
        %v4078 = vunpack.c.l.b16 %v883
        %v4079 = vunpack.c.l.b16 %v884
        %v4080 = vunpack.c.l.b16 %v885
        %v4081 = vunpack.c.l.b16 %v886
        %v4082 = vunpack.c.l.b16 %v887
        %v4083 = vunpack.c.l.b16 %v888
        %v4084 = vunpack.c.l.b16 %v889
        %v4085 = vunpack.c.l.b16 %v890
        %v4086 = vunpack.c.l.b16 %v891
        %v4087 = vunpack.c.l.b16 %v892
        %v4088 = vunpack.c.l.b16 %v893
        %v4089 = vunpack.c.l.b16 %v894
        %v4090 = vunpack.c.l.b16 %v895
        %v4091 = vunpack.c.l.b16 %v896
        %v4092 = vunpack.c.l.b16 %v897
        %v4093 = vunpack.c.l.b16 %v898
        %v4094 = vunpack.c.l.b16 %v899
        %v4095 = vunpack.c.l.b16 %v900
        %v4096 = vunpack.c.l.b16 %v901
        %v4097 = vunpack.c.l.b16 %v902
        %v4098 = vunpack.c.l.b16 %v903
        %v4099 = vunpack.c.l.b16 %v904
        %v4100 = vunpack.c.l.b16 %v905
        %v4101 = vunpack.c.l.b16 %v906
        %v4102 = vunpack.c.l.b16 %v907
        %v4103 = vunpack.c.l.b16 %v908
        %v4104 = vunpack.c.l.b16 %v909
        %v4105 = vunpack.c.l.b16 %v910
        %v4106 = vunpack.c.l.b16 %v911
        %v4107 = vunpack.c.l.b16 %v912
        %v4108 = vunpack.c.l.b16 %v913
        %v4109 = vunpack.c.l.b16 %v914
        %v4110 = vunpack.c.l.b16 %v915
        %v4111 = vunpack.c.l.b16 %v916
        %v4112 = vunpack.c.l.b16 %v917
        %v4113 = vunpack.c.l.b16 %v918
        %v4114 = vunpack.c.l.b16 %v919
        %v4115 = vunpack.c.l.b16 %v920
        %v4116 = vunpack.c.l.b16 %v921
        %v4117 = vunpack.c.l.b16 %v922
        %v4118 = vunpack.c.l.b16 %v923
        %v4119 = vunpack.c.l.b16 %v924
        %v4120 = vunpack.c.l.b16 %v925
        %v4121 = vunpack.c.l.b16 %v926
        %v4122 = vunpack.c.l.b16 %v927
        %v4123 = vunpack.c.l.b16 %v928
        %v4124 = vunpack.c.l.b16 %v929
        %v4125 = vunpack.c.l.b16 %v930
        %v4126 = vunpack.c.l.b16 %v931
        %v4127 = vunpack.c.l.b16 %v932
        %v4128 = vunpack.c.l.b16 %v933
        %v4129 = vunpack.c.l.b16 %v934
        %v4130 = vunpack.c.l.b16 %v935
        %v4131 = vunpack.c.l.b16 %v936
        %v4132 = vunpack.c.l.b16 %v937
        %v4133 = vunpack.c.l.b16 %v938
        %v4134 = vunpack.c.l.b16 %v939
        %v4135 = vunpack.c.l.b16 %v940
        %v4136 = vunpack.c.l.b16 %v941
        %v4137 = vunpack.c.l.b16 %v942
        %v4138 = vunpack.c.l.b16 %v943
        %v4139 = vunpack.c.l.b16 %v944
        %v4140 = vunpack.c.l.b16 %v945
        %v4141 = vunpack.c.l.b16 %v946
        %v4142 = vunpack.c.l.b16 %v947
        %v4143 = vunpack.c.l.b16 %v948
        %v4144 = vunpack.c.l.b16 %v949
        %v4145 = vunpack.c.l.b16 %v950
        %v4146 = vunpack.c.l.b16 %v951
        %v4147 = vunpack.c.l.b16 %v952
        %v4148 = vunpack.c.l.b16 %v953
        %v4149 = vunpack.c.l.b16 %v954
        %v4150 = vunpack.c.l.b16 %v955
        %v4151 = vunpack.c.l.b16 %v956
        %v4152 = vunpack.c.l.b16 %v957
        %v4153 = vunpack.c.l.b16 %v958
        %v4154 = vunpack.c.l.b16 %v959
        %v4155 = vunpack.c.l.b16 %v960
        %v4156 = vunpack.c.l.b16 %v961
        %v4157 = vunpack.c.l.b16 %v962
        %v4158 = vunpack.c.l.b16 %v963
        %v4159 = vunpack.c.l.b16 %v964
        %v4160 = vunpack.c.l.b16 %v965
        %v4161 = vunpack.c.l.b16 %v966
        %v4162 = vunpack.c.l.b16 %v967
        %v4163 = vunpack.c.l.b16 %v968
        %v4164 = vunpack.c.l.b16 %v969
        %v4165 = vunpack.c.l.b16 %v970
        %v4166 = vunpack.c.l.b16 %v971
        %v4167 = vunpack.c.l.b16 %v972
        %v4168 = vunpack.c.l.b16 %v973
        %v4169 = vunpack.c.l.b16 %v974
        %v4170 = vunpack.c.l.b16 %v975
        %v4171 = vunpack.c.l.b16 %v976
        %v4172 = vunpack.c.l.b16 %v977
        %v4173 = vunpack.c.l.b16 %v978
        %v4174 = vunpack.c.l.b16 %v979
        %v4175 = vunpack.c.l.b16 %v980
        %v4176 = vunpack.c.l.b16 %v981
        %v4177 = vunpack.c.l.b16 %v982
        %v4178 = vunpack.c.l.b16 %v983
        %v4179 = vunpack.c.l.b16 %v984
        %v4180 = vunpack.c.l.b16 %v985
        %v4181 = vunpack.c.l.b16 %v986
        %v4182 = vunpack.c.l.b16 %v987
        %v4183 = vunpack.c.l.b16 %v988
        %v4184 = vunpack.c.l.b16 %v989
        %v4185 = vunpack.c.l.b16 %v990
        %v4186 = vunpack.c.l.b16 %v991
        %v4187 = vunpack.c.l.b16 %v992
        %v4188 = vunpack.c.l.b16 %v993
        %v4189 = vunpack.c.l.b16 %v994
        %v4190 = vunpack.c.l.b16 %v995
        %v4191 = vunpack.c.l.b16 %v996
        %v4192 = vunpack.c.l.b16 %v997
        %v4193 = vunpack.c.l.b16 %v998
        %v4194 = vunpack.c.l.b16 %v999
        %v4195 = vunpack.c.l.b16 %v1000
        %v4196 = vunpack.c.l.b16 %v1001
        %v4197 = vunpack.c.l.b16 %v1002
        %v4198 = vunpack.c.l.b16 %v1003
        %v4199 = vunpack.c.l.b16 %v1004
        %v4200 = vunpack.c.l.b16 %v1005
        %v4201 = vunpack.c.l.b16 %v1006
        %v4202 = vunpack.c.l.b16 %v1007
        %v4203 = vunpack.c.l.b16 %v1008
        %v4204 = vunpack.c.l.b16 %v1009
        %v4205 = vunpack.c.l.b16 %v1010
        %v4206 = vunpack.c.l.b16 %v1011
        %v4207 = vunpack.c.l.b16 %v1012
        %v4208 = vunpack.c.l.b16 %v1013
        %v4209 = vunpack.c.l.b16 %v1014
        %v4210 = vunpack.c.l.b16 %v1015
        %v4211 = vunpack.c.l.b16 %v1016
        %v4212 = vunpack.c.l.b16 %v1017
        %v4213 = vunpack.c.l.b16 %v1018
        %v4214 = vunpack.c.l.b16 %v1019
        %v4215 = vunpack.c.l.b16 %v1020
        %v4216 = vunpack.c.l.b16 %v1021
        %v4217 = vunpack.c.l.b16 %v1022
        %v4218 = vunpack.c.l.b16 %v1023
        %v4219 = vunpack.c.l.b16 %v1024
        %v4220 = vunpack.c.l.b16 %v1025
        %v4221 = vunpack.c.l.b16 %v1026
        %v4222 = vunpack.c.l.b16 %v1027
        %v4223 = vunpack.c.l.b16 %v1028
        %v4224 = vunpack.c.l.b16 %v1029
        %v4225 = vunpack.c.l.b16 %v1030
        %v4226 = vunpack.c.l.b16 %v1031
        %v4227 = vunpack.c.l.b16 %v1032
        %v4228 = vunpack.c.l.b16 %v1033
        %v4229 = vunpack.c.l.b16 %v1034
        %v4230 = vunpack.c.l.b16 %v1035
        %v4231 = vunpack.c.l.b16 %v1036
        %v4232 = vunpack.c.l.b16 %v1037
        %v4233 = vunpack.c.l.b16 %v1038
        %v4234 = vunpack.c.l.b16 %v1039
        %v4235 = vunpack.c.l.b16 %v1040
        %v4236 = vunpack.c.l.b16 %v1041
        %v4237 = vunpack.c.l.b16 %v1042
        %v4238 = vunpack.c.l.b16 %v1043
        %v4239 = vunpack.c.l.b16 %v1044
        %v4240 = vunpack.c.l.b16 %v1045
        %v4241 = vunpack.c.l.b16 %v1046
        %v4242 = vunpack.c.l.b16 %v1047
        %v4243 = vunpack.c.l.b16 %v1048
        %v4244 = vunpack.c.l.b16 %v1049
        %v4245 = vunpack.c.l.b16 %v1050
        %v4246 = vunpack.c.l.b16 %v1051
        %v4247 = vunpack.c.l.b16 %v1052
        %v4248 = vunpack.c.l.b16 %v1053
        %v4249 = vunpack.c.l.b16 %v1054
        %v4250 = vunpack.c.l.b16 %v1055
        %v4251 = vunpack.c.l.b16 %v1056
        %v4252 = vunpack.c.l.b16 %v1057
        %v4253 = vunpack.c.l.b16 %v1058
        %v4254 = vunpack.c.l.b16 %v1059
        %v4255 = vunpack.c.l.b16 %v1060
        %v4256 = vunpack.c.l.b16 %v1061
        %v4257 = vunpack.c.l.b16 %v1062
        %v4258 = vunpack.c.l.b16 %v1063
        %v4259 = vunpack.c.l.b16 %v1064
        %v4260 = vunpack.c.l.b16 %v1065
        %v4261 = vunpack.c.l.b16 %v1066
        %v4262 = vunpack.c.l.b16 %v1067
        %v4263 = vunpack.c.l.b16 %v1068
        %v4264 = vunpack.c.l.b16 %v1069
        %v4265 = vunpack.c.l.b16 %v1070
        %v4266 = vunpack.c.l.b16 %v1071
        %v4267 = vunpack.c.l.b16 %v1072
        %v4268 = vunpack.c.l.b16 %v1073
        %v4269 = vunpack.c.l.b16 %v1074
        %v4270 = vunpack.c.l.b16 %v1075
        %v4271 = vunpack.c.l.b16 %v1076
        %v4272 = vunpack.c.l.b16 %v1077
        %v4273 = vunpack.c.l.b16 %v1078
        %v4274 = vunpack.c.l.b16 %v1079
        %v4275 = vunpack.c.l.b16 %v1080
        %v4276 = vunpack.c.l.b16 %v1081
        %v4277 = vunpack.c.l.b16 %v1082
        %v4278 = vunpack.c.l.b16 %v1083
        %v4279 = vunpack.c.l.b16 %v1084
        %v4280 = vunpack.c.l.b16 %v1085
        %v4281 = vunpack.c.l.b16 %v1086
        %v4282 = vunpack.c.l.b16 %v1087
        %v4283 = vunpack.c.l.b16 %v1088
        %v4284 = vunpack.c.l.b16 %v1089
        %v4285 = vunpack.c.l.b16 %v1090
        %v4286 = vunpack.c.l.b16 %v1091
        %v4287 = vunpack.c.l.b16 %v1092
        %v4288 = vunpack.c.l.b16 %v1093
        %v4289 = vunpack.c.l.b16 %v1094
        %v4290 = vunpack.c.l.b16 %v1095
        %v4291 = vunpack.c.l.b16 %v1096
        %v4292 = vunpack.c.l.b16 %v1097
        %v4293 = vunpack.c.l.b16 %v1098
        %v4294 = vunpack.c.l.b16 %v1099
        %v4295 = vunpack.c.l.b16 %v1100
        %v4296 = vunpack.c.l.b16 %v1101
        %v4297 = vunpack.c.l.b16 %v1102
        %v4298 = vunpack.c.l.b16 %v1103
        %v4299 = vunpack.c.l.b16 %v1104
        %v4300 = vunpack.c.l.b16 %v1105
        %v4301 = vunpack.c.l.b16 %v1106
        %v4302 = vunpack.c.l.b16 %v1107
        %v4303 = vunpack.c.l.b16 %v1108
        %v4304 = vunpack.c.l.b16 %v1109
        %v4305 = vunpack.c.l.b16 %v1110
        %v4306 = vunpack.c.l.b16 %v1111
        %v4307 = vunpack.c.l.b16 %v1112
        %v4308 = vunpack.c.l.b16 %v1113
        %v4309 = vunpack.c.l.b16 %v1114
        %v4310 = vunpack.c.l.b16 %v1115
        %v4311 = vunpack.c.l.b16 %v1116
        %v4312 = vunpack.c.l.b16 %v1117
        %v4313 = vunpack.c.l.b16 %v1118
        %v4314 = vunpack.c.l.b16 %v1119
        %v4315 = vunpack.c.l.b16 %v1120
        %v4316 = vunpack.c.l.b16 %v1121
        %v4317 = vunpack.c.l.b16 %v1122
        %v4318 = vunpack.c.l.b16 %v1123
        %v4319 = vunpack.c.l.b16 %v1124
        %v4320 = vunpack.c.l.b16 %v1125
        %v4321 = vunpack.c.l.b16 %v1126
        %v4322 = vunpack.c.l.b16 %v1127
        %v4323 = vunpack.c.l.b16 %v1128
        %v4324 = vunpack.c.l.b16 %v1129
        %v4325 = vunpack.c.l.b16 %v1130
        %v4326 = vunpack.c.l.b16 %v1131
        %v4327 = vunpack.c.l.b16 %v1132
        %v4328 = vunpack.c.l.b16 %v1133
        %v4329 = vunpack.c.l.b16 %v1134
        %v4330 = vunpack.c.l.b16 %v1135
        %v4331 = vunpack.c.l.b16 %v1136
        %v4332 = vunpack.c.l.b16 %v1137
        %v4333 = vunpack.c.l.b16 %v1138
        %v4334 = vunpack.c.l.b16 %v1139
        %v4335 = vunpack.c.l.b16 %v1140
        %v4336 = vunpack.c.l.b16 %v1141
        %v4337 = vunpack.c.l.b16 %v1142
        %v4338 = vunpack.c.l.b16 %v1143
        %v4339 = vunpack.c.l.b16 %v1144
        %v4340 = vunpack.c.l.b16 %v1145
        %v4341 = vunpack.c.l.b16 %v1146
        %v4342 = vunpack.c.l.b16 %v1147
        %v4343 = vunpack.c.l.b16 %v1148
        %v4344 = vunpack.c.l.b16 %v1149
        %v4345 = vunpack.c.l.b16 %v1150
        %v4346 = vunpack.c.l.b16 %v1151
        %v4347 = vunpack.c.l.b16 %v1152
        %v4348 = vunpack.c.l.b16 %v1153
        %v4349 = vunpack.c.l.b16 %v1154
        %v4350 = vunpack.c.l.b16 %v1155
        %v4351 = vunpack.c.l.b16 %v1156
        %v4352 = vunpack.c.l.b16 %v1157
        %v4353 = vunpack.c.l.b16 %v1158
        %v4354 = vunpack.c.l.b16 %v1159
        %v4355 = vunpack.c.l.b16 %v1160
        %v4356 = vunpack.c.l.b16 %v1161
        %v4357 = vunpack.c.l.b16 %v1162
        %v4358 = vunpack.c.l.b16 %v1163
        %v4359 = vunpack.c.l.b16 %v1164
        %v4360 = vunpack.c.l.b16 %v1165
        %v4361 = vunpack.c.l.b16 %v1166
        %v4362 = vunpack.c.l.b16 %v1167
        %v4363 = vunpack.c.l.b16 %v1168
        %v4364 = vunpack.c.l.b16 %v1169
        %v4365 = vunpack.c.l.b16 %v1170
        %v4366 = vunpack.c.l.b16 %v1171
        %v4367 = vunpack.c.l.b16 %v1172
        %v4368 = vunpack.c.l.b16 %v1173
        %v4369 = vunpack.c.l.b16 %v1174
        %v4370 = vunpack.c.l.b16 %v1175
        %v4371 = vunpack.c.l.b16 %v1176
        %v4372 = vunpack.c.l.b16 %v1177
        %v4373 = vunpack.c.l.b16 %v1178
        %v4374 = vunpack.c.l.b16 %v1179
        %v4375 = vunpack.c.l.b16 %v1180
        %v4376 = vunpack.c.l.b16 %v1181
        %v4377 = vunpack.c.l.b16 %v1182
        %v4378 = vunpack.c.l.b16 %v1183
        %v4379 = vunpack.c.l.b16 %v1184
        %v4380 = vunpack.c.l.b16 %v1185
        %v4381 = vunpack.c.l.b16 %v1186
        %v4382 = vunpack.c.l.b16 %v1187
        %v4383 = vunpack.c.l.b16 %v1188
        %v4384 = vunpack.c.l.b16 %v1189
        %v4385 = vunpack.c.l.b16 %v1190
        %v4386 = vunpack.c.l.b16 %v1191
        %v4387 = vunpack.c.l.b16 %v1192
        %v4388 = vunpack.c.l.b16 %v1193
        %v4389 = vunpack.c.l.b16 %v1194
        %v4390 = vunpack.c.l.b16 %v1195
        %v4391 = vunpack.c.l.b16 %v1196
        %v4392 = vunpack.c.l.b16 %v1197
        %v4393 = vunpack.c.l.b16 %v1198
        %v4394 = vunpack.c.l.b16 %v1199
        %v4395 = vunpack.c.l.b16 %v1200
        %v4396 = vunpack.c.l.b16 %v1201
        %v4397 = vunpack.c.l.b16 %v1202
        %v4398 = vunpack.c.l.b16 %v1203
        %v4399 = vunpack.c.l.b16 %v1204
        %v4400 = vunpack.c.l.b16 %v1205
        %v4401 = vunpack.c.l.b16 %v1206
        %v4402 = vunpack.c.l.b16 %v1207
        %v4403 = vunpack.c.l.b16 %v1208
        %v4404 = vunpack.c.l.b16 %v1209
        %v4405 = vunpack.c.l.b16 %v1210
        %v4406 = vunpack.c.l.b16 %v1211
        %v4407 = vunpack.c.l.b16 %v1212
        %v4408 = vunpack.c.l.b16 %v1213
        %v4409 = vunpack.c.l.b16 %v1214
        %v4410 = vunpack.c.l.b16 %v1215
        %v4411 = vunpack.c.l.b16 %v1216
        %v4412 = vunpack.c.l.b16 %v1217
        %v4413 = vunpack.c.l.b16 %v1218
        %v4414 = vunpack.c.l.b16 %v1219
        %v4415 = vunpack.c.l.b16 %v1220
        %v4416 = vunpack.c.l.b16 %v1221
        %v4417 = vunpack.c.l.b16 %v1222
        %v4418 = vunpack.c.l.b16 %v1223
        %v4419 = vunpack.c.l.b16 %v1224
        %v4420 = vunpack.c.l.b16 %v1225
        %v4421 = vunpack.c.l.b16 %v1226
        %v4422 = vunpack.c.l.b16 %v1227
        %v4423 = vunpack.c.l.b16 %v1228
        %v4424 = vunpack.c.l.b16 %v1229
        %v4425 = vunpack.c.l.b16 %v1230
        %v4426 = vunpack.c.l.b16 %v1231
        %v4427 = vunpack.c.l.b16 %v1232
        %v4428 = vunpack.c.l.b16 %v1233
        %v4429 = vunpack.c.l.b16 %v1234
        %v4430 = vunpack.c.l.b16 %v1235
        %v4431 = vunpack.c.l.b16 %v1236
        %v4432 = vunpack.c.l.b16 %v1237
        %v4433 = vunpack.c.l.b16 %v1238
        %v4434 = vunpack.c.l.b16 %v1239
        %v4435 = vunpack.c.l.b16 %v1240
        %v4436 = vunpack.c.l.b16 %v1241
        %v4437 = vunpack.c.l.b16 %v1242
        %v4438 = vunpack.c.l.b16 %v1243
        %v4439 = vunpack.c.l.b16 %v1244
        %v4440 = vunpack.c.l.b16 %v1245
        %v4441 = vunpack.c.l.b16 %v1246
        %v4442 = vunpack.c.l.b16 %v1247
        %v4443 = vunpack.c.l.b16 %v1248
        %v4444 = vunpack.c.l.b16 %v1249
        %v4445 = vunpack.c.l.b16 %v1250
        %v4446 = vunpack.c.l.b16 %v1251
        %v4447 = vunpack.c.l.b16 %v1252
        %v4448 = vunpack.c.l.b16 %v1253
        %v4449 = vunpack.c.l.b16 %v1254
        %v4450 = vunpack.c.l.b16 %v1255
        %v4451 = vunpack.c.l.b16 %v1256
        %v4452 = vunpack.c.l.b16 %v1257
        %v4453 = vunpack.c.l.b16 %v1258
        %v4454 = vunpack.c.l.b16 %v1259
        %v4455 = vunpack.c.l.b16 %v1260
        %v4456 = vunpack.c.l.b16 %v1261
        %v4457 = vunpack.c.l.b16 %v1262
        %v4458 = vunpack.c.l.b16 %v1263
        %v4459 = vunpack.c.l.b16 %v1264
        %v4460 = vunpack.c.l.b16 %v1265
        %v4461 = vunpack.c.l.b16 %v1266
        %v4462 = vunpack.c.l.b16 %v1267
        %v4463 = vunpack.c.l.b16 %v1268
        %v4464 = vunpack.c.l.b16 %v1269
        %v4465 = vunpack.c.l.b16 %v1270
        %v4466 = vunpack.c.l.b16 %v1271
        %v4467 = vunpack.c.l.b16 %v1272
        %v4468 = vunpack.c.l.b16 %v1273
        %v4469 = vunpack.c.l.b16 %v1274
        %v4470 = vunpack.c.l.b16 %v1275
        %v4471 = vunpack.c.l.b16 %v1276
        %v4472 = vunpack.c.l.b16 %v1277
        %v4473 = vunpack.c.l.b16 %v1278
        %v4474 = vunpack.c.l.b16 %v1279
        %v4475 = vunpack.c.l.b16 %v1280
        %v4476 = vunpack.c.l.b16 %v1281
        %v4477 = vunpack.c.l.b16 %v1282
        %v4478 = vunpack.c.l.b16 %v1283
        %v4479 = vunpack.c.l.b16 %v1284
        %v4480 = vunpack.c.l.b16 %v1285
        %v4481 = vunpack.c.l.b16 %v1286
        %v4482 = vunpack.c.l.b16 %v1287
        %v4483 = vunpack.c.l.b16 %v1288
        %v4484 = vunpack.c.l.b16 %v1289
        %v4485 = vunpack.c.l.b16 %v1290
        %v4486 = vunpack.c.l.b16 %v1291
        %v4487 = vunpack.c.l.b16 %v1292
        %v4488 = vunpack.c.l.b16 %v1293
        %v4489 = vunpack.c.l.b16 %v1294
        %v4490 = vunpack.c.l.b16 %v1295
        %v4491 = vunpack.c.l.b16 %v1296
        %v4492 = vunpack.c.l.b16 %v1297
        %v4493 = vunpack.c.l.b16 %v1298
        %v4494 = vunpack.c.l.b16 %v1299
        %v4495 = vunpack.c.l.b16 %v1300
        %v4496 = vunpack.c.l.b16 %v1301
        %v4497 = vunpack.c.l.b16 %v1302
        %v4498 = vunpack.c.l.b16 %v1303
        %v4499 = vunpack.c.l.b16 %v1304
        %v4500 = vunpack.c.l.b16 %v1305
        %v4501 = vunpack.c.l.b16 %v1306
        %v4502 = vunpack.c.l.b16 %v1307
        %v4503 = vunpack.c.l.b16 %v1308
        %v4504 = vunpack.c.l.b16 %v1309
        %v4505 = vunpack.c.l.b16 %v1310
        %v4506 = vunpack.c.l.b16 %v1311
        %v4507 = vunpack.c.l.b16 %v1312
        %v4508 = vunpack.c.l.b16 %v1313
        %v4509 = vunpack.c.l.b16 %v1314
        %v4510 = vunpack.c.l.b16 %v1315
        %v4511 = vunpack.c.l.b16 %v1316
        %v4512 = vunpack.c.l.b16 %v1317
        %v4513 = vunpack.c.l.b16 %v1318
        %v4514 = vunpack.c.l.b16 %v1319
        %v4515 = vunpack.c.l.b16 %v1320
        %v4516 = vunpack.c.l.b16 %v1321
        %v4517 = vunpack.c.l.b16 %v1322
        %v4518 = vunpack.c.l.b16 %v1323
        %v4519 = vunpack.c.l.b16 %v1324
        %v4520 = vunpack.c.l.b16 %v1325
        %v4521 = vunpack.c.l.b16 %v1326
        %v4522 = vunpack.c.l.b16 %v1327
        %v4523 = vunpack.c.l.b16 %v1328
        %v4524 = vunpack.c.l.b16 %v1329
        %v4525 = vunpack.c.l.b16 %v1330
        %v4526 = vunpack.c.l.b16 %v1331
        %v4527 = vunpack.c.l.b16 %v1332
        %v4528 = vunpack.c.l.b16 %v1333
        %v4529 = vunpack.c.l.b16 %v1334
        %v4530 = vunpack.c.l.b16 %v1335
        %v4531 = vunpack.c.l.b16 %v1336
        %v4532 = vunpack.c.l.b16 %v1337
        %v4533 = vunpack.c.l.b16 %v1338
        %v4534 = vunpack.c.l.b16 %v1339
        %v4535 = vunpack.c.l.b16 %v1340
        %v4536 = vunpack.c.l.b16 %v1341
        %v4537 = vunpack.c.l.b16 %v1342
        %v4538 = vunpack.c.l.b16 %v1343
        %v4539 = vunpack.c.l.b16 %v1344
        %v4540 = vunpack.c.l.b16 %v1345
        %v4541 = vunpack.c.l.b16 %v1346
        %v4542 = vunpack.c.l.b16 %v1347
        %v4543 = vunpack.c.l.b16 %v1348
        %v4544 = vunpack.c.l.b16 %v1349
        %v4545 = vunpack.c.l.b16 %v1350
        %v4546 = vunpack.c.l.b16 %v1351
        %v4547 = vunpack.c.l.b16 %v1352
        %v4548 = vunpack.c.l.b16 %v1353
        %v4549 = vunpack.c.l.b16 %v1354
        %v4550 = vunpack.c.l.b16 %v1355
        %v4551 = vunpack.c.l.b16 %v1356
        %v4552 = vunpack.c.l.b16 %v1357
        %v4553 = vunpack.c.l.b16 %v1358
        %v4554 = vunpack.c.l.b16 %v1359
        %v4555 = vunpack.c.l.b16 %v1360
        %v4556 = vunpack.c.l.b16 %v1361
        %v4557 = vunpack.c.l.b16 %v1362
        %v4558 = vunpack.c.l.b16 %v1363
        %v4559 = vunpack.c.l.b16 %v1364
        %v4560 = vunpack.c.l.b16 %v1365
        %v4561 = vunpack.c.l.b16 %v1366
        %v4562 = vunpack.c.l.b16 %v1367
        %v4563 = vunpack.c.l.b16 %v1368
        %v4564 = vunpack.c.l.b16 %v1369
        %v4565 = vunpack.c.l.b16 %v1370
        %v4566 = vunpack.c.l.b16 %v1371
        %v4567 = vunpack.c.l.b16 %v1372
        %v4568 = vunpack.c.l.b16 %v1373
        %v4569 = vunpack.c.l.b16 %v1374
        %v4570 = vunpack.c.l.b16 %v1375
        %v4571 = vunpack.c.l.b16 %v1376
        %v4572 = vunpack.c.l.b16 %v1377
        %v4573 = vunpack.c.l.b16 %v1378
        %v4574 = vunpack.c.l.b16 %v1379
        %v4575 = vunpack.c.l.b16 %v1380
        %v4576 = vunpack.c.l.b16 %v1381
        %v4577 = vunpack.c.l.b16 %v1382
        %v4578 = vunpack.c.l.b16 %v1383
        %v4579 = vunpack.c.l.b16 %v1384
        %v4580 = vunpack.c.l.b16 %v1385
        %v4581 = vunpack.c.l.b16 %v1386
        %v4582 = vunpack.c.l.b16 %v1387
        %v4583 = vunpack.c.l.b16 %v1388
        %v4584 = vunpack.c.l.b16 %v1389
        %v4585 = vunpack.c.l.b16 %v1390
        %v4586 = vunpack.c.l.b16 %v1391
        %v4587 = vunpack.c.l.b16 %v1392
        %v4588 = vunpack.c.l.b16 %v1393
        %v4589 = vunpack.c.l.b16 %v1394
        %v4590 = vunpack.c.l.b16 %v1395
        %v4591 = vunpack.c.l.b16 %v1396
        %v4592 = vunpack.c.l.b16 %v1397
        %v4593 = vunpack.c.l.b16 %v1398
        %v4594 = vunpack.c.l.b16 %v1399
        %v4595 = vunpack.c.l.b16 %v1400
        %v4596 = vunpack.c.l.b16 %v1401
        %v4597 = vunpack.c.l.b16 %v1402
        %v4598 = vunpack.c.l.b16 %v1403
        %v4599 = vunpack.c.l.b16 %v1404
        %v4600 = vunpack.c.l.b16 %v1405
        %v4601 = vunpack.c.l.b16 %v1406
        %v4602 = vunpack.c.l.b16 %v1407
        %v4603 = vunpack.c.l.b16 %v1408
        %v4604 = vunpack.c.l.b16 %v1409
        %v4605 = vunpack.c.l.b16 %v1410
        %v4606 = vunpack.c.l.b16 %v1411
        %v4607 = vunpack.c.l.b16 %v1412
        %v4608 = vunpack.c.l.b16 %v1413
        %v4609 = vunpack.c.l.b16 %v1414
        %v4610 = vunpack.c.l.b16 %v1415
        %v4611 = vunpack.c.l.b16 %v1416
        %v4612 = vunpack.c.l.b16 %v1417
        %v4613 = vunpack.c.l.b16 %v1418
        %v4614 = vunpack.c.l.b16 %v1419
        %v4615 = vunpack.c.l.b16 %v1420
        %v4616 = vunpack.c.l.b16 %v1421
        %v4617 = vunpack.c.l.b16 %v1422
        %v4618 = vunpack.c.l.b16 %v1423
        %v4619 = vunpack.c.l.b16 %v1424
        %v4620 = vunpack.c.l.b16 %v1425
        %v4621 = vunpack.c.l.b16 %v1426
        %v4622 = vunpack.c.l.b16 %v1427
        %v4623 = vunpack.c.l.b16 %v1428
        %v4624 = vunpack.c.l.b16 %v1429
        %v4625 = vunpack.c.l.b16 %v1430
        %v4626 = vunpack.c.l.b16 %v1431
        %v4627 = vunpack.c.l.b16 %v1432
        %v4628 = vunpack.c.l.b16 %v1433
        %v4629 = vunpack.c.l.b16 %v1434
        %v4630 = vunpack.c.l.b16 %v1435
        %v4631 = vunpack.c.l.b16 %v1436
        %v4632 = vunpack.c.l.b16 %v1437
        %v4633 = vunpack.c.l.b16 %v1438
        %v4634 = vunpack.c.l.b16 %v1439
        %v4635 = vunpack.c.l.b16 %v1440
        %v4636 = vunpack.c.l.b16 %v1441
        %v4637 = vunpack.c.l.b16 %v1442
        %v4638 = vunpack.c.l.b16 %v1443
        %v4639 = vunpack.c.l.b16 %v1444
        %v4640 = vunpack.c.l.b16 %v1445
        %v4641 = vunpack.c.l.b16 %v1446
        %v4642 = vunpack.c.l.b16 %v1447
        %v4643 = vunpack.c.l.b16 %v1448
        %v4644 = vunpack.c.l.b16 %v1449
        %v4645 = vunpack.c.l.b16 %v1450
        %v4646 = vunpack.c.l.b16 %v1451
        %v4647 = vunpack.c.l.b16 %v1452
        %v4648 = vunpack.c.l.b16 %v1453
        %v4649 = vunpack.c.l.b16 %v1454
        %v4650 = vunpack.c.l.b16 %v1455
        %v4651 = vunpack.c.l.b16 %v1456
        %v4652 = vunpack.c.l.b16 %v1457
        %v4653 = vunpack.c.l.b16 %v1458
        %v4654 = vunpack.c.l.b16 %v1459
        %v4655 = vunpack.c.l.b16 %v1460
        %v4656 = vunpack.c.l.b16 %v1461
        %v4657 = vunpack.c.l.b16 %v1462
        %v4658 = vunpack.c.l.b16 %v1463
        %v4659 = vunpack.c.l.b16 %v1464
        %v4660 = vunpack.c.l.b16 %v1465
        %v4661 = vunpack.c.l.b16 %v1466
        %v4662 = vunpack.c.l.b16 %v1467
        %v4663 = vunpack.c.l.b16 %v1468
        %v4664 = vunpack.c.l.b16 %v1469
        %v4665 = vunpack.c.l.b16 %v1470
        %v4666 = vunpack.c.l.b16 %v1471
        %v4667 = vunpack.c.l.b16 %v1472
        %v4668 = vunpack.c.l.b16 %v1473
        %v4669 = vunpack.c.l.b16 %v1474
        %v4670 = vunpack.c.l.b16 %v1475
        %v4671 = vunpack.c.l.b16 %v1476
        %v4672 = vunpack.c.l.b16 %v1477
        %v4673 = vunpack.c.l.b16 %v1478
        %v4674 = vunpack.c.l.b16 %v1479
        %v4675 = vunpack.c.l.b16 %v1480
        %v4676 = vunpack.c.l.b16 %v1481
        %v4677 = vunpack.c.l.b16 %v1482
        %v4678 = vunpack.c.l.b16 %v1483
        %v4679 = vunpack.c.l.b16 %v1484
        %v4680 = vunpack.c.l.b16 %v1485
        %v4681 = vunpack.c.l.b16 %v1486
        %v4682 = vunpack.c.l.b16 %v1487
        %v4683 = vunpack.c.l.b16 %v1488
        %v4684 = vunpack.c.l.b16 %v1489
        %v4685 = vunpack.c.l.b16 %v1490
        %v4686 = vunpack.c.l.b16 %v1491
        %v4687 = vunpack.c.l.b16 %v1492
        %v4688 = vunpack.c.l.b16 %v1493
        %v4689 = vunpack.c.l.b16 %v1494
        %v4690 = vunpack.c.l.b16 %v1495
        %v4691 = vunpack.c.l.b16 %v1496
        %v4692 = vunpack.c.l.b16 %v1497
        %v4693 = vunpack.c.l.b16 %v1498
        %v4694 = vunpack.c.l.b16 %v1499
        %v4695 = vunpack.c.l.b16 %v1500
        %v4696 = vunpack.c.l.b16 %v1501
        %v4697 = vunpack.c.l.b16 %v1502
        %v4698 = vunpack.c.l.b16 %v1503
        %v4699 = vunpack.c.l.b16 %v1504
        %v4700 = vunpack.c.l.b16 %v1505
        %v4701 = vunpack.c.l.b16 %v1506
        %v4702 = vunpack.c.l.b16 %v1507
        %v4703 = vunpack.c.l.b16 %v1508
        %v4704 = vunpack.c.l.b16 %v1509
        %v4705 = vunpack.c.l.b16 %v1510
        %v4706 = vunpack.c.l.b16 %v1511
        %v4707 = vunpack.c.l.b16 %v1512
        %v4708 = vunpack.c.l.b16 %v1513
        %v4709 = vunpack.c.l.b16 %v1514
        %v4710 = vunpack.c.l.b16 %v1515
        %v4711 = vunpack.c.l.b16 %v1516
        %v4712 = vunpack.c.l.b16 %v1517
        %v4713 = vunpack.c.l.b16 %v1518
        %v4714 = vunpack.c.l.b16 %v1519
        %v4715 = vunpack.c.l.b16 %v1520
        %v4716 = vunpack.c.l.b16 %v1521
        %v4717 = vunpack.c.l.b16 %v1522
        %v4718 = vunpack.c.l.b16 %v1523
        %v4719 = vunpack.c.l.b16 %v1524
        %v4720 = vunpack.c.l.b16 %v1525
        %v4721 = vunpack.c.l.b16 %v1526
        %v4722 = vunpack.c.l.b16 %v1527
        %v4723 = vunpack.c.l.b16 %v1528
        %v4724 = vunpack.c.l.b16 %v1529
        %v4725 = vunpack.c.l.b16 %v1530
        %v4726 = vunpack.c.l.b16 %v1531
        %v4727 = vunpack.c.l.b16 %v1532
        %v4728 = vunpack.c.l.b16 %v1533
        %v4729 = vunpack.c.l.b16 %v1534
        %v4730 = vunpack.c.l.b16 %v1535
        %v4731 = vunpack.c.l.b16 %v1536
        %v4732 = vunpack.c.l.b16 %v1537
        %v4733 = vunpack.c.l.b16 %v1538
        %v4734 = vunpack.c.l.b16 %v1539
        %v4735 = vunpack.c.l.b16 %v1540
        %v4736 = vunpack.c.l.b16 %v1541
        %v4737 = vunpack.c.l.b16 %v1542
        %v4738 = vunpack.c.l.b16 %v1543
        %v4739 = vunpack.c.l.b16 %v1544
        %v4740 = vunpack.c.l.b16 %v1545
        %v4741 = vunpack.c.l.b16 %v1546
        %v4742 = vunpack.c.l.b16 %v1547
        %v4743 = vunpack.c.l.b16 %v1548
        %v4744 = vunpack.c.l.b16 %v1549
        %v4745 = vunpack.c.l.b16 %v1550
        %v4746 = vunpack.c.l.b16 %v1551
        %v4747 = vunpack.c.l.b16 %v1552
        %v4748 = vunpack.c.l.b16 %v1553
        %v4749 = vunpack.c.l.b16 %v1554
        %v4750 = vunpack.c.l.b16 %v1555
        %v4751 = vunpack.c.l.b16 %v1556
        %v4752 = vunpack.c.l.b16 %v1557
        %v4753 = vunpack.c.l.b16 %v1558
        %v4754 = vunpack.c.l.b16 %v1559
        %v4755 = vunpack.c.l.b16 %v1560
        %v4756 = vunpack.c.l.b16 %v1561
        %v4757 = vunpack.c.l.b16 %v1562
        %v4758 = vunpack.c.l.b16 %v1563
        %v4759 = vunpack.c.l.b16 %v1564
        %v4760 = vunpack.c.l.b16 %v1565
        %v4761 = vunpack.c.l.b16 %v1566
        %v4762 = vunpack.c.l.b16 %v1567
        %v4763 = vunpack.c.l.b16 %v1568
        %v4764 = vunpack.c.l.b16 %v1569
        %v4765 = vunpack.c.l.b16 %v1570
        %v4766 = vunpack.c.l.b16 %v1571
        %v4767 = vunpack.c.l.b16 %v1572
        %v4768 = vunpack.c.l.b16 %v1573
        %v4769 = vunpack.c.l.b16 %v1574
        %v4770 = vunpack.c.l.b16 %v1575
        %v4771 = vunpack.c.l.b16 %v1576
        %v4772 = vunpack.c.l.b16 %v1577
        %v4773 = vunpack.c.l.b16 %v1578
        %v4774 = vunpack.c.l.b16 %v1579
        %v4775 = vunpack.c.l.b16 %v1580
        %v4776 = vunpack.c.l.b16 %v1581
        %v4777 = vunpack.c.l.b16 %v1582
        %v4778 = vunpack.c.l.b16 %v1583
        %v4779 = vunpack.c.l.b16 %v1584
        %v4780 = vunpack.c.l.b16 %v1585
        %v4781 = vunpack.c.l.b16 %v1586
        %v4782 = vunpack.c.l.b16 %v1587
        %v4783 = vunpack.c.l.b16 %v1588
        %v4784 = vunpack.c.l.b16 %v1589
        %v4785 = vunpack.c.l.b16 %v1590
        %v4786 = vunpack.c.l.b16 %v1591
        %v4787 = vunpack.c.l.b16 %v1592
        %v4788 = vunpack.c.l.b16 %v1593
        %v4789 = vunpack.c.l.b16 %v1594
        %v4790 = vunpack.c.l.b16 %v1595
        %v4791 = vunpack.c.l.b16 %v1596
        %v4792 = vunpack.c.l.b16 %v1597
        %v4793 = vunpack.c.l.b16 %v1598
        %v4794 = vunpack.c.l.b16 %v1599
        %v4795 = vunpack.c.l.b16 %v1600
        %v4796 = vunpack.c.l.b16 %v1601
        %v4797 = vunpack.c.l.b16 %v1602
        %v4798 = vunpack.c.l.b16 %v1603
        %v4799 = vunpack.c.l.b16 %v1604
        %v4800 = vunpack.c.l.b16 %v1605
        %v4801 = vunpack.c.l.b16 %v1606
        %v4802 = vunpack.c.l.b16 %v1607
        %v4803 = vunpack.c.l.b16 %v1608
        %v4804 = vunpack.c.l.b16 %v1609
        %v4805 = vunpack.c.l.b16 %v1610
        %v4806 = vunpack.c.l.b16 %v1611
        %v4807 = vunpack.c.l.b16 %v1612
        %v4808 = vunpack.c.l.b16 %v1613
        %v4809 = vunpack.c.l.b16 %v1614
        %v4810 = vunpack.c.l.b16 %v1615
        %v4811 = vunpack.c.l.b16 %v1616
        %v4812 = vunpack.c.l.b16 %v1617
        %v4813 = vunpack.c.l.b16 %v1618
        %v4814 = vunpack.c.l.b16 %v1619
        %v4815 = vunpack.c.l.b16 %v1620
        %v4816 = vunpack.c.l.b16 %v1621
        %v4817 = vunpack.c.l.b16 %v1622
        %v4818 = vunpack.c.l.b16 %v1623
        %v4819 = vunpack.c.l.b16 %v1624
        %v4820 = vunpack.c.l.b16 %v1625
        %v4821 = vunpack.c.l.b16 %v1626
        %v4822 = vunpack.c.l.b16 %v1627
        %v4823 = vunpack.c.l.b16 %v1628
        %v4824 = vunpack.c.l.b16 %v1629
        %v4825 = vunpack.c.l.b16 %v1630
        %v4826 = vunpack.c.l.b16 %v1631
        %v4827 = vunpack.c.l.b16 %v1632
        %v4828 = vunpack.c.l.b16 %v1633
        %v4829 = vunpack.c.l.b16 %v1634
        %v4830 = vunpack.c.l.b16 %v1635
        %v4831 = vunpack.c.l.b16 %v1636
        %v4832 = vunpack.c.l.b16 %v1637
        %v4833 = vunpack.c.l.b16 %v1638
        %v4834 = vunpack.c.l.b16 %v1639
        %v4835 = vunpack.c.l.b16 %v1640
        %v4836 = vunpack.c.l.b16 %v1641
        %v4837 = vunpack.c.l.b16 %v1642
        %v4838 = vunpack.c.l.b16 %v1643
        %v4839 = vunpack.c.l.b16 %v1644
        %v4840 = vunpack.c.l.b16 %v1645
        %v4841 = vunpack.c.l.b16 %v1646
        %v4842 = vpack.c.b16 %v3403, %v3402
        %v4843 = vpack.c.b16 %v3405, %v3404
        %v4844 = vpack.c.b16 %v3407, %v3406
        %v4845 = vpack.c.b16 %v3409, %v3408
        %v4846 = vpack.c.b16 %v3411, %v3410
        %v4847 = vpack.c.b16 %v3413, %v3412
        %v4848 = vpack.c.b16 %v3415, %v3414
        %v4849 = vpack.c.b16 %v3417, %v3416
        %v4850 = vpack.c.b16 %v3419, %v3418
        %v4851 = vpack.c.b16 %v3421, %v3420
        %v4852 = vpack.c.b16 %v3423, %v3422
        %v4853 = vpack.c.b16 %v3425, %v3424
        %v4854 = vpack.c.b16 %v3427, %v3426
        %v4855 = vpack.c.b16 %v3429, %v3428
        %v4856 = vpack.c.b16 %v3431, %v3430
        %v4857 = vpack.c.b16 %v3433, %v3432
        %v4858 = vpack.c.b16 %v3435, %v3434
        %v4859 = vpack.c.b16 %v3437, %v3436
        %v4860 = vpack.c.b16 %v3439, %v3438
        %v4861 = vpack.c.b16 %v3441, %v3440
        %v4862 = vpack.c.b16 %v3443, %v3442
        %v4863 = vpack.c.b16 %v3445, %v3444
        %v4864 = vpack.c.b16 %v3447, %v3446
        %v4865 = vpack.c.b16 %v3449, %v3448
        %v4866 = vpack.c.b16 %v3451, %v3450
        %v4867 = vpack.c.b16 %v3453, %v3452
        %v4868 = vpack.c.b16 %v3455, %v3454
        %v4869 = vpack.c.b16 %v3457, %v3456
        %v4870 = vpack.c.b16 %v3459, %v3458
        %v4871 = vpack.c.b16 %v3461, %v3460
        %v4872 = vpack.c.b16 %v3463, %v3462
        %v4873 = vpack.c.b16 %v3465, %v3464
        %v4874 = vpack.c.b16 %v3467, %v3466
        %v4875 = vpack.c.b16 %v3469, %v3468
        %v4876 = vpack.c.b16 %v3471, %v3470
        %v4877 = vpack.c.b16 %v3473, %v3472
        %v4878 = vpack.c.b16 %v3475, %v3474
        %v4879 = vpack.c.b16 %v3477, %v3476
        %v4880 = vpack.c.b16 %v3479, %v3478
        %v4881 = vpack.c.b16 %v3481, %v3480
        %v4882 = vpack.c.b16 %v3483, %v3482
        %v4883 = vpack.c.b16 %v3485, %v3484
        %v4884 = vpack.c.b16 %v3487, %v3486
        %v4885 = vpack.c.b16 %v3489, %v3488
        %v4886 = vpack.c.b16 %v3491, %v3490
        %v4887 = vpack.c.b16 %v3493, %v3492
        %v4888 = vpack.c.b16 %v3495, %v3494
        %v4889 = vpack.c.b16 %v3497, %v3496
        %v4890 = vpack.c.b16 %v3499, %v3498
        %v4891 = vpack.c.b16 %v3501, %v3500
        %v4892 = vpack.c.b16 %v3503, %v3502
        %v4893 = vpack.c.b16 %v3505, %v3504
        %v4894 = vpack.c.b16 %v3507, %v3506
        %v4895 = vpack.c.b16 %v3509, %v3508
        %v4896 = vpack.c.b16 %v3511, %v3510
        %v4897 = vpack.c.b16 %v3513, %v3512
        %v4898 = vpack.c.b16 %v3515, %v3514
        %v4899 = vpack.c.b16 %v3517, %v3516
        %v4900 = vpack.c.b16 %v3519, %v3518
        %v4901 = vpack.c.b16 %v3521, %v3520
        %v4902 = vpack.c.b16 %v3523, %v3522
        %v4903 = vpack.c.b16 %v3525, %v3524
        %v4904 = vpack.c.b16 %v3527, %v3526
        %v4905 = vpack.c.b16 %v3529, %v3528
        %v4906 = vpack.c.b16 %v3531, %v3530
        %v4907 = vpack.c.b16 %v3533, %v3532
        %v4908 = vpack.c.b16 %v3535, %v3534
        %v4909 = vpack.c.b16 %v3537, %v3536
        %v4910 = vpack.c.b16 %v3539, %v3538
        %v4911 = vpack.c.b16 %v3541, %v3540
        %v4912 = vpack.c.b16 %v3543, %v3542
        %v4913 = vpack.c.b16 %v3545, %v3544
        %v4914 = vpack.c.b16 %v3547, %v3546
        %v4915 = vpack.c.b16 %v3549, %v3548
        %v4916 = vpack.c.b16 %v3551, %v3550
        %v4917 = vpack.c.b16 %v3553, %v3552
        %v4918 = vpack.c.b16 %v3555, %v3554
        %v4919 = vpack.c.b16 %v3557, %v3556
        %v4920 = vpack.c.b16 %v3559, %v3558
        %v4921 = vpack.c.b16 %v3561, %v3560
        %v4922 = vpack.c.b16 %v3563, %v3562
        %v4923 = vpack.c.b16 %v3565, %v3564
        %v4924 = vpack.c.b16 %v3567, %v3566
        %v4925 = vpack.c.b16 %v3569, %v3568
        %v4926 = vpack.c.b16 %v3571, %v3570
        %v4927 = vpack.c.b16 %v3573, %v3572
        %v4928 = vpack.c.b16 %v3575, %v3574
        %v4929 = vpack.c.b16 %v3577, %v3576
        %v4930 = vpack.c.b16 %v3579, %v3578
        %v4931 = vpack.c.b16 %v3581, %v3580
        %v4932 = vpack.c.b16 %v3583, %v3582
        %v4933 = vpack.c.b16 %v3585, %v3584
        %v4934 = vpack.c.b16 %v3587, %v3586
        %v4935 = vpack.c.b16 %v3589, %v3588
        %v4936 = vpack.c.b16 %v3591, %v3590
        %v4937 = vpack.c.b16 %v3593, %v3592
        %v4938 = vpack.c.b16 %v3595, %v3594
        %v4939 = vpack.c.b16 %v3597, %v3596
        %v4940 = vpack.c.b16 %v3599, %v3598
        %v4941 = vpack.c.b16 %v3601, %v3600
        %v4942 = vpack.c.b16 %v3603, %v3602
        %v4943 = vpack.c.b16 %v3605, %v3604
        %v4944 = vpack.c.b16 %v3607, %v3606
        %v4945 = vpack.c.b16 %v3609, %v3608
        %v4946 = vpack.c.b16 %v3611, %v3610
        %v4947 = vpack.c.b16 %v3613, %v3612
        %v4948 = vpack.c.b16 %v3615, %v3614
        %v4949 = vpack.c.b16 %v3617, %v3616
        %v4950 = vpack.c.b16 %v3619, %v3618
        %v4951 = vpack.c.b16 %v3621, %v3620
        %v4952 = vpack.c.b16 %v3623, %v3622
        %v4953 = vpack.c.b16 %v3625, %v3624
        %v4954 = vpack.c.b16 %v3627, %v3626
        %v4955 = vpack.c.b16 %v3629, %v3628
        %v4956 = vpack.c.b16 %v3631, %v3630
        %v4957 = vpack.c.b16 %v3633, %v3632
        %v4958 = vpack.c.b16 %v3635, %v3634
        %v4959 = vpack.c.b16 %v3637, %v3636
        %v4960 = vpack.c.b16 %v3639, %v3638
        %v4961 = vpack.c.b16 %v3641, %v3640
        %v4962 = vpack.c.b16 %v3643, %v3642
        %v4963 = vpack.c.b16 %v3645, %v3644
        %v4964 = vpack.c.b16 %v3647, %v3646
        %v4965 = vpack.c.b16 %v3649, %v3648
        %v4966 = vpack.c.b16 %v3651, %v3650
        %v4967 = vpack.c.b16 %v3653, %v3652
        %v4968 = vpack.c.b16 %v3655, %v3654
        %v4969 = vpack.c.b16 %v3657, %v3656
        %v4970 = vpack.c.b16 %v3659, %v3658
        %v4971 = vpack.c.b16 %v3661, %v3660
        %v4972 = vpack.c.b16 %v3663, %v3662
        %v4973 = vpack.c.b16 %v3665, %v3664
        %v4974 = vpack.c.b16 %v3667, %v3666
        %v4975 = vpack.c.b16 %v3669, %v3668
        %v4976 = vpack.c.b16 %v3671, %v3670
        %v4977 = vpack.c.b16 %v3673, %v3672
        %v4978 = vpack.c.b16 %v3675, %v3674
        %v4979 = vpack.c.b16 %v3677, %v3676
        %v4980 = vpack.c.b16 %v3679, %v3678
        %v4981 = vpack.c.b16 %v3681, %v3680
        %v4982 = vpack.c.b16 %v3683, %v3682
        %v4983 = vpack.c.b16 %v3685, %v3684
        %v4984 = vpack.c.b16 %v3687, %v3686
        %v4985 = vpack.c.b16 %v3689, %v3688
        %v4986 = vpack.c.b16 %v3691, %v3690
        %v4987 = vpack.c.b16 %v3693, %v3692
        %v4988 = vpack.c.b16 %v3695, %v3694
        %v4989 = vpack.c.b16 %v3697, %v3696
        %v4990 = vpack.c.b16 %v3699, %v3698
        %v4991 = vpack.c.b16 %v3701, %v3700
        %v4992 = vpack.c.b16 %v3703, %v3702
        %v4993 = vpack.c.b16 %v3705, %v3704
        %v4994 = vpack.c.b16 %v3707, %v3706
        %v4995 = vpack.c.b16 %v3709, %v3708
        %v4996 = vpack.c.b16 %v3711, %v3710
        %v4997 = vpack.c.b16 %v3713, %v3712
        %v4998 = vpack.c.b16 %v3715, %v3714
        %v4999 = vpack.c.b16 %v3717, %v3716
        %v5000 = vpack.c.b16 %v3719, %v3718
        %v5001 = vpack.c.b16 %v3721, %v3720
        %v5002 = vpack.c.b16 %v3723, %v3722
        %v5003 = vpack.c.b16 %v3725, %v3724
        %v5004 = vpack.c.b16 %v3727, %v3726
        %v5005 = vpack.c.b16 %v3729, %v3728
        %v5006 = vpack.c.b16 %v3731, %v3730
        %v5007 = vpack.c.b16 %v3733, %v3732
        %v5008 = vpack.c.b16 %v3735, %v3734
        %v5009 = vpack.c.b16 %v3737, %v3736
        %v5010 = vpack.c.b16 %v3739, %v3738
        %v5011 = vpack.c.b16 %v3741, %v3740
        %v5012 = vpack.c.b16 %v3743, %v3742
        %v5013 = vpack.c.b16 %v3745, %v3744
        %v5014 = vpack.c.b16 %v3747, %v3746
        %v5015 = vpack.c.b16 %v3749, %v3748
        %v5016 = vpack.c.b16 %v3751, %v3750
        %v5017 = vpack.c.b16 %v3753, %v3752
        %v5018 = vpack.c.b16 %v3755, %v3754
        %v5019 = vpack.c.b16 %v3757, %v3756
        %v5020 = vpack.c.b16 %v3759, %v3758
        %v5021 = vpack.c.b16 %v3761, %v3760
        %v5022 = vpack.c.b16 %v3763, %v3762
        %v5023 = vpack.c.b16 %v3765, %v3764
        %v5024 = vpack.c.b16 %v3767, %v3766
        %v5025 = vpack.c.b16 %v3769, %v3768
        %v5026 = vpack.c.b16 %v3771, %v3770
        %v5027 = vpack.c.b16 %v3773, %v3772
        %v5028 = vpack.c.b16 %v3775, %v3774
        %v5029 = vpack.c.b16 %v3777, %v3776
        %v5030 = vpack.c.b16 %v3779, %v3778
        %v5031 = vpack.c.b16 %v3781, %v3780
        %v5032 = vpack.c.b16 %v3783, %v3782
        %v5033 = vpack.c.b16 %v3785, %v3784
        %v5034 = vpack.c.b16 %v3787, %v3786
        %v5035 = vpack.c.b16 %v3789, %v3788
        %v5036 = vpack.c.b16 %v3791, %v3790
        %v5037 = vpack.c.b16 %v3793, %v3792
        %v5038 = vpack.c.b16 %v3795, %v3794
        %v5039 = vpack.c.b16 %v3797, %v3796
        %v5040 = vpack.c.b16 %v3799, %v3798
        %v5041 = vpack.c.b16 %v3801, %v3800
        %v5042 = vpack.c.b16 %v3803, %v3802
        %v5043 = vpack.c.b16 %v3805, %v3804
        %v5044 = vpack.c.b16 %v3807, %v3806
        %v5045 = vpack.c.b16 %v3809, %v3808
        %v5046 = vpack.c.b16 %v3811, %v3810
        %v5047 = vpack.c.b16 %v3813, %v3812
        %v5048 = vpack.c.b16 %v3815, %v3814
        %v5049 = vpack.c.b16 %v3817, %v3816
        %v5050 = vpack.c.b16 %v3819, %v3818
        %v5051 = vpack.c.b16 %v3821, %v3820
        %v5052 = vpack.c.b16 %v3823, %v3822
        %v5053 = vpack.c.b16 %v3825, %v3824
        %v5054 = vpack.c.b16 %v3827, %v3826
        %v5055 = vpack.c.b16 %v3829, %v3828
        %v5056 = vpack.c.b16 %v3831, %v3830
        %v5057 = vpack.c.b16 %v3833, %v3832
        %v5058 = vpack.c.b16 %v3835, %v3834
        %v5059 = vpack.c.b16 %v3837, %v3836
        %v5060 = vpack.c.b16 %v3839, %v3838
        %v5061 = vpack.c.b16 %v3841, %v3840
        %v5062 = vpack.c.b16 %v3843, %v3842
        %v5063 = vpack.c.b16 %v3845, %v3844
        %v5064 = vpack.c.b16 %v3847, %v3846
        %v5065 = vpack.c.b16 %v3849, %v3848
        %v5066 = vpack.c.b16 %v3851, %v3850
        %v5067 = vpack.c.b16 %v3853, %v3852
        %v5068 = vpack.c.b16 %v3855, %v3854
        %v5069 = vpack.c.b16 %v3857, %v3856
        %v5070 = vpack.c.b16 %v3859, %v3858
        %v5071 = vpack.c.b16 %v3861, %v3860
        %v5072 = vpack.c.b16 %v3863, %v3862
        %v5073 = vpack.c.b16 %v3865, %v3864
        %v5074 = vpack.c.b16 %v3867, %v3866
        %v5075 = vpack.c.b16 %v3869, %v3868
        %v5076 = vpack.c.b16 %v3871, %v3870
        %v5077 = vpack.c.b16 %v3873, %v3872
        %v5078 = vpack.c.b16 %v3875, %v3874
        %v5079 = vpack.c.b16 %v3877, %v3876
        %v5080 = vpack.c.b16 %v3879, %v3878
        %v5081 = vpack.c.b16 %v3881, %v3880
        %v5082 = vpack.c.b16 %v3883, %v3882
        %v5083 = vpack.c.b16 %v3885, %v3884
        %v5084 = vpack.c.b16 %v3887, %v3886
        %v5085 = vpack.c.b16 %v3889, %v3888
        %v5086 = vpack.c.b16 %v3891, %v3890
        %v5087 = vpack.c.b16 %v3893, %v3892
        %v5088 = vpack.c.b16 %v3895, %v3894
        %v5089 = vpack.c.b16 %v3897, %v3896
        %v5090 = vpack.c.b16 %v3899, %v3898
        %v5091 = vpack.c.b16 %v3901, %v3900
        %v5092 = vpack.c.b16 %v3903, %v3902
        %v5093 = vpack.c.b16 %v3905, %v3904
        %v5094 = vpack.c.b16 %v3907, %v3906
        %v5095 = vpack.c.b16 %v3909, %v3908
        %v5096 = vpack.c.b16 %v3911, %v3910
        %v5097 = vpack.c.b16 %v3913, %v3912
        %v5098 = vpack.c.b16 %v3915, %v3914
        %v5099 = vpack.c.b16 %v3917, %v3916
        %v5100 = vpack.c.b16 %v3919, %v3918
        %v5101 = vpack.c.b16 %v3921, %v3920
        %v5102 = vpack.c.b16 %v3923, %v3922
        %v5103 = vpack.c.b16 %v3925, %v3924
        %v5104 = vpack.c.b16 %v3927, %v3926
        %v5105 = vpack.c.b16 %v3929, %v3928
        %v5106 = vpack.c.b16 %v3931, %v3930
        %v5107 = vpack.c.b16 %v3933, %v3932
        %v5108 = vpack.c.b16 %v3935, %v3934
        %v5109 = vpack.c.b16 %v3937, %v3936
        %v5110 = vpack.c.b16 %v3939, %v3938
        %v5111 = vpack.c.b16 %v3941, %v3940
        %v5112 = vpack.c.b16 %v3943, %v3942
        %v5113 = vpack.c.b16 %v3945, %v3944
        %v5114 = vpack.c.b16 %v3947, %v3946
        %v5115 = vpack.c.b16 %v3949, %v3948
        %v5116 = vpack.c.b16 %v3951, %v3950
        %v5117 = vpack.c.b16 %v3953, %v3952
        %v5118 = vpack.c.b16 %v3955, %v3954
        %v5119 = vpack.c.b16 %v3957, %v3956
        %v5120 = vpack.c.b16 %v3959, %v3958
        %v5121 = vpack.c.b16 %v3961, %v3960
        %v5122 = vpack.c.b16 %v3963, %v3962
        %v5123 = vpack.c.b16 %v3965, %v3964
        %v5124 = vpack.c.b16 %v3967, %v3966
        %v5125 = vpack.c.b16 %v3969, %v3968
        %v5126 = vpack.c.b16 %v3971, %v3970
        %v5127 = vpack.c.b16 %v3973, %v3972
        %v5128 = vpack.c.b16 %v3975, %v3974
        %v5129 = vpack.c.b16 %v3977, %v3976
        %v5130 = vpack.c.b16 %v3979, %v3978
        %v5131 = vpack.c.b16 %v3981, %v3980
        %v5132 = vpack.c.b16 %v3983, %v3982
        %v5133 = vpack.c.b16 %v3985, %v3984
        %v5134 = vpack.c.b16 %v3987, %v3986
        %v5135 = vpack.c.b16 %v3989, %v3988
        %v5136 = vpack.c.b16 %v3991, %v3990
        %v5137 = vpack.c.b16 %v3993, %v3992
        %v5138 = vpack.c.b16 %v3995, %v3994
        %v5139 = vpack.c.b16 %v3997, %v3996
        %v5140 = vpack.c.b16 %v3999, %v3998
        %v5141 = vpack.c.b16 %v4001, %v4000
        %v5142 = vpack.c.b16 %v4003, %v4002
        %v5143 = vpack.c.b16 %v4005, %v4004
        %v5144 = vpack.c.b16 %v4007, %v4006
        %v5145 = vpack.c.b16 %v4009, %v4008
        %v5146 = vpack.c.b16 %v4011, %v4010
        %v5147 = vpack.c.b16 %v4013, %v4012
        %v5148 = vpack.c.b16 %v4015, %v4014
        %v5149 = vpack.c.b16 %v4017, %v4016
        %v5150 = vpack.c.b16 %v4019, %v4018
        %v5151 = vpack.c.b16 %v4021, %v4020
        %v5152 = vpack.c.b16 %v4023, %v4022
        %v5153 = vpack.c.b16 %v4025, %v4024
        %v5154 = vpack.c.b16 %v4027, %v4026
        %v5155 = vpack.c.b16 %v4029, %v4028
        %v5156 = vpack.c.b16 %v4031, %v4030
        %v5157 = vpack.c.b16 %v4033, %v4032
        %v5158 = vpack.c.b16 %v4035, %v4034
        %v5159 = vpack.c.b16 %v4037, %v4036
        %v5160 = vpack.c.b16 %v4039, %v4038
        %v5161 = vpack.c.b16 %v4041, %v4040
        %v5162 = vpack.c.b16 %v4043, %v4042
        %v5163 = vpack.c.b16 %v4045, %v4044
        %v5164 = vpack.c.b16 %v4047, %v4046
        %v5165 = vpack.c.b16 %v4049, %v4048
        %v5166 = vpack.c.b16 %v4051, %v4050
        %v5167 = vpack.c.b16 %v4053, %v4052
        %v5168 = vpack.c.b16 %v4055, %v4054
        %v5169 = vpack.c.b16 %v4057, %v4056
        %v5170 = vpack.c.b16 %v4059, %v4058
        %v5171 = vpack.c.b16 %v4061, %v4060
        %v5172 = vpack.c.b16 %v4063, %v4062
        %v5173 = vpack.c.b16 %v4065, %v4064
        %v5174 = vpack.c.b16 %v4067, %v4066
        %v5175 = vpack.c.b16 %v4069, %v4068
        %v5176 = vpack.c.b16 %v4071, %v4070
        %v5177 = vpack.c.b16 %v4073, %v4072
        %v5178 = vpack.c.b16 %v4075, %v4074
        %v5179 = vpack.c.b16 %v4077, %v4076
        %v5180 = vpack.c.b16 %v4079, %v4078
        %v5181 = vpack.c.b16 %v4081, %v4080
        %v5182 = vpack.c.b16 %v4083, %v4082
        %v5183 = vpack.c.b16 %v4085, %v4084
        %v5184 = vpack.c.b16 %v4087, %v4086
        %v5185 = vpack.c.b16 %v4089, %v4088
        %v5186 = vpack.c.b16 %v4091, %v4090
        %v5187 = vpack.c.b16 %v4093, %v4092
        %v5188 = vpack.c.b16 %v4095, %v4094
        %v5189 = vpack.c.b16 %v4097, %v4096
        %v5190 = vpack.c.b16 %v4099, %v4098
        %v5191 = vpack.c.b16 %v4101, %v4100
        %v5192 = vpack.c.b16 %v4103, %v4102
        %v5193 = vpack.c.b16 %v4105, %v4104
        %v5194 = vpack.c.b16 %v4107, %v4106
        %v5195 = vpack.c.b16 %v4109, %v4108
        %v5196 = vpack.c.b16 %v4111, %v4110
        %v5197 = vpack.c.b16 %v4113, %v4112
        %v5198 = vpack.c.b16 %v4115, %v4114
        %v5199 = vpack.c.b16 %v4117, %v4116
        %v5200 = vpack.c.b16 %v4119, %v4118
        %v5201 = vpack.c.b16 %v4121, %v4120
        %v5202 = vpack.c.b16 %v4123, %v4122
        %v5203 = vpack.c.b16 %v4125, %v4124
        %v5204 = vpack.c.b16 %v4127, %v4126
        %v5205 = vpack.c.b16 %v4129, %v4128
        %v5206 = vpack.c.b16 %v4131, %v4130
        %v5207 = vpack.c.b16 %v4133, %v4132
        %v5208 = vpack.c.b16 %v4135, %v4134
        %v5209 = vpack.c.b16 %v4137, %v4136
        %v5210 = vpack.c.b16 %v4139, %v4138
        %v5211 = vpack.c.b16 %v4141, %v4140
        %v5212 = vpack.c.b16 %v4143, %v4142
        %v5213 = vpack.c.b16 %v4145, %v4144
        %v5214 = vpack.c.b16 %v4147, %v4146
        %v5215 = vpack.c.b16 %v4149, %v4148
        %v5216 = vpack.c.b16 %v4151, %v4150
        %v5217 = vpack.c.b16 %v4153, %v4152
        %v5218 = vpack.c.b16 %v4155, %v4154
        %v5219 = vpack.c.b16 %v4157, %v4156
        %v5220 = vpack.c.b16 %v4159, %v4158
        %v5221 = vpack.c.b16 %v4161, %v4160
        %v5222 = vpack.c.b16 %v4163, %v4162
        %v5223 = vpack.c.b16 %v4165, %v4164
        %v5224 = vpack.c.b16 %v4167, %v4166
        %v5225 = vpack.c.b16 %v4169, %v4168
        %v5226 = vpack.c.b16 %v4171, %v4170
        %v5227 = vpack.c.b16 %v4173, %v4172
        %v5228 = vpack.c.b16 %v4175, %v4174
        %v5229 = vpack.c.b16 %v4177, %v4176
        %v5230 = vpack.c.b16 %v4179, %v4178
        %v5231 = vpack.c.b16 %v4181, %v4180
        %v5232 = vpack.c.b16 %v4183, %v4182
        %v5233 = vpack.c.b16 %v4185, %v4184
        %v5234 = vpack.c.b16 %v4187, %v4186
        %v5235 = vpack.c.b16 %v4189, %v4188
        %v5236 = vpack.c.b16 %v4191, %v4190
        %v5237 = vpack.c.b16 %v4193, %v4192
        %v5238 = vpack.c.b16 %v4195, %v4194
        %v5239 = vpack.c.b16 %v4197, %v4196
        %v5240 = vpack.c.b16 %v4199, %v4198
        %v5241 = vpack.c.b16 %v4201, %v4200
        %v5242 = vpack.c.b16 %v4203, %v4202
        %v5243 = vpack.c.b16 %v4205, %v4204
        %v5244 = vpack.c.b16 %v4207, %v4206
        %v5245 = vpack.c.b16 %v4209, %v4208
        %v5246 = vpack.c.b16 %v4211, %v4210
        %v5247 = vpack.c.b16 %v4213, %v4212
        %v5248 = vpack.c.b16 %v4215, %v4214
        %v5249 = vpack.c.b16 %v4217, %v4216
        %v5250 = vpack.c.b16 %v4219, %v4218
        %v5251 = vpack.c.b16 %v4221, %v4220
        %v5252 = vpack.c.b16 %v4223, %v4222
        %v5253 = vpack.c.b16 %v4225, %v4224
        %v5254 = vpack.c.b16 %v4227, %v4226
        %v5255 = vpack.c.b16 %v4229, %v4228
        %v5256 = vpack.c.b16 %v4231, %v4230
        %v5257 = vpack.c.b16 %v4233, %v4232
        %v5258 = vpack.c.b16 %v4235, %v4234
        %v5259 = vpack.c.b16 %v4237, %v4236
        %v5260 = vpack.c.b16 %v4239, %v4238
        %v5261 = vpack.c.b16 %v4241, %v4240
        %v5262 = vpack.c.b16 %v4243, %v4242
        %v5263 = vpack.c.b16 %v4245, %v4244
        %v5264 = vpack.c.b16 %v4247, %v4246
        %v5265 = vpack.c.b16 %v4249, %v4248
        %v5266 = vpack.c.b16 %v4251, %v4250
        %v5267 = vpack.c.b16 %v4253, %v4252
        %v5268 = vpack.c.b16 %v4255, %v4254
        %v5269 = vpack.c.b16 %v4257, %v4256
        %v5270 = vpack.c.b16 %v4259, %v4258
        %v5271 = vpack.c.b16 %v4261, %v4260
        %v5272 = vpack.c.b16 %v4263, %v4262
        %v5273 = vpack.c.b16 %v4265, %v4264
        %v5274 = vpack.c.b16 %v4267, %v4266
        %v5275 = vpack.c.b16 %v4269, %v4268
        %v5276 = vpack.c.b16 %v4271, %v4270
        %v5277 = vpack.c.b16 %v4273, %v4272
        %v5278 = vpack.c.b16 %v4275, %v4274
        %v5279 = vpack.c.b16 %v4277, %v4276
        %v5280 = vpack.c.b16 %v4279, %v4278
        %v5281 = vpack.c.b16 %v4281, %v4280
        %v5282 = vpack.c.b16 %v4283, %v4282
        %v5283 = vpack.c.b16 %v4285, %v4284
        %v5284 = vpack.c.b16 %v4287, %v4286
        %v5285 = vpack.c.b16 %v4289, %v4288
        %v5286 = vpack.c.b16 %v4291, %v4290
        %v5287 = vpack.c.b16 %v4293, %v4292
        %v5288 = vpack.c.b16 %v4295, %v4294
        %v5289 = vpack.c.b16 %v4297, %v4296
        %v5290 = vpack.c.b16 %v4299, %v4298
        %v5291 = vpack.c.b16 %v4301, %v4300
        %v5292 = vpack.c.b16 %v4303, %v4302
        %v5293 = vpack.c.b16 %v4305, %v4304
        %v5294 = vpack.c.b16 %v4307, %v4306
        %v5295 = vpack.c.b16 %v4309, %v4308
        %v5296 = vpack.c.b16 %v4311, %v4310
        %v5297 = vpack.c.b16 %v4313, %v4312
        %v5298 = vpack.c.b16 %v4315, %v4314
        %v5299 = vpack.c.b16 %v4317, %v4316
        %v5300 = vpack.c.b16 %v4319, %v4318
        %v5301 = vpack.c.b16 %v4321, %v4320
        %v5302 = vpack.c.b16 %v4323, %v4322
        %v5303 = vpack.c.b16 %v4325, %v4324
        %v5304 = vpack.c.b16 %v4327, %v4326
        %v5305 = vpack.c.b16 %v4329, %v4328
        %v5306 = vpack.c.b16 %v4331, %v4330
        %v5307 = vpack.c.b16 %v4333, %v4332
        %v5308 = vpack.c.b16 %v4335, %v4334
        %v5309 = vpack.c.b16 %v4337, %v4336
        %v5310 = vpack.c.b16 %v4339, %v4338
        %v5311 = vpack.c.b16 %v4341, %v4340
        %v5312 = vpack.c.b16 %v4343, %v4342
        %v5313 = vpack.c.b16 %v4345, %v4344
        %v5314 = vpack.c.b16 %v4347, %v4346
        %v5315 = vpack.c.b16 %v4349, %v4348
        %v5316 = vpack.c.b16 %v4351, %v4350
        %v5317 = vpack.c.b16 %v4353, %v4352
        %v5318 = vpack.c.b16 %v4355, %v4354
        %v5319 = vpack.c.b16 %v4357, %v4356
        %v5320 = vpack.c.b16 %v4359, %v4358
        %v5321 = vpack.c.b16 %v4361, %v4360
        %v5322 = vpack.c.b16 %v4363, %v4362
        %v5323 = vpack.c.b16 %v4365, %v4364
        %v5324 = vpack.c.b16 %v4367, %v4366
        %v5325 = vpack.c.b16 %v4369, %v4368
        %v5326 = vpack.c.b16 %v4371, %v4370
        %v5327 = vpack.c.b16 %v4373, %v4372
        %v5328 = vpack.c.b16 %v4375, %v4374
        %v5329 = vpack.c.b16 %v4377, %v4376
        %v5330 = vpack.c.b16 %v4379, %v4378
        %v5331 = vpack.c.b16 %v4381, %v4380
        %v5332 = vpack.c.b16 %v4383, %v4382
        %v5333 = vpack.c.b16 %v4385, %v4384
        %v5334 = vpack.c.b16 %v4387, %v4386
        %v5335 = vpack.c.b16 %v4389, %v4388
        %v5336 = vpack.c.b16 %v4391, %v4390
        %v5337 = vpack.c.b16 %v4393, %v4392
        %v5338 = vpack.c.b16 %v4395, %v4394
        %v5339 = vpack.c.b16 %v4397, %v4396
        %v5340 = vpack.c.b16 %v4399, %v4398
        %v5341 = vpack.c.b16 %v4401, %v4400
        %v5342 = vpack.c.b16 %v4403, %v4402
        %v5343 = vpack.c.b16 %v4405, %v4404
        %v5344 = vpack.c.b16 %v4407, %v4406
        %v5345 = vpack.c.b16 %v4409, %v4408
        %v5346 = vpack.c.b16 %v4411, %v4410
        %v5347 = vpack.c.b16 %v4413, %v4412
        %v5348 = vpack.c.b16 %v4415, %v4414
        %v5349 = vpack.c.b16 %v4417, %v4416
        %v5350 = vpack.c.b16 %v4419, %v4418
        %v5351 = vpack.c.b16 %v4421, %v4420
        %v5352 = vpack.c.b16 %v4423, %v4422
        %v5353 = vpack.c.b16 %v4425, %v4424
        %v5354 = vpack.c.b16 %v4427, %v4426
        %v5355 = vpack.c.b16 %v4429, %v4428
        %v5356 = vpack.c.b16 %v4431, %v4430
        %v5357 = vpack.c.b16 %v4433, %v4432
        %v5358 = vpack.c.b16 %v4435, %v4434
        %v5359 = vpack.c.b16 %v4437, %v4436
        %v5360 = vpack.c.b16 %v4439, %v4438
        %v5361 = vpack.c.b16 %v4441, %v4440
        %v5362 = vpack.c.b16 %v4443, %v4442
        %v5363 = vpack.c.b16 %v4445, %v4444
        %v5364 = vpack.c.b16 %v4447, %v4446
        %v5365 = vpack.c.b16 %v4449, %v4448
        %v5366 = vpack.c.b16 %v4451, %v4450
        %v5367 = vpack.c.b16 %v4453, %v4452
        %v5368 = vpack.c.b16 %v4455, %v4454
        %v5369 = vpack.c.b16 %v4457, %v4456
        %v5370 = vpack.c.b16 %v4459, %v4458
        %v5371 = vpack.c.b16 %v4461, %v4460
        %v5372 = vpack.c.b16 %v4463, %v4462
        %v5373 = vpack.c.b16 %v4465, %v4464
        %v5374 = vpack.c.b16 %v4467, %v4466
        %v5375 = vpack.c.b16 %v4469, %v4468
        %v5376 = vpack.c.b16 %v4471, %v4470
        %v5377 = vpack.c.b16 %v4473, %v4472
        %v5378 = vpack.c.b16 %v4475, %v4474
        %v5379 = vpack.c.b16 %v4477, %v4476
        %v5380 = vpack.c.b16 %v4479, %v4478
        %v5381 = vpack.c.b16 %v4481, %v4480
        %v5382 = vpack.c.b16 %v4483, %v4482
        %v5383 = vpack.c.b16 %v4485, %v4484
        %v5384 = vpack.c.b16 %v4487, %v4486
        %v5385 = vpack.c.b16 %v4489, %v4488
        %v5386 = vpack.c.b16 %v4491, %v4490
        %v5387 = vpack.c.b16 %v4493, %v4492
        %v5388 = vpack.c.b16 %v4495, %v4494
        %v5389 = vpack.c.b16 %v4497, %v4496
        %v5390 = vpack.c.b16 %v4499, %v4498
        %v5391 = vpack.c.b16 %v4501, %v4500
        %v5392 = vpack.c.b16 %v4503, %v4502
        %v5393 = vpack.c.b16 %v4505, %v4504
        %v5394 = vpack.c.b16 %v4507, %v4506
        %v5395 = vpack.c.b16 %v4509, %v4508
        %v5396 = vpack.c.b16 %v4511, %v4510
        %v5397 = vpack.c.b16 %v4513, %v4512
        %v5398 = vpack.c.b16 %v4515, %v4514
        %v5399 = vpack.c.b16 %v4517, %v4516
        %v5400 = vpack.c.b16 %v4519, %v4518
        %v5401 = vpack.c.b16 %v4521, %v4520
        %v5402 = vpack.c.b16 %v4523, %v4522
        %v5403 = vpack.c.b16 %v4525, %v4524
        %v5404 = vpack.c.b16 %v4527, %v4526
        %v5405 = vpack.c.b16 %v4529, %v4528
        %v5406 = vpack.c.b16 %v4531, %v4530
        %v5407 = vpack.c.b16 %v4533, %v4532
        %v5408 = vpack.c.b16 %v4535, %v4534
        %v5409 = vpack.c.b16 %v4537, %v4536
        %v5410 = vpack.c.b16 %v4539, %v4538
        %v5411 = vpack.c.b16 %v4541, %v4540
        %v5412 = vpack.c.b16 %v4543, %v4542
        %v5413 = vpack.c.b16 %v4545, %v4544
        %v5414 = vpack.c.b16 %v4547, %v4546
        %v5415 = vpack.c.b16 %v4549, %v4548
        %v5416 = vpack.c.b16 %v4551, %v4550
        %v5417 = vpack.c.b16 %v4553, %v4552
        %v5418 = vpack.c.b16 %v4555, %v4554
        %v5419 = vpack.c.b16 %v4557, %v4556
        %v5420 = vpack.c.b16 %v4559, %v4558
        %v5421 = vpack.c.b16 %v4561, %v4560
        %v5422 = vpack.c.b16 %v4563, %v4562
        %v5423 = vpack.c.b16 %v4565, %v4564
        %v5424 = vpack.c.b16 %v4567, %v4566
        %v5425 = vpack.c.b16 %v4569, %v4568
        %v5426 = vpack.c.b16 %v4571, %v4570
        %v5427 = vpack.c.b16 %v4573, %v4572
        %v5428 = vpack.c.b16 %v4575, %v4574
        %v5429 = vpack.c.b16 %v4577, %v4576
        %v5430 = vpack.c.b16 %v4579, %v4578
        %v5431 = vpack.c.b16 %v4581, %v4580
        %v5432 = vpack.c.b16 %v4583, %v4582
        %v5433 = vpack.c.b16 %v4585, %v4584
        %v5434 = vpack.c.b16 %v4587, %v4586
        %v5435 = vpack.c.b16 %v4589, %v4588
        %v5436 = vpack.c.b16 %v4591, %v4590
        %v5437 = vpack.c.b16 %v4593, %v4592
        %v5438 = vpack.c.b16 %v4595, %v4594
        %v5439 = vpack.c.b16 %v4597, %v4596
        %v5440 = vpack.c.b16 %v4599, %v4598
        %v5441 = vpack.c.b16 %v4601, %v4600
        %v5442 = vpack.c.b16 %v4603, %v4602
        %v5443 = vpack.c.b16 %v4605, %v4604
        %v5444 = vpack.c.b16 %v4607, %v4606
        %v5445 = vpack.c.b16 %v4609, %v4608
        %v5446 = vpack.c.b16 %v4611, %v4610
        %v5447 = vpack.c.b16 %v4613, %v4612
        %v5448 = vpack.c.b16 %v4615, %v4614
        %v5449 = vpack.c.b16 %v4617, %v4616
        %v5450 = vpack.c.b16 %v4619, %v4618
        %v5451 = vpack.c.b16 %v4621, %v4620
        %v5452 = vpack.c.b16 %v4623, %v4622
        %v5453 = vpack.c.b16 %v4625, %v4624
        %v5454 = vpack.c.b16 %v4627, %v4626
        %v5455 = vpack.c.b16 %v4629, %v4628
        %v5456 = vpack.c.b16 %v4631, %v4630
        %v5457 = vpack.c.b16 %v4633, %v4632
        %v5458 = vpack.c.b16 %v4635, %v4634
        %v5459 = vpack.c.b16 %v4637, %v4636
        %v5460 = vpack.c.b16 %v4639, %v4638
        %v5461 = vpack.c.b16 %v4641, %v4640
        %v5462 = vpack.c.b16 %v4643, %v4642
        %v5463 = vpack.c.b16 %v4645, %v4644
        %v5464 = vpack.c.b16 %v4647, %v4646
        %v5465 = vpack.c.b16 %v4649, %v4648
        %v5466 = vpack.c.b16 %v4651, %v4650
        %v5467 = vpack.c.b16 %v4653, %v4652
        %v5468 = vpack.c.b16 %v4655, %v4654
        %v5469 = vpack.c.b16 %v4657, %v4656
        %v5470 = vpack.c.b16 %v4659, %v4658
        %v5471 = vpack.c.b16 %v4661, %v4660
        %v5472 = vpack.c.b16 %v4663, %v4662
        %v5473 = vpack.c.b16 %v4665, %v4664
        %v5474 = vpack.c.b16 %v4667, %v4666
        %v5475 = vpack.c.b16 %v4669, %v4668
        %v5476 = vpack.c.b16 %v4671, %v4670
        %v5477 = vpack.c.b16 %v4673, %v4672
        %v5478 = vpack.c.b16 %v4675, %v4674
        %v5479 = vpack.c.b16 %v4677, %v4676
        %v5480 = vpack.c.b16 %v4679, %v4678
        %v5481 = vpack.c.b16 %v4681, %v4680
        %v5482 = vpack.c.b16 %v4683, %v4682
        %v5483 = vpack.c.b16 %v4685, %v4684
        %v5484 = vpack.c.b16 %v4687, %v4686
        %v5485 = vpack.c.b16 %v4689, %v4688
        %v5486 = vpack.c.b16 %v4691, %v4690
        %v5487 = vpack.c.b16 %v4693, %v4692
        %v5488 = vpack.c.b16 %v4695, %v4694
        %v5489 = vpack.c.b16 %v4697, %v4696
        %v5490 = vpack.c.b16 %v4699, %v4698
        %v5491 = vpack.c.b16 %v4701, %v4700
        %v5492 = vpack.c.b16 %v4703, %v4702
        %v5493 = vpack.c.b16 %v4705, %v4704
        %v5494 = vpack.c.b16 %v4707, %v4706
        %v5495 = vpack.c.b16 %v4709, %v4708
        %v5496 = vpack.c.b16 %v4711, %v4710
        %v5497 = vpack.c.b16 %v4713, %v4712
        %v5498 = vpack.c.b16 %v4715, %v4714
        %v5499 = vpack.c.b16 %v4717, %v4716
        %v5500 = vpack.c.b16 %v4719, %v4718
        %v5501 = vpack.c.b16 %v4721, %v4720
        %v5502 = vpack.c.b16 %v4723, %v4722
        %v5503 = vpack.c.b16 %v4725, %v4724
        %v5504 = vpack.c.b16 %v4727, %v4726
        %v5505 = vpack.c.b16 %v4729, %v4728
        %v5506 = vpack.c.b16 %v4731, %v4730
        %v5507 = vpack.c.b16 %v4733, %v4732
        %v5508 = vpack.c.b16 %v4735, %v4734
        %v5509 = vpack.c.b16 %v4737, %v4736
        %v5510 = vpack.c.b16 %v4739, %v4738
        %v5511 = vpack.c.b16 %v4741, %v4740
        %v5512 = vpack.c.b16 %v4743, %v4742
        %v5513 = vpack.c.b16 %v4745, %v4744
        %v5514 = vpack.c.b16 %v4747, %v4746
        %v5515 = vpack.c.b16 %v4749, %v4748
        %v5516 = vpack.c.b16 %v4751, %v4750
        %v5517 = vpack.c.b16 %v4753, %v4752
        %v5518 = vpack.c.b16 %v4755, %v4754
        %v5519 = vpack.c.b16 %v4757, %v4756
        %v5520 = vpack.c.b16 %v4759, %v4758
        %v5521 = vpack.c.b16 %v4761, %v4760
        %v5522 = vpack.c.b16 %v4763, %v4762
        %v5523 = vpack.c.b16 %v4765, %v4764
        %v5524 = vpack.c.b16 %v4767, %v4766
        %v5525 = vpack.c.b16 %v4769, %v4768
        %v5526 = vpack.c.b16 %v4771, %v4770
        %v5527 = vpack.c.b16 %v4773, %v4772
        %v5528 = vpack.c.b16 %v4775, %v4774
        %v5529 = vpack.c.b16 %v4777, %v4776
        %v5530 = vpack.c.b16 %v4779, %v4778
        %v5531 = vpack.c.b16 %v4781, %v4780
        %v5532 = vpack.c.b16 %v4783, %v4782
        %v5533 = vpack.c.b16 %v4785, %v4784
        %v5534 = vpack.c.b16 %v4787, %v4786
        %v5535 = vpack.c.b16 %v4789, %v4788
        %v5536 = vpack.c.b16 %v4791, %v4790
        %v5537 = vpack.c.b16 %v4793, %v4792
        %v5538 = vpack.c.b16 %v4795, %v4794
        %v5539 = vpack.c.b16 %v4797, %v4796
        %v5540 = vpack.c.b16 %v4799, %v4798
        %v5541 = vpack.c.b16 %v4801, %v4800
        %v5542 = vpack.c.b16 %v4803, %v4802
        %v5543 = vpack.c.b16 %v4805, %v4804
        %v5544 = vpack.c.b16 %v4807, %v4806
        %v5545 = vpack.c.b16 %v4809, %v4808
        %v5546 = vpack.c.b16 %v4811, %v4810
        %v5547 = vpack.c.b16 %v4813, %v4812
        %v5548 = vpack.c.b16 %v4815, %v4814
        %v5549 = vpack.c.b16 %v4817, %v4816
        %v5550 = vpack.c.b16 %v4819, %v4818
        %v5551 = vpack.c.b16 %v4821, %v4820
        %v5552 = vpack.c.b16 %v4823, %v4822
        %v5553 = vpack.c.b16 %v4825, %v4824
        %v5554 = vpack.c.b16 %v4827, %v4826
        %v5555 = vpack.c.b16 %v4829, %v4828
        %v5556 = vpack.c.b16 %v4831, %v4830
        %v5557 = vpack.c.b16 %v4833, %v4832
        %v5558 = vpack.c.b16 %v4835, %v4834
        %v5559 = vpack.c.b16 %v4837, %v4836
        %v5560 = vpack.c.b16 %v4839, %v4838
        %v5561 = vpack.c.b16 %v4841, %v4840
        %6282 = vmatprep.subr.bf16.mxu0 0
        %6283 = vmatpush1.bf16.msra.mxu0 %v4849
        %6284 = vmatprep.subr.bf16.mxu0 0
        %6285 = vmatpush1.bf16.msra.mxu0 %v4848
        %6286 = vmatprep.subr.bf16.mxu0 0
        %6287 = vmatpush1.bf16.msra.mxu0 %v4847
        %6288 = vmatprep.subr.bf16.mxu0 0
        %6289 = vmatpush1.bf16.msra.mxu0 %v4846
        %6290 = vmatprep.subr.bf16.mxu0 0
        %6291 = vmatpush1.bf16.msra.mxu0 %v4845
        %6292 = vmatprep.subr.bf16.mxu0 0
        %6293 = vmatpush1.bf16.msra.mxu0 %v4844
        %6294 = vmatprep.subr.bf16.mxu0 0
        %6295 = vmatpush1.bf16.msra.mxu0 %v4843
        %6296 = vmatprep.subr.bf16.mxu0 0
        %6297 = vmatpush1.bf16.msra.mxu0 %v4842
        %6298 = vmatprep.subr.bf16.mxu0 0
        %6299 = vmatpush2.bf16.msra.mxu0 %v4857
        %6300 = vmatprep.subr.bf16.mxu0 0
        %6301 = vmatpush2.bf16.msra.mxu0 %v4856
        %6302 = vmatprep.subr.bf16.mxu0 0
        %6303 = vmatpush2.bf16.msra.mxu0 %v4855
        %6304 = vmatprep.subr.bf16.mxu0 0
        %6305 = vmatpush2.bf16.msra.mxu0 %v4854
        %6306 = vmatprep.subr.bf16.mxu0 0
        %6307 = vmatpush2.bf16.msra.mxu0 %v4853
        %6308 = vmatprep.subr.bf16.mxu0 0
        %6309 = vmatpush2.bf16.msra.mxu0 %v4852
        %6310 = vmatprep.subr.bf16.mxu0 0
        %6311 = vmatpush2.bf16.msra.mxu0 %v4851
        %6312 = vmatprep.subr.bf16.mxu0 0
        %6313 = vmatpush2.bf16.msra.mxu0 %v4850
        %6314 = vmatprep.mubr.bf16.mxu0 %v1783
        %6315 = vmatmul.mubr.bf16.gmra.mxu0 %v1782
        %v6316 = vpop.f32.mrf.mxu0
        %v6317 = vadd.f32 0.0, %v6316
        %v6318 = vpop.f32.mrf.mxu0
        %v6319 = vpop.f32.mrf.mxu0
        %v6320 = vpop.f32.mrf.mxu0
        %6321 = vdwg.mxu0
        %6322 = vmatprep.subr.bf16.mxu0 0
        %6323 = vmatpush1.bf16.msra.mxu0 %v4865
        %6324 = vmatprep.subr.bf16.mxu0 0
        %6325 = vmatpush1.bf16.msra.mxu0 %v4864
        %6326 = vmatprep.subr.bf16.mxu0 0
        %6327 = vmatpush1.bf16.msra.mxu0 %v4863
        %6328 = vmatprep.subr.bf16.mxu0 0
        %6329 = vmatpush1.bf16.msra.mxu0 %v4862
        %6330 = vmatprep.subr.bf16.mxu0 0
        %6331 = vmatpush1.bf16.msra.mxu0 %v4861
        %6332 = vmatprep.subr.bf16.mxu0 0
        %6333 = vmatpush1.bf16.msra.mxu0 %v4860
        %6334 = vmatprep.subr.bf16.mxu0 0
        %6335 = vmatpush1.bf16.msra.mxu0 %v4859
        %6336 = vmatprep.subr.bf16.mxu0 0
        %6337 = vmatpush1.bf16.msra.mxu0 %v4858
        %6338 = vmatprep.subr.bf16.mxu0 0
        %6339 = vmatpush2.bf16.msra.mxu0 %v4873
        %6340 = vmatprep.subr.bf16.mxu0 0
        %6341 = vmatpush2.bf16.msra.mxu0 %v4872
        %6342 = vmatprep.subr.bf16.mxu0 0
        %6343 = vmatpush2.bf16.msra.mxu0 %v4871
        %6344 = vmatprep.subr.bf16.mxu0 0
        %6345 = vmatpush2.bf16.msra.mxu0 %v4870
        %6346 = vmatprep.subr.bf16.mxu0 0
        %6347 = vmatpush2.bf16.msra.mxu0 %v4869
        %6348 = vmatprep.subr.bf16.mxu0 0
        %6349 = vmatpush2.bf16.msra.mxu0 %v4868
        %6350 = vmatprep.subr.bf16.mxu0 0
        %6351 = vmatpush2.bf16.msra.mxu0 %v4867
        %6352 = vmatprep.subr.bf16.mxu0 0
        %6353 = vmatpush2.bf16.msra.mxu0 %v4866
        %6354 = vmatprep.mubr.bf16.mxu0 %v1785
        %6355 = vmatmul.mubr.bf16.gmra.mxu0 %v1784
        %v6356 = vpop.f32.mrf.mxu0
        %v6357 = vadd.f32 %v6317, %v6356
        %v6358 = vpop.f32.mrf.mxu0
        %v6359 = vpop.f32.mrf.mxu0
        %v6360 = vpop.f32.mrf.mxu0
        %6361 = vdwg.mxu0
        %6362 = vmatprep.subr.bf16.mxu0 0
        %6363 = vmatpush1.bf16.msra.mxu0 %v4881
        %6364 = vmatprep.subr.bf16.mxu0 0
        %6365 = vmatpush1.bf16.msra.mxu0 %v4880
        %6366 = vmatprep.subr.bf16.mxu0 0
        %6367 = vmatpush1.bf16.msra.mxu0 %v4879
        %6368 = vmatprep.subr.bf16.mxu0 0
        %6369 = vmatpush1.bf16.msra.mxu0 %v4878
        %6370 = vmatprep.subr.bf16.mxu0 0
        %6371 = vmatpush1.bf16.msra.mxu0 %v4877
        %6372 = vmatprep.subr.bf16.mxu0 0
        %6373 = vmatpush1.bf16.msra.mxu0 %v4876
        %6374 = vmatprep.subr.bf16.mxu0 0
        %6375 = vmatpush1.bf16.msra.mxu0 %v4875
        %6376 = vmatprep.subr.bf16.mxu0 0
        %6377 = vmatpush1.bf16.msra.mxu0 %v4874
        %6378 = vmatprep.subr.bf16.mxu0 0
        %6379 = vmatpush2.bf16.msra.mxu0 %v4889
        %6380 = vmatprep.subr.bf16.mxu0 0
        %6381 = vmatpush2.bf16.msra.mxu0 %v4888
        %6382 = vmatprep.subr.bf16.mxu0 0
        %6383 = vmatpush2.bf16.msra.mxu0 %v4887
        %6384 = vmatprep.subr.bf16.mxu0 0
        %6385 = vmatpush2.bf16.msra.mxu0 %v4886
        %6386 = vmatprep.subr.bf16.mxu0 0
        %6387 = vmatpush2.bf16.msra.mxu0 %v4885
        %6388 = vmatprep.subr.bf16.mxu0 0
        %6389 = vmatpush2.bf16.msra.mxu0 %v4884
        %6390 = vmatprep.subr.bf16.mxu0 0
        %6391 = vmatpush2.bf16.msra.mxu0 %v4883
        %6392 = vmatprep.subr.bf16.mxu0 0
        %6393 = vmatpush2.bf16.msra.mxu0 %v4882
        %6394 = vmatprep.mubr.bf16.mxu0 %v1787
        %6395 = vmatmul.mubr.bf16.gmra.mxu0 %v1786
        %v6396 = vpop.f32.mrf.mxu0
        %v6397 = vadd.f32 %v6357, %v6396
        %v6398 = vpop.f32.mrf.mxu0
        %v6399 = vpop.f32.mrf.mxu0
        %v6400 = vpop.f32.mrf.mxu0
        %6401 = vdwg.mxu0
        %6402 = vmatprep.subr.bf16.mxu0 0
        %6403 = vmatpush1.bf16.msra.mxu0 %v4897
        %6404 = vmatprep.subr.bf16.mxu0 0
        %6405 = vmatpush1.bf16.msra.mxu0 %v4896
        %6406 = vmatprep.subr.bf16.mxu0 0
        %6407 = vmatpush1.bf16.msra.mxu0 %v4895
        %6408 = vmatprep.subr.bf16.mxu0 0
        %6409 = vmatpush1.bf16.msra.mxu0 %v4894
        %6410 = vmatprep.subr.bf16.mxu0 0
        %6411 = vmatpush1.bf16.msra.mxu0 %v4893
        %6412 = vmatprep.subr.bf16.mxu0 0
        %6413 = vmatpush1.bf16.msra.mxu0 %v4892
        %6414 = vmatprep.subr.bf16.mxu0 0
        %6415 = vmatpush1.bf16.msra.mxu0 %v4891
        %6416 = vmatprep.subr.bf16.mxu0 0
        %6417 = vmatpush1.bf16.msra.mxu0 %v4890
        %6418 = vmatprep.subr.bf16.mxu0 0
        %6419 = vmatpush2.bf16.msra.mxu0 %v4905
        %6420 = vmatprep.subr.bf16.mxu0 0
        %6421 = vmatpush2.bf16.msra.mxu0 %v4904
        %6422 = vmatprep.subr.bf16.mxu0 0
        %6423 = vmatpush2.bf16.msra.mxu0 %v4903
        %6424 = vmatprep.subr.bf16.mxu0 0
        %6425 = vmatpush2.bf16.msra.mxu0 %v4902
        %6426 = vmatprep.subr.bf16.mxu0 0
        %6427 = vmatpush2.bf16.msra.mxu0 %v4901
        %6428 = vmatprep.subr.bf16.mxu0 0
        %6429 = vmatpush2.bf16.msra.mxu0 %v4900
        %6430 = vmatprep.subr.bf16.mxu0 0
        %6431 = vmatpush2.bf16.msra.mxu0 %v4899
        %6432 = vmatprep.subr.bf16.mxu0 0
        %6433 = vmatpush2.bf16.msra.mxu0 %v4898
        %6434 = vmatprep.mubr.bf16.mxu0 %v1789
        %6435 = vmatmul.mubr.bf16.gmra.mxu0 %v1788
        %v6436 = vpop.f32.mrf.mxu0
        %v6437 = vadd.f32 %v6397, %v6436
        %v6438 = vpop.f32.mrf.mxu0
        %v6439 = vpop.f32.mrf.mxu0
        %v6440 = vpop.f32.mrf.mxu0
        %6441 = vdwg.mxu0
        %6442 = vmatprep.subr.bf16.mxu0 0
        %6443 = vmatpush1.bf16.msra.mxu0 %v4913
        %6444 = vmatprep.subr.bf16.mxu0 0
        %6445 = vmatpush1.bf16.msra.mxu0 %v4912
        %6446 = vmatprep.subr.bf16.mxu0 0
        %6447 = vmatpush1.bf16.msra.mxu0 %v4911
        %6448 = vmatprep.subr.bf16.mxu0 0
        %6449 = vmatpush1.bf16.msra.mxu0 %v4910
        %6450 = vmatprep.subr.bf16.mxu0 0
        %6451 = vmatpush1.bf16.msra.mxu0 %v4909
        %6452 = vmatprep.subr.bf16.mxu0 0
        %6453 = vmatpush1.bf16.msra.mxu0 %v4908
        %6454 = vmatprep.subr.bf16.mxu0 0
        %6455 = vmatpush1.bf16.msra.mxu0 %v4907
        %6456 = vmatprep.subr.bf16.mxu0 0
        %6457 = vmatpush1.bf16.msra.mxu0 %v4906
        %6458 = vmatprep.subr.bf16.mxu0 0
        %6459 = vmatpush2.bf16.msra.mxu0 %v4921
        %6460 = vmatprep.subr.bf16.mxu0 0
        %6461 = vmatpush2.bf16.msra.mxu0 %v4920
        %6462 = vmatprep.subr.bf16.mxu0 0
        %6463 = vmatpush2.bf16.msra.mxu0 %v4919
        %6464 = vmatprep.subr.bf16.mxu0 0
        %6465 = vmatpush2.bf16.msra.mxu0 %v4918
        %6466 = vmatprep.subr.bf16.mxu0 0
        %6467 = vmatpush2.bf16.msra.mxu0 %v4917
        %6468 = vmatprep.subr.bf16.mxu0 0
        %6469 = vmatpush2.bf16.msra.mxu0 %v4916
        %6470 = vmatprep.subr.bf16.mxu0 0
        %6471 = vmatpush2.bf16.msra.mxu0 %v4915
        %6472 = vmatprep.subr.bf16.mxu0 0
        %6473 = vmatpush2.bf16.msra.mxu0 %v4914
        %6474 = vmatprep.mubr.bf16.mxu0 %v1791
        %6475 = vmatmul.mubr.bf16.gmra.mxu0 %v1790
        %v6476 = vpop.f32.mrf.mxu0
        %v6477 = vadd.f32 %v6437, %v6476
        %v6478 = vpop.f32.mrf.mxu0
        %v6479 = vpop.f32.mrf.mxu0
        %v6480 = vpop.f32.mrf.mxu0
        %6481 = vdwg.mxu0
        %6482 = vmatprep.subr.bf16.mxu0 0
        %6483 = vmatpush1.bf16.msra.mxu0 %v4929
        %6484 = vmatprep.subr.bf16.mxu0 0
        %6485 = vmatpush1.bf16.msra.mxu0 %v4928
        %6486 = vmatprep.subr.bf16.mxu0 0
        %6487 = vmatpush1.bf16.msra.mxu0 %v4927
        %6488 = vmatprep.subr.bf16.mxu0 0
        %6489 = vmatpush1.bf16.msra.mxu0 %v4926
        %6490 = vmatprep.subr.bf16.mxu0 0
        %6491 = vmatpush1.bf16.msra.mxu0 %v4925
        %6492 = vmatprep.subr.bf16.mxu0 0
        %6493 = vmatpush1.bf16.msra.mxu0 %v4924
        %6494 = vmatprep.subr.bf16.mxu0 0
        %6495 = vmatpush1.bf16.msra.mxu0 %v4923
        %6496 = vmatprep.subr.bf16.mxu0 0
        %6497 = vmatpush1.bf16.msra.mxu0 %v4922
        %6498 = vmatprep.subr.bf16.mxu0 0
        %6499 = vmatpush2.bf16.msra.mxu0 %v4937
        %6500 = vmatprep.subr.bf16.mxu0 0
        %6501 = vmatpush2.bf16.msra.mxu0 %v4936
        %6502 = vmatprep.subr.bf16.mxu0 0
        %6503 = vmatpush2.bf16.msra.mxu0 %v4935
        %6504 = vmatprep.subr.bf16.mxu0 0
        %6505 = vmatpush2.bf16.msra.mxu0 %v4934
        %6506 = vmatprep.subr.bf16.mxu0 0
        %6507 = vmatpush2.bf16.msra.mxu0 %v4933
        %6508 = vmatprep.subr.bf16.mxu0 0
        %6509 = vmatpush2.bf16.msra.mxu0 %v4932
        %6510 = vmatprep.subr.bf16.mxu0 0
        %6511 = vmatpush2.bf16.msra.mxu0 %v4931
        %6512 = vmatprep.subr.bf16.mxu0 0
        %6513 = vmatpush2.bf16.msra.mxu0 %v4930
        %6514 = vmatprep.mubr.bf16.mxu0 %v1793
        %6515 = vmatmul.mubr.bf16.gmra.mxu0 %v1792
        %v6516 = vpop.f32.mrf.mxu0
        %v6517 = vadd.f32 %v6477, %v6516
        %v6518 = vpop.f32.mrf.mxu0
        %v6519 = vpop.f32.mrf.mxu0
        %v6520 = vpop.f32.mrf.mxu0
        %6521 = vdwg.mxu0
        %6522 = vmatprep.subr.bf16.mxu0 0
        %6523 = vmatpush1.bf16.msra.mxu0 %v4945
        %6524 = vmatprep.subr.bf16.mxu0 0
        %6525 = vmatpush1.bf16.msra.mxu0 %v4944
        %6526 = vmatprep.subr.bf16.mxu0 0
        %6527 = vmatpush1.bf16.msra.mxu0 %v4943
        %6528 = vmatprep.subr.bf16.mxu0 0
        %6529 = vmatpush1.bf16.msra.mxu0 %v4942
        %6530 = vmatprep.subr.bf16.mxu0 0
        %6531 = vmatpush1.bf16.msra.mxu0 %v4941
        %6532 = vmatprep.subr.bf16.mxu0 0
        %6533 = vmatpush1.bf16.msra.mxu0 %v4940
        %6534 = vmatprep.subr.bf16.mxu0 0
        %6535 = vmatpush1.bf16.msra.mxu0 %v4939
        %6536 = vmatprep.subr.bf16.mxu0 0
        %6537 = vmatpush1.bf16.msra.mxu0 %v4938
        %6538 = vmatprep.subr.bf16.mxu0 0
        %6539 = vmatpush2.bf16.msra.mxu0 %v4953
        %6540 = vmatprep.subr.bf16.mxu0 0
        %6541 = vmatpush2.bf16.msra.mxu0 %v4952
        %6542 = vmatprep.subr.bf16.mxu0 0
        %6543 = vmatpush2.bf16.msra.mxu0 %v4951
        %6544 = vmatprep.subr.bf16.mxu0 0
        %6545 = vmatpush2.bf16.msra.mxu0 %v4950
        %6546 = vmatprep.subr.bf16.mxu0 0
        %6547 = vmatpush2.bf16.msra.mxu0 %v4949
        %6548 = vmatprep.subr.bf16.mxu0 0
        %6549 = vmatpush2.bf16.msra.mxu0 %v4948
        %6550 = vmatprep.subr.bf16.mxu0 0
        %6551 = vmatpush2.bf16.msra.mxu0 %v4947
        %6552 = vmatprep.subr.bf16.mxu0 0
        %6553 = vmatpush2.bf16.msra.mxu0 %v4946
        %6554 = vmatprep.mubr.bf16.mxu0 %v1795
        %6555 = vmatmul.mubr.bf16.gmra.mxu0 %v1794
        %v6556 = vpop.f32.mrf.mxu0
        %v6557 = vadd.f32 %v6517, %v6556
        %v6558 = vpop.f32.mrf.mxu0
        %v6559 = vpop.f32.mrf.mxu0
        %v6560 = vpop.f32.mrf.mxu0
        %6561 = vdwg.mxu0
        %6562 = vmatprep.subr.bf16.mxu0 0
        %6563 = vmatpush1.bf16.msra.mxu0 %v4961
        %6564 = vmatprep.subr.bf16.mxu0 0
        %6565 = vmatpush1.bf16.msra.mxu0 %v4960
        %6566 = vmatprep.subr.bf16.mxu0 0
        %6567 = vmatpush1.bf16.msra.mxu0 %v4959
        %6568 = vmatprep.subr.bf16.mxu0 0
        %6569 = vmatpush1.bf16.msra.mxu0 %v4958
        %6570 = vmatprep.subr.bf16.mxu0 0
        %6571 = vmatpush1.bf16.msra.mxu0 %v4957
        %6572 = vmatprep.subr.bf16.mxu0 0
        %6573 = vmatpush1.bf16.msra.mxu0 %v4956
        %6574 = vmatprep.subr.bf16.mxu0 0
        %6575 = vmatpush1.bf16.msra.mxu0 %v4955
        %6576 = vmatprep.subr.bf16.mxu0 0
        %6577 = vmatpush1.bf16.msra.mxu0 %v4954
        %6578 = vmatprep.subr.bf16.mxu0 0
        %6579 = vmatpush2.bf16.msra.mxu0 %v4969
        %6580 = vmatprep.subr.bf16.mxu0 0
        %6581 = vmatpush2.bf16.msra.mxu0 %v4968
        %6582 = vmatprep.subr.bf16.mxu0 0
        %6583 = vmatpush2.bf16.msra.mxu0 %v4967
        %6584 = vmatprep.subr.bf16.mxu0 0
        %6585 = vmatpush2.bf16.msra.mxu0 %v4966
        %6586 = vmatprep.subr.bf16.mxu0 0
        %6587 = vmatpush2.bf16.msra.mxu0 %v4965
        %6588 = vmatprep.subr.bf16.mxu0 0
        %6589 = vmatpush2.bf16.msra.mxu0 %v4964
        %6590 = vmatprep.subr.bf16.mxu0 0
        %6591 = vmatpush2.bf16.msra.mxu0 %v4963
        %6592 = vmatprep.subr.bf16.mxu0 0
        %6593 = vmatpush2.bf16.msra.mxu0 %v4962
        %6594 = vmatprep.mubr.bf16.mxu0 %v1797
        %6595 = vmatmul.mubr.bf16.gmra.mxu0 %v1796
        %v6596 = vpop.f32.mrf.mxu0
        %v6597 = vadd.f32 %v6557, %v6596
        %v6598 = vpop.f32.mrf.mxu0
        %v6599 = vpop.f32.mrf.mxu0
        %v6600 = vpop.f32.mrf.mxu0
        %6601 = vdwg.mxu0
        %6602 = vmatprep.subr.bf16.mxu0 0
        %6603 = vmatpush1.bf16.msra.mxu0 %v4977
        %6604 = vmatprep.subr.bf16.mxu0 0
        %6605 = vmatpush1.bf16.msra.mxu0 %v4976
        %6606 = vmatprep.subr.bf16.mxu0 0
        %6607 = vmatpush1.bf16.msra.mxu0 %v4975
        %6608 = vmatprep.subr.bf16.mxu0 0
        %6609 = vmatpush1.bf16.msra.mxu0 %v4974
        %6610 = vmatprep.subr.bf16.mxu0 0
        %6611 = vmatpush1.bf16.msra.mxu0 %v4973
        %6612 = vmatprep.subr.bf16.mxu0 0
        %6613 = vmatpush1.bf16.msra.mxu0 %v4972
        %6614 = vmatprep.subr.bf16.mxu0 0
        %6615 = vmatpush1.bf16.msra.mxu0 %v4971
        %6616 = vmatprep.subr.bf16.mxu0 0
        %6617 = vmatpush1.bf16.msra.mxu0 %v4970
        %6618 = vmatprep.subr.bf16.mxu0 0
        %6619 = vmatpush2.bf16.msra.mxu0 %v4985
        %6620 = vmatprep.subr.bf16.mxu0 0
        %6621 = vmatpush2.bf16.msra.mxu0 %v4984
        %6622 = vmatprep.subr.bf16.mxu0 0
        %6623 = vmatpush2.bf16.msra.mxu0 %v4983
        %6624 = vmatprep.subr.bf16.mxu0 0
        %6625 = vmatpush2.bf16.msra.mxu0 %v4982
        %6626 = vmatprep.subr.bf16.mxu0 0
        %6627 = vmatpush2.bf16.msra.mxu0 %v4981
        %6628 = vmatprep.subr.bf16.mxu0 0
        %6629 = vmatpush2.bf16.msra.mxu0 %v4980
        %6630 = vmatprep.subr.bf16.mxu0 0
        %6631 = vmatpush2.bf16.msra.mxu0 %v4979
        %6632 = vmatprep.subr.bf16.mxu0 0
        %6633 = vmatpush2.bf16.msra.mxu0 %v4978
        %6634 = vmatprep.mubr.bf16.mxu0 %v1799
        %6635 = vmatmul.mubr.bf16.gmra.mxu0 %v1798
        %v6636 = vpop.f32.mrf.mxu0
        %v6637 = vadd.f32 %v6597, %v6636
        %v6638 = vpop.f32.mrf.mxu0
        %v6639 = vpop.f32.mrf.mxu0
        %v6640 = vpop.f32.mrf.mxu0
        %6641 = vdwg.mxu0
        %6642 = vmatprep.subr.bf16.mxu0 0
        %6643 = vmatpush1.bf16.msra.mxu0 %v4993
        %6644 = vmatprep.subr.bf16.mxu0 0
        %6645 = vmatpush1.bf16.msra.mxu0 %v4992
        %6646 = vmatprep.subr.bf16.mxu0 0
        %6647 = vmatpush1.bf16.msra.mxu0 %v4991
        %6648 = vmatprep.subr.bf16.mxu0 0
        %6649 = vmatpush1.bf16.msra.mxu0 %v4990
        %6650 = vmatprep.subr.bf16.mxu0 0
        %6651 = vmatpush1.bf16.msra.mxu0 %v4989
        %6652 = vmatprep.subr.bf16.mxu0 0
        %6653 = vmatpush1.bf16.msra.mxu0 %v4988
        %6654 = vmatprep.subr.bf16.mxu0 0
        %6655 = vmatpush1.bf16.msra.mxu0 %v4987
        %6656 = vmatprep.subr.bf16.mxu0 0
        %6657 = vmatpush1.bf16.msra.mxu0 %v4986
        %6658 = vmatprep.subr.bf16.mxu0 0
        %6659 = vmatpush2.bf16.msra.mxu0 %v5001
        %6660 = vmatprep.subr.bf16.mxu0 0
        %6661 = vmatpush2.bf16.msra.mxu0 %v5000
        %6662 = vmatprep.subr.bf16.mxu0 0
        %6663 = vmatpush2.bf16.msra.mxu0 %v4999
        %6664 = vmatprep.subr.bf16.mxu0 0
        %6665 = vmatpush2.bf16.msra.mxu0 %v4998
        %6666 = vmatprep.subr.bf16.mxu0 0
        %6667 = vmatpush2.bf16.msra.mxu0 %v4997
        %6668 = vmatprep.subr.bf16.mxu0 0
        %6669 = vmatpush2.bf16.msra.mxu0 %v4996
        %6670 = vmatprep.subr.bf16.mxu0 0
        %6671 = vmatpush2.bf16.msra.mxu0 %v4995
        %6672 = vmatprep.subr.bf16.mxu0 0
        %6673 = vmatpush2.bf16.msra.mxu0 %v4994
        %6674 = vmatprep.mubr.bf16.mxu0 %v1801
        %6675 = vmatmul.mubr.bf16.gmra.mxu0 %v1800
        %v6676 = vpop.f32.mrf.mxu0
        %v6677 = vadd.f32 %v6637, %v6676
        %v6678 = vpop.f32.mrf.mxu0
        %v6679 = vpop.f32.mrf.mxu0
        %v6680 = vpop.f32.mrf.mxu0
        %6681 = vdwg.mxu0
        %6682 = vmatprep.subr.bf16.mxu0 0
        %6683 = vmatpush1.bf16.msra.mxu0 %v5009
        %6684 = vmatprep.subr.bf16.mxu0 0
        %6685 = vmatpush1.bf16.msra.mxu0 %v5008
        %6686 = vmatprep.subr.bf16.mxu0 0
        %6687 = vmatpush1.bf16.msra.mxu0 %v5007
        %6688 = vmatprep.subr.bf16.mxu0 0
        %6689 = vmatpush1.bf16.msra.mxu0 %v5006
        %6690 = vmatprep.subr.bf16.mxu0 0
        %6691 = vmatpush1.bf16.msra.mxu0 %v5005
        %6692 = vmatprep.subr.bf16.mxu0 0
        %6693 = vmatpush1.bf16.msra.mxu0 %v5004
        %6694 = vmatprep.subr.bf16.mxu0 0
        %6695 = vmatpush1.bf16.msra.mxu0 %v5003
        %6696 = vmatprep.subr.bf16.mxu0 0
        %6697 = vmatpush1.bf16.msra.mxu0 %v5002
        %6698 = vmatprep.subr.bf16.mxu0 0
        %6699 = vmatpush2.bf16.msra.mxu0 %v5017
        %6700 = vmatprep.subr.bf16.mxu0 0
        %6701 = vmatpush2.bf16.msra.mxu0 %v5016
        %6702 = vmatprep.subr.bf16.mxu0 0
        %6703 = vmatpush2.bf16.msra.mxu0 %v5015
        %6704 = vmatprep.subr.bf16.mxu0 0
        %6705 = vmatpush2.bf16.msra.mxu0 %v5014
        %6706 = vmatprep.subr.bf16.mxu0 0
        %6707 = vmatpush2.bf16.msra.mxu0 %v5013
        %6708 = vmatprep.subr.bf16.mxu0 0
        %6709 = vmatpush2.bf16.msra.mxu0 %v5012
        %6710 = vmatprep.subr.bf16.mxu0 0
        %6711 = vmatpush2.bf16.msra.mxu0 %v5011
        %6712 = vmatprep.subr.bf16.mxu0 0
        %6713 = vmatpush2.bf16.msra.mxu0 %v5010
        %6714 = vmatprep.mubr.bf16.mxu0 %v1803
        %6715 = vmatmul.mubr.bf16.gmra.mxu0 %v1802
        %v6716 = vpop.f32.mrf.mxu0
        %v6717 = vadd.f32 %v6677, %v6716
        %v6718 = vpop.f32.mrf.mxu0
        %v6719 = vpop.f32.mrf.mxu0
        %v6720 = vpop.f32.mrf.mxu0
        %6721 = vdwg.mxu0
        %6722 = vmatprep.subr.bf16.mxu0 0
        %6723 = vmatpush1.bf16.msra.mxu0 %v5025
        %6724 = vmatprep.subr.bf16.mxu0 0
        %6725 = vmatpush1.bf16.msra.mxu0 %v5024
        %6726 = vmatprep.subr.bf16.mxu0 0
        %6727 = vmatpush1.bf16.msra.mxu0 %v5023
        %6728 = vmatprep.subr.bf16.mxu0 0
        %6729 = vmatpush1.bf16.msra.mxu0 %v5022
        %6730 = vmatprep.subr.bf16.mxu0 0
        %6731 = vmatpush1.bf16.msra.mxu0 %v5021
        %6732 = vmatprep.subr.bf16.mxu0 0
        %6733 = vmatpush1.bf16.msra.mxu0 %v5020
        %6734 = vmatprep.subr.bf16.mxu0 0
        %6735 = vmatpush1.bf16.msra.mxu0 %v5019
        %6736 = vmatprep.subr.bf16.mxu0 0
        %6737 = vmatpush1.bf16.msra.mxu0 %v5018
        %6738 = vmatprep.subr.bf16.mxu0 0
        %6739 = vmatpush2.bf16.msra.mxu0 %v5033
        %6740 = vmatprep.subr.bf16.mxu0 0
        %6741 = vmatpush2.bf16.msra.mxu0 %v5032
        %6742 = vmatprep.subr.bf16.mxu0 0
        %6743 = vmatpush2.bf16.msra.mxu0 %v5031
        %6744 = vmatprep.subr.bf16.mxu0 0
        %6745 = vmatpush2.bf16.msra.mxu0 %v5030
        %6746 = vmatprep.subr.bf16.mxu0 0
        %6747 = vmatpush2.bf16.msra.mxu0 %v5029
        %6748 = vmatprep.subr.bf16.mxu0 0
        %6749 = vmatpush2.bf16.msra.mxu0 %v5028
        %6750 = vmatprep.subr.bf16.mxu0 0
        %6751 = vmatpush2.bf16.msra.mxu0 %v5027
        %6752 = vmatprep.subr.bf16.mxu0 0
        %6753 = vmatpush2.bf16.msra.mxu0 %v5026
        %6754 = vmatprep.mubr.bf16.mxu0 %v1805
        %6755 = vmatmul.mubr.bf16.gmra.mxu0 %v1804
        %v6756 = vpop.f32.mrf.mxu0
        %v6757 = vadd.f32 %v6717, %v6756
        %v6758 = vpop.f32.mrf.mxu0
        %v6759 = vpop.f32.mrf.mxu0
        %v6760 = vpop.f32.mrf.mxu0
        %6761 = vdwg.mxu0
        %6762 = vmatprep.subr.bf16.mxu0 0
        %6763 = vmatpush1.bf16.msra.mxu0 %v5041
        %6764 = vmatprep.subr.bf16.mxu0 0
        %6765 = vmatpush1.bf16.msra.mxu0 %v5040
        %6766 = vmatprep.subr.bf16.mxu0 0
        %6767 = vmatpush1.bf16.msra.mxu0 %v5039
        %6768 = vmatprep.subr.bf16.mxu0 0
        %6769 = vmatpush1.bf16.msra.mxu0 %v5038
        %6770 = vmatprep.subr.bf16.mxu0 0
        %6771 = vmatpush1.bf16.msra.mxu0 %v5037
        %6772 = vmatprep.subr.bf16.mxu0 0
        %6773 = vmatpush1.bf16.msra.mxu0 %v5036
        %6774 = vmatprep.subr.bf16.mxu0 0
        %6775 = vmatpush1.bf16.msra.mxu0 %v5035
        %6776 = vmatprep.subr.bf16.mxu0 0
        %6777 = vmatpush1.bf16.msra.mxu0 %v5034
        %6778 = vmatprep.subr.bf16.mxu0 0
        %6779 = vmatpush2.bf16.msra.mxu0 %v5049
        %6780 = vmatprep.subr.bf16.mxu0 0
        %6781 = vmatpush2.bf16.msra.mxu0 %v5048
        %6782 = vmatprep.subr.bf16.mxu0 0
        %6783 = vmatpush2.bf16.msra.mxu0 %v5047
        %6784 = vmatprep.subr.bf16.mxu0 0
        %6785 = vmatpush2.bf16.msra.mxu0 %v5046
        %6786 = vmatprep.subr.bf16.mxu0 0
        %6787 = vmatpush2.bf16.msra.mxu0 %v5045
        %6788 = vmatprep.subr.bf16.mxu0 0
        %6789 = vmatpush2.bf16.msra.mxu0 %v5044
        %6790 = vmatprep.subr.bf16.mxu0 0
        %6791 = vmatpush2.bf16.msra.mxu0 %v5043
        %6792 = vmatprep.subr.bf16.mxu0 0
        %6793 = vmatpush2.bf16.msra.mxu0 %v5042
        %6794 = vmatprep.mubr.bf16.mxu0 %v1807
        %6795 = vmatmul.mubr.bf16.gmra.mxu0 %v1806
        %v6796 = vpop.f32.mrf.mxu0
        %v6797 = vadd.f32 %v6757, %v6796
        %v6798 = vpop.f32.mrf.mxu0
        %v6799 = vpop.f32.mrf.mxu0
        %v6800 = vpop.f32.mrf.mxu0
        %6801 = vdwg.mxu0
        %6802 = vmatprep.subr.bf16.mxu0 0
        %6803 = vmatpush1.bf16.msra.mxu0 %v5057
        %6804 = vmatprep.subr.bf16.mxu0 0
        %6805 = vmatpush1.bf16.msra.mxu0 %v5056
        %6806 = vmatprep.subr.bf16.mxu0 0
        %6807 = vmatpush1.bf16.msra.mxu0 %v5055
        %6808 = vmatprep.subr.bf16.mxu0 0
        %6809 = vmatpush1.bf16.msra.mxu0 %v5054
        %6810 = vmatprep.subr.bf16.mxu0 0
        %6811 = vmatpush1.bf16.msra.mxu0 %v5053
        %6812 = vmatprep.subr.bf16.mxu0 0
        %6813 = vmatpush1.bf16.msra.mxu0 %v5052
        %6814 = vmatprep.subr.bf16.mxu0 0
        %6815 = vmatpush1.bf16.msra.mxu0 %v5051
        %6816 = vmatprep.subr.bf16.mxu0 0
        %6817 = vmatpush1.bf16.msra.mxu0 %v5050
        %6818 = vmatprep.subr.bf16.mxu0 0
        %6819 = vmatpush2.bf16.msra.mxu0 %v5065
        %6820 = vmatprep.subr.bf16.mxu0 0
        %6821 = vmatpush2.bf16.msra.mxu0 %v5064
        %6822 = vmatprep.subr.bf16.mxu0 0
        %6823 = vmatpush2.bf16.msra.mxu0 %v5063
        %6824 = vmatprep.subr.bf16.mxu0 0
        %6825 = vmatpush2.bf16.msra.mxu0 %v5062
        %6826 = vmatprep.subr.bf16.mxu0 0
        %6827 = vmatpush2.bf16.msra.mxu0 %v5061
        %6828 = vmatprep.subr.bf16.mxu0 0
        %6829 = vmatpush2.bf16.msra.mxu0 %v5060
        %6830 = vmatprep.subr.bf16.mxu0 0
        %6831 = vmatpush2.bf16.msra.mxu0 %v5059
        %6832 = vmatprep.subr.bf16.mxu0 0
        %6833 = vmatpush2.bf16.msra.mxu0 %v5058
        %6834 = vmatprep.mubr.bf16.mxu0 %v1809
        %6835 = vmatmul.mubr.bf16.gmra.mxu0 %v1808
        %v6836 = vpop.f32.mrf.mxu0
        %v6837 = vadd.f32 %v6797, %v6836
        %v6838 = vpop.f32.mrf.mxu0
        %v6839 = vpop.f32.mrf.mxu0
        %v6840 = vpop.f32.mrf.mxu0
        %6841 = vdwg.mxu0
        %6842 = vmatprep.subr.bf16.mxu0 0
        %6843 = vmatpush1.bf16.msra.mxu0 %v5073
        %6844 = vmatprep.subr.bf16.mxu0 0
        %6845 = vmatpush1.bf16.msra.mxu0 %v5072
        %6846 = vmatprep.subr.bf16.mxu0 0
        %6847 = vmatpush1.bf16.msra.mxu0 %v5071
        %6848 = vmatprep.subr.bf16.mxu0 0
        %6849 = vmatpush1.bf16.msra.mxu0 %v5070
        %6850 = vmatprep.subr.bf16.mxu0 0
        %6851 = vmatpush1.bf16.msra.mxu0 %v5069
        %6852 = vmatprep.subr.bf16.mxu0 0
        %6853 = vmatpush1.bf16.msra.mxu0 %v5068
        %6854 = vmatprep.subr.bf16.mxu0 0
        %6855 = vmatpush1.bf16.msra.mxu0 %v5067
        %6856 = vmatprep.subr.bf16.mxu0 0
        %6857 = vmatpush1.bf16.msra.mxu0 %v5066
        %6858 = vmatprep.subr.bf16.mxu0 0
        %6859 = vmatpush2.bf16.msra.mxu0 %v5081
        %6860 = vmatprep.subr.bf16.mxu0 0
        %6861 = vmatpush2.bf16.msra.mxu0 %v5080
        %6862 = vmatprep.subr.bf16.mxu0 0
        %6863 = vmatpush2.bf16.msra.mxu0 %v5079
        %6864 = vmatprep.subr.bf16.mxu0 0
        %6865 = vmatpush2.bf16.msra.mxu0 %v5078
        %6866 = vmatprep.subr.bf16.mxu0 0
        %6867 = vmatpush2.bf16.msra.mxu0 %v5077
        %6868 = vmatprep.subr.bf16.mxu0 0
        %6869 = vmatpush2.bf16.msra.mxu0 %v5076
        %6870 = vmatprep.subr.bf16.mxu0 0
        %6871 = vmatpush2.bf16.msra.mxu0 %v5075
        %6872 = vmatprep.subr.bf16.mxu0 0
        %6873 = vmatpush2.bf16.msra.mxu0 %v5074
        %6874 = vmatprep.mubr.bf16.mxu0 %v1811
        %6875 = vmatmul.mubr.bf16.gmra.mxu0 %v1810
        %v6876 = vpop.f32.mrf.mxu0
        %v6877 = vadd.f32 %v6837, %v6876
        %v6878 = vpop.f32.mrf.mxu0
        %v6879 = vpop.f32.mrf.mxu0
        %v6880 = vpop.f32.mrf.mxu0
        %6881 = vdwg.mxu0
        %6882 = vmatprep.subr.bf16.mxu0 0
        %6883 = vmatpush1.bf16.msra.mxu0 %v5089
        %6884 = vmatprep.subr.bf16.mxu0 0
        %6885 = vmatpush1.bf16.msra.mxu0 %v5088
        %6886 = vmatprep.subr.bf16.mxu0 0
        %6887 = vmatpush1.bf16.msra.mxu0 %v5087
        %6888 = vmatprep.subr.bf16.mxu0 0
        %6889 = vmatpush1.bf16.msra.mxu0 %v5086
        %6890 = vmatprep.subr.bf16.mxu0 0
        %6891 = vmatpush1.bf16.msra.mxu0 %v5085
        %6892 = vmatprep.subr.bf16.mxu0 0
        %6893 = vmatpush1.bf16.msra.mxu0 %v5084
        %6894 = vmatprep.subr.bf16.mxu0 0
        %6895 = vmatpush1.bf16.msra.mxu0 %v5083
        %6896 = vmatprep.subr.bf16.mxu0 0
        %6897 = vmatpush1.bf16.msra.mxu0 %v5082
        %6898 = vmatprep.subr.bf16.mxu0 0
        %6899 = vmatpush2.bf16.msra.mxu0 %v5097
        %6900 = vmatprep.subr.bf16.mxu0 0
        %6901 = vmatpush2.bf16.msra.mxu0 %v5096
        %6902 = vmatprep.subr.bf16.mxu0 0
        %6903 = vmatpush2.bf16.msra.mxu0 %v5095
        %6904 = vmatprep.subr.bf16.mxu0 0
        %6905 = vmatpush2.bf16.msra.mxu0 %v5094
        %6906 = vmatprep.subr.bf16.mxu0 0
        %6907 = vmatpush2.bf16.msra.mxu0 %v5093
        %6908 = vmatprep.subr.bf16.mxu0 0
        %6909 = vmatpush2.bf16.msra.mxu0 %v5092
        %6910 = vmatprep.subr.bf16.mxu0 0
        %6911 = vmatpush2.bf16.msra.mxu0 %v5091
        %6912 = vmatprep.subr.bf16.mxu0 0
        %6913 = vmatpush2.bf16.msra.mxu0 %v5090
        %6914 = vmatprep.mubr.bf16.mxu0 %v1813
        %6915 = vmatmul.mubr.bf16.gmra.mxu0 %v1812
        %v6916 = vpop.f32.mrf.mxu0
        %v6917 = vadd.f32 %v6877, %v6916
        %v6918 = vpop.f32.mrf.mxu0
        %v6919 = vpop.f32.mrf.mxu0
        %v6920 = vpop.f32.mrf.mxu0
        %6921 = vdwg.mxu0
        %6922 = vmatprep.subr.bf16.mxu0 0
        %6923 = vmatpush1.bf16.msra.mxu0 %v5105
        %6924 = vmatprep.subr.bf16.mxu0 0
        %6925 = vmatpush1.bf16.msra.mxu0 %v5104
        %6926 = vmatprep.subr.bf16.mxu0 0
        %6927 = vmatpush1.bf16.msra.mxu0 %v5103
        %6928 = vmatprep.subr.bf16.mxu0 0
        %6929 = vmatpush1.bf16.msra.mxu0 %v5102
        %6930 = vmatprep.subr.bf16.mxu0 0
        %6931 = vmatpush1.bf16.msra.mxu0 %v5101
        %6932 = vmatprep.subr.bf16.mxu0 0
        %6933 = vmatpush1.bf16.msra.mxu0 %v5100
        %6934 = vmatprep.subr.bf16.mxu0 0
        %6935 = vmatpush1.bf16.msra.mxu0 %v5099
        %6936 = vmatprep.subr.bf16.mxu0 0
        %6937 = vmatpush1.bf16.msra.mxu0 %v5098
        %6938 = vmatprep.subr.bf16.mxu0 0
        %6939 = vmatpush2.bf16.msra.mxu0 %v5113
        %6940 = vmatprep.subr.bf16.mxu0 0
        %6941 = vmatpush2.bf16.msra.mxu0 %v5112
        %6942 = vmatprep.subr.bf16.mxu0 0
        %6943 = vmatpush2.bf16.msra.mxu0 %v5111
        %6944 = vmatprep.subr.bf16.mxu0 0
        %6945 = vmatpush2.bf16.msra.mxu0 %v5110
        %6946 = vmatprep.subr.bf16.mxu0 0
        %6947 = vmatpush2.bf16.msra.mxu0 %v5109
        %6948 = vmatprep.subr.bf16.mxu0 0
        %6949 = vmatpush2.bf16.msra.mxu0 %v5108
        %6950 = vmatprep.subr.bf16.mxu0 0
        %6951 = vmatpush2.bf16.msra.mxu0 %v5107
        %6952 = vmatprep.subr.bf16.mxu0 0
        %6953 = vmatpush2.bf16.msra.mxu0 %v5106
        %6954 = vmatprep.mubr.bf16.mxu0 %v1815
        %6955 = vmatmul.mubr.bf16.gmra.mxu0 %v1814
        %v6956 = vpop.f32.mrf.mxu0
        %v6957 = vadd.f32 %v6917, %v6956
        %v6958 = vpop.f32.mrf.mxu0
        %v6959 = vpop.f32.mrf.mxu0
        %v6960 = vpop.f32.mrf.mxu0
        %6961 = vdwg.mxu0
        %6962 = vmatprep.subr.bf16.mxu0 0
        %6963 = vmatpush1.bf16.msra.mxu0 %v5121
        %6964 = vmatprep.subr.bf16.mxu0 0
        %6965 = vmatpush1.bf16.msra.mxu0 %v5120
        %6966 = vmatprep.subr.bf16.mxu0 0
        %6967 = vmatpush1.bf16.msra.mxu0 %v5119
        %6968 = vmatprep.subr.bf16.mxu0 0
        %6969 = vmatpush1.bf16.msra.mxu0 %v5118
        %6970 = vmatprep.subr.bf16.mxu0 0
        %6971 = vmatpush1.bf16.msra.mxu0 %v5117
        %6972 = vmatprep.subr.bf16.mxu0 0
        %6973 = vmatpush1.bf16.msra.mxu0 %v5116
        %6974 = vmatprep.subr.bf16.mxu0 0
        %6975 = vmatpush1.bf16.msra.mxu0 %v5115
        %6976 = vmatprep.subr.bf16.mxu0 0
        %6977 = vmatpush1.bf16.msra.mxu0 %v5114
        %6978 = vmatprep.subr.bf16.mxu0 0
        %6979 = vmatpush2.bf16.msra.mxu0 %v5129
        %6980 = vmatprep.subr.bf16.mxu0 0
        %6981 = vmatpush2.bf16.msra.mxu0 %v5128
        %6982 = vmatprep.subr.bf16.mxu0 0
        %6983 = vmatpush2.bf16.msra.mxu0 %v5127
        %6984 = vmatprep.subr.bf16.mxu0 0
        %6985 = vmatpush2.bf16.msra.mxu0 %v5126
        %6986 = vmatprep.subr.bf16.mxu0 0
        %6987 = vmatpush2.bf16.msra.mxu0 %v5125
        %6988 = vmatprep.subr.bf16.mxu0 0
        %6989 = vmatpush2.bf16.msra.mxu0 %v5124
        %6990 = vmatprep.subr.bf16.mxu0 0
        %6991 = vmatpush2.bf16.msra.mxu0 %v5123
        %6992 = vmatprep.subr.bf16.mxu0 0
        %6993 = vmatpush2.bf16.msra.mxu0 %v5122
        %6994 = vmatprep.mubr.bf16.mxu0 %v1817
        %6995 = vmatmul.mubr.bf16.gmra.mxu0 %v1816
        %v6996 = vpop.f32.mrf.mxu0
        %v6997 = vadd.f32 %v6957, %v6996
        %v6998 = vpop.f32.mrf.mxu0
        %v6999 = vpop.f32.mrf.mxu0
        %v7000 = vpop.f32.mrf.mxu0
        %7001 = vdwg.mxu0
        %7002 = vmatprep.subr.bf16.mxu0 0
        %7003 = vmatpush1.bf16.msra.mxu0 %v5137
        %7004 = vmatprep.subr.bf16.mxu0 0
        %7005 = vmatpush1.bf16.msra.mxu0 %v5136
        %7006 = vmatprep.subr.bf16.mxu0 0
        %7007 = vmatpush1.bf16.msra.mxu0 %v5135
        %7008 = vmatprep.subr.bf16.mxu0 0
        %7009 = vmatpush1.bf16.msra.mxu0 %v5134
        %7010 = vmatprep.subr.bf16.mxu0 0
        %7011 = vmatpush1.bf16.msra.mxu0 %v5133
        %7012 = vmatprep.subr.bf16.mxu0 0
        %7013 = vmatpush1.bf16.msra.mxu0 %v5132
        %7014 = vmatprep.subr.bf16.mxu0 0
        %7015 = vmatpush1.bf16.msra.mxu0 %v5131
        %7016 = vmatprep.subr.bf16.mxu0 0
        %7017 = vmatpush1.bf16.msra.mxu0 %v5130
        %7018 = vmatprep.subr.bf16.mxu0 0
        %7019 = vmatpush2.bf16.msra.mxu0 %v5145
        %7020 = vmatprep.subr.bf16.mxu0 0
        %7021 = vmatpush2.bf16.msra.mxu0 %v5144
        %7022 = vmatprep.subr.bf16.mxu0 0
        %7023 = vmatpush2.bf16.msra.mxu0 %v5143
        %7024 = vmatprep.subr.bf16.mxu0 0
        %7025 = vmatpush2.bf16.msra.mxu0 %v5142
        %7026 = vmatprep.subr.bf16.mxu0 0
        %7027 = vmatpush2.bf16.msra.mxu0 %v5141
        %7028 = vmatprep.subr.bf16.mxu0 0
        %7029 = vmatpush2.bf16.msra.mxu0 %v5140
        %7030 = vmatprep.subr.bf16.mxu0 0
        %7031 = vmatpush2.bf16.msra.mxu0 %v5139
        %7032 = vmatprep.subr.bf16.mxu0 0
        %7033 = vmatpush2.bf16.msra.mxu0 %v5138
        %7034 = vmatprep.mubr.bf16.mxu0 %v1819
        %7035 = vmatmul.mubr.bf16.gmra.mxu0 %v1818
        %v7036 = vpop.f32.mrf.mxu0
        %v7037 = vadd.f32 %v6997, %v7036
        %v7038 = vpop.f32.mrf.mxu0
        %v7039 = vpop.f32.mrf.mxu0
        %v7040 = vpop.f32.mrf.mxu0
        %7041 = vdwg.mxu0
        %7042 = vmatprep.subr.bf16.mxu0 0
        %7043 = vmatpush1.bf16.msra.mxu0 %v5153
        %7044 = vmatprep.subr.bf16.mxu0 0
        %7045 = vmatpush1.bf16.msra.mxu0 %v5152
        %7046 = vmatprep.subr.bf16.mxu0 0
        %7047 = vmatpush1.bf16.msra.mxu0 %v5151
        %7048 = vmatprep.subr.bf16.mxu0 0
        %7049 = vmatpush1.bf16.msra.mxu0 %v5150
        %7050 = vmatprep.subr.bf16.mxu0 0
        %7051 = vmatpush1.bf16.msra.mxu0 %v5149
        %7052 = vmatprep.subr.bf16.mxu0 0
        %7053 = vmatpush1.bf16.msra.mxu0 %v5148
        %7054 = vmatprep.subr.bf16.mxu0 0
        %7055 = vmatpush1.bf16.msra.mxu0 %v5147
        %7056 = vmatprep.subr.bf16.mxu0 0
        %7057 = vmatpush1.bf16.msra.mxu0 %v5146
        %7058 = vmatprep.subr.bf16.mxu0 0
        %7059 = vmatpush2.bf16.msra.mxu0 %v5161
        %7060 = vmatprep.subr.bf16.mxu0 0
        %7061 = vmatpush2.bf16.msra.mxu0 %v5160
        %7062 = vmatprep.subr.bf16.mxu0 0
        %7063 = vmatpush2.bf16.msra.mxu0 %v5159
        %7064 = vmatprep.subr.bf16.mxu0 0
        %7065 = vmatpush2.bf16.msra.mxu0 %v5158
        %7066 = vmatprep.subr.bf16.mxu0 0
        %7067 = vmatpush2.bf16.msra.mxu0 %v5157
        %7068 = vmatprep.subr.bf16.mxu0 0
        %7069 = vmatpush2.bf16.msra.mxu0 %v5156
        %7070 = vmatprep.subr.bf16.mxu0 0
        %7071 = vmatpush2.bf16.msra.mxu0 %v5155
        %7072 = vmatprep.subr.bf16.mxu0 0
        %7073 = vmatpush2.bf16.msra.mxu0 %v5154
        %7074 = vmatprep.mubr.bf16.mxu0 %v1821
        %7075 = vmatmul.mubr.bf16.gmra.mxu0 %v1820
        %v7076 = vpop.f32.mrf.mxu0
        %v7077 = vadd.f32 %v7037, %v7076
        %v7078 = vpop.f32.mrf.mxu0
        %v7079 = vpop.f32.mrf.mxu0
        %v7080 = vpop.f32.mrf.mxu0
        %7081 = vdwg.mxu0
        %7082 = vmatprep.subr.bf16.mxu0 0
        %7083 = vmatpush1.bf16.msra.mxu0 %v5169
        %7084 = vmatprep.subr.bf16.mxu0 0
        %7085 = vmatpush1.bf16.msra.mxu0 %v5168
        %7086 = vmatprep.subr.bf16.mxu0 0
        %7087 = vmatpush1.bf16.msra.mxu0 %v5167
        %7088 = vmatprep.subr.bf16.mxu0 0
        %7089 = vmatpush1.bf16.msra.mxu0 %v5166
        %7090 = vmatprep.subr.bf16.mxu0 0
        %7091 = vmatpush1.bf16.msra.mxu0 %v5165
        %7092 = vmatprep.subr.bf16.mxu0 0
        %7093 = vmatpush1.bf16.msra.mxu0 %v5164
        %7094 = vmatprep.subr.bf16.mxu0 0
        %7095 = vmatpush1.bf16.msra.mxu0 %v5163
        %7096 = vmatprep.subr.bf16.mxu0 0
        %7097 = vmatpush1.bf16.msra.mxu0 %v5162
        %7098 = vmatprep.subr.bf16.mxu0 0
        %7099 = vmatpush2.bf16.msra.mxu0 %v5177
        %7100 = vmatprep.subr.bf16.mxu0 0
        %7101 = vmatpush2.bf16.msra.mxu0 %v5176
        %7102 = vmatprep.subr.bf16.mxu0 0
        %7103 = vmatpush2.bf16.msra.mxu0 %v5175
        %7104 = vmatprep.subr.bf16.mxu0 0
        %7105 = vmatpush2.bf16.msra.mxu0 %v5174
        %7106 = vmatprep.subr.bf16.mxu0 0
        %7107 = vmatpush2.bf16.msra.mxu0 %v5173
        %7108 = vmatprep.subr.bf16.mxu0 0
        %7109 = vmatpush2.bf16.msra.mxu0 %v5172
        %7110 = vmatprep.subr.bf16.mxu0 0
        %7111 = vmatpush2.bf16.msra.mxu0 %v5171
        %7112 = vmatprep.subr.bf16.mxu0 0
        %7113 = vmatpush2.bf16.msra.mxu0 %v5170
        %7114 = vmatprep.mubr.bf16.mxu0 %v1823
        %7115 = vmatmul.mubr.bf16.gmra.mxu0 %v1822
        %v7116 = vpop.f32.mrf.mxu0
        %v7117 = vadd.f32 %v7077, %v7116
        %v7118 = vpop.f32.mrf.mxu0
        %v7119 = vpop.f32.mrf.mxu0
        %v7120 = vpop.f32.mrf.mxu0
        %7121 = vdwg.mxu0
        %7122 = vmatprep.subr.bf16.mxu0 0
        %7123 = vmatpush1.bf16.msra.mxu0 %v5185
        %7124 = vmatprep.subr.bf16.mxu0 0
        %7125 = vmatpush1.bf16.msra.mxu0 %v5184
        %7126 = vmatprep.subr.bf16.mxu0 0
        %7127 = vmatpush1.bf16.msra.mxu0 %v5183
        %7128 = vmatprep.subr.bf16.mxu0 0
        %7129 = vmatpush1.bf16.msra.mxu0 %v5182
        %7130 = vmatprep.subr.bf16.mxu0 0
        %7131 = vmatpush1.bf16.msra.mxu0 %v5181
        %7132 = vmatprep.subr.bf16.mxu0 0
        %7133 = vmatpush1.bf16.msra.mxu0 %v5180
        %7134 = vmatprep.subr.bf16.mxu0 0
        %7135 = vmatpush1.bf16.msra.mxu0 %v5179
        %7136 = vmatprep.subr.bf16.mxu0 0
        %7137 = vmatpush1.bf16.msra.mxu0 %v5178
        %7138 = vmatprep.subr.bf16.mxu0 0
        %7139 = vmatpush2.bf16.msra.mxu0 %v5193
        %7140 = vmatprep.subr.bf16.mxu0 0
        %7141 = vmatpush2.bf16.msra.mxu0 %v5192
        %7142 = vmatprep.subr.bf16.mxu0 0
        %7143 = vmatpush2.bf16.msra.mxu0 %v5191
        %7144 = vmatprep.subr.bf16.mxu0 0
        %7145 = vmatpush2.bf16.msra.mxu0 %v5190
        %7146 = vmatprep.subr.bf16.mxu0 0
        %7147 = vmatpush2.bf16.msra.mxu0 %v5189
        %7148 = vmatprep.subr.bf16.mxu0 0
        %7149 = vmatpush2.bf16.msra.mxu0 %v5188
        %7150 = vmatprep.subr.bf16.mxu0 0
        %7151 = vmatpush2.bf16.msra.mxu0 %v5187
        %7152 = vmatprep.subr.bf16.mxu0 0
        %7153 = vmatpush2.bf16.msra.mxu0 %v5186
        %7154 = vmatprep.mubr.bf16.mxu0 %v1825
        %7155 = vmatmul.mubr.bf16.gmra.mxu0 %v1824
        %v7156 = vpop.f32.mrf.mxu0
        %v7157 = vadd.f32 %v7117, %v7156
        %v7158 = vpop.f32.mrf.mxu0
        %v7159 = vpop.f32.mrf.mxu0
        %v7160 = vpop.f32.mrf.mxu0
        %7161 = vdwg.mxu0
        %7162 = vmatprep.subr.bf16.mxu0 0
        %7163 = vmatpush1.bf16.msra.mxu0 %v5201
        %7164 = vmatprep.subr.bf16.mxu0 0
        %7165 = vmatpush1.bf16.msra.mxu0 %v5200
        %7166 = vmatprep.subr.bf16.mxu0 0
        %7167 = vmatpush1.bf16.msra.mxu0 %v5199
        %7168 = vmatprep.subr.bf16.mxu0 0
        %7169 = vmatpush1.bf16.msra.mxu0 %v5198
        %7170 = vmatprep.subr.bf16.mxu0 0
        %7171 = vmatpush1.bf16.msra.mxu0 %v5197
        %7172 = vmatprep.subr.bf16.mxu0 0
        %7173 = vmatpush1.bf16.msra.mxu0 %v5196
        %7174 = vmatprep.subr.bf16.mxu0 0
        %7175 = vmatpush1.bf16.msra.mxu0 %v5195
        %7176 = vmatprep.subr.bf16.mxu0 0
        %7177 = vmatpush1.bf16.msra.mxu0 %v5194
        %7178 = vmatprep.subr.bf16.mxu0 0
        %7179 = vmatpush2.bf16.msra.mxu0 %v5209
        %7180 = vmatprep.subr.bf16.mxu0 0
        %7181 = vmatpush2.bf16.msra.mxu0 %v5208
        %7182 = vmatprep.subr.bf16.mxu0 0
        %7183 = vmatpush2.bf16.msra.mxu0 %v5207
        %7184 = vmatprep.subr.bf16.mxu0 0
        %7185 = vmatpush2.bf16.msra.mxu0 %v5206
        %7186 = vmatprep.subr.bf16.mxu0 0
        %7187 = vmatpush2.bf16.msra.mxu0 %v5205
        %7188 = vmatprep.subr.bf16.mxu0 0
        %7189 = vmatpush2.bf16.msra.mxu0 %v5204
        %7190 = vmatprep.subr.bf16.mxu0 0
        %7191 = vmatpush2.bf16.msra.mxu0 %v5203
        %7192 = vmatprep.subr.bf16.mxu0 0
        %7193 = vmatpush2.bf16.msra.mxu0 %v5202
        %7194 = vmatprep.mubr.bf16.mxu0 %v1827
        %7195 = vmatmul.mubr.bf16.gmra.mxu0 %v1826
        %v7196 = vpop.f32.mrf.mxu0
        %v7197 = vadd.f32 %v7157, %v7196
        %v7198 = vpop.f32.mrf.mxu0
        %v7199 = vpop.f32.mrf.mxu0
        %v7200 = vpop.f32.mrf.mxu0
        %7201 = vdwg.mxu0
        %7202 = vmatprep.subr.bf16.mxu0 0
        %7203 = vmatpush1.bf16.msra.mxu0 %v5217
        %7204 = vmatprep.subr.bf16.mxu0 0
        %7205 = vmatpush1.bf16.msra.mxu0 %v5216
        %7206 = vmatprep.subr.bf16.mxu0 0
        %7207 = vmatpush1.bf16.msra.mxu0 %v5215
        %7208 = vmatprep.subr.bf16.mxu0 0
        %7209 = vmatpush1.bf16.msra.mxu0 %v5214
        %7210 = vmatprep.subr.bf16.mxu0 0
        %7211 = vmatpush1.bf16.msra.mxu0 %v5213
        %7212 = vmatprep.subr.bf16.mxu0 0
        %7213 = vmatpush1.bf16.msra.mxu0 %v5212
        %7214 = vmatprep.subr.bf16.mxu0 0
        %7215 = vmatpush1.bf16.msra.mxu0 %v5211
        %7216 = vmatprep.subr.bf16.mxu0 0
        %7217 = vmatpush1.bf16.msra.mxu0 %v5210
        %7218 = vmatprep.subr.bf16.mxu0 0
        %7219 = vmatpush2.bf16.msra.mxu0 %v5225
        %7220 = vmatprep.subr.bf16.mxu0 0
        %7221 = vmatpush2.bf16.msra.mxu0 %v5224
        %7222 = vmatprep.subr.bf16.mxu0 0
        %7223 = vmatpush2.bf16.msra.mxu0 %v5223
        %7224 = vmatprep.subr.bf16.mxu0 0
        %7225 = vmatpush2.bf16.msra.mxu0 %v5222
        %7226 = vmatprep.subr.bf16.mxu0 0
        %7227 = vmatpush2.bf16.msra.mxu0 %v5221
        %7228 = vmatprep.subr.bf16.mxu0 0
        %7229 = vmatpush2.bf16.msra.mxu0 %v5220
        %7230 = vmatprep.subr.bf16.mxu0 0
        %7231 = vmatpush2.bf16.msra.mxu0 %v5219
        %7232 = vmatprep.subr.bf16.mxu0 0
        %7233 = vmatpush2.bf16.msra.mxu0 %v5218
        %7234 = vmatprep.mubr.bf16.mxu0 %v1829
        %7235 = vmatmul.mubr.bf16.gmra.mxu0 %v1828
        %v7236 = vpop.f32.mrf.mxu0
        %v7237 = vadd.f32 %v7197, %v7236
        %v7238 = vpop.f32.mrf.mxu0
        %v7239 = vpop.f32.mrf.mxu0
        %v7240 = vpop.f32.mrf.mxu0
        %7241 = vdwg.mxu0
        %7242 = vmatprep.subr.bf16.mxu0 0
        %7243 = vmatpush1.bf16.msra.mxu0 %v5233
        %7244 = vmatprep.subr.bf16.mxu0 0
        %7245 = vmatpush1.bf16.msra.mxu0 %v5232
        %7246 = vmatprep.subr.bf16.mxu0 0
        %7247 = vmatpush1.bf16.msra.mxu0 %v5231
        %7248 = vmatprep.subr.bf16.mxu0 0
        %7249 = vmatpush1.bf16.msra.mxu0 %v5230
        %7250 = vmatprep.subr.bf16.mxu0 0
        %7251 = vmatpush1.bf16.msra.mxu0 %v5229
        %7252 = vmatprep.subr.bf16.mxu0 0
        %7253 = vmatpush1.bf16.msra.mxu0 %v5228
        %7254 = vmatprep.subr.bf16.mxu0 0
        %7255 = vmatpush1.bf16.msra.mxu0 %v5227
        %7256 = vmatprep.subr.bf16.mxu0 0
        %7257 = vmatpush1.bf16.msra.mxu0 %v5226
        %7258 = vmatprep.subr.bf16.mxu0 0
        %7259 = vmatpush2.bf16.msra.mxu0 %v5241
        %7260 = vmatprep.subr.bf16.mxu0 0
        %7261 = vmatpush2.bf16.msra.mxu0 %v5240
        %7262 = vmatprep.subr.bf16.mxu0 0
        %7263 = vmatpush2.bf16.msra.mxu0 %v5239
        %7264 = vmatprep.subr.bf16.mxu0 0
        %7265 = vmatpush2.bf16.msra.mxu0 %v5238
        %7266 = vmatprep.subr.bf16.mxu0 0
        %7267 = vmatpush2.bf16.msra.mxu0 %v5237
        %7268 = vmatprep.subr.bf16.mxu0 0
        %7269 = vmatpush2.bf16.msra.mxu0 %v5236
        %7270 = vmatprep.subr.bf16.mxu0 0
        %7271 = vmatpush2.bf16.msra.mxu0 %v5235
        %7272 = vmatprep.subr.bf16.mxu0 0
        %7273 = vmatpush2.bf16.msra.mxu0 %v5234
        %7274 = vmatprep.mubr.bf16.mxu0 %v1831
        %7275 = vmatmul.mubr.bf16.gmra.mxu0 %v1830
        %v7276 = vpop.f32.mrf.mxu0
        %v7277 = vadd.f32 %v7237, %v7276
        %v7278 = vpop.f32.mrf.mxu0
        %v7279 = vpop.f32.mrf.mxu0
        %v7280 = vpop.f32.mrf.mxu0
        %7281 = vdwg.mxu0
        %7282 = vmatprep.subr.bf16.mxu0 0
        %7283 = vmatpush1.bf16.msra.mxu0 %v5249
        %7284 = vmatprep.subr.bf16.mxu0 0
        %7285 = vmatpush1.bf16.msra.mxu0 %v5248
        %7286 = vmatprep.subr.bf16.mxu0 0
        %7287 = vmatpush1.bf16.msra.mxu0 %v5247
        %7288 = vmatprep.subr.bf16.mxu0 0
        %7289 = vmatpush1.bf16.msra.mxu0 %v5246
        %7290 = vmatprep.subr.bf16.mxu0 0
        %7291 = vmatpush1.bf16.msra.mxu0 %v5245
        %7292 = vmatprep.subr.bf16.mxu0 0
        %7293 = vmatpush1.bf16.msra.mxu0 %v5244
        %7294 = vmatprep.subr.bf16.mxu0 0
        %7295 = vmatpush1.bf16.msra.mxu0 %v5243
        %7296 = vmatprep.subr.bf16.mxu0 0
        %7297 = vmatpush1.bf16.msra.mxu0 %v5242
        %7298 = vmatprep.subr.bf16.mxu0 0
        %7299 = vmatpush2.bf16.msra.mxu0 %v5257
        %7300 = vmatprep.subr.bf16.mxu0 0
        %7301 = vmatpush2.bf16.msra.mxu0 %v5256
        %7302 = vmatprep.subr.bf16.mxu0 0
        %7303 = vmatpush2.bf16.msra.mxu0 %v5255
        %7304 = vmatprep.subr.bf16.mxu0 0
        %7305 = vmatpush2.bf16.msra.mxu0 %v5254
        %7306 = vmatprep.subr.bf16.mxu0 0
        %7307 = vmatpush2.bf16.msra.mxu0 %v5253
        %7308 = vmatprep.subr.bf16.mxu0 0
        %7309 = vmatpush2.bf16.msra.mxu0 %v5252
        %7310 = vmatprep.subr.bf16.mxu0 0
        %7311 = vmatpush2.bf16.msra.mxu0 %v5251
        %7312 = vmatprep.subr.bf16.mxu0 0
        %7313 = vmatpush2.bf16.msra.mxu0 %v5250
        %7314 = vmatprep.mubr.bf16.mxu0 %v1833
        %7315 = vmatmul.mubr.bf16.gmra.mxu0 %v1832
        %v7316 = vpop.f32.mrf.mxu0
        %v7317 = vadd.f32 %v7277, %v7316
        %v7318 = vpop.f32.mrf.mxu0
        %v7319 = vpop.f32.mrf.mxu0
        %v7320 = vpop.f32.mrf.mxu0
        %7321 = vdwg.mxu0
        %7322 = vmatprep.subr.bf16.mxu0 0
        %7323 = vmatpush1.bf16.msra.mxu0 %v5265
        %7324 = vmatprep.subr.bf16.mxu0 0
        %7325 = vmatpush1.bf16.msra.mxu0 %v5264
        %7326 = vmatprep.subr.bf16.mxu0 0
        %7327 = vmatpush1.bf16.msra.mxu0 %v5263
        %7328 = vmatprep.subr.bf16.mxu0 0
        %7329 = vmatpush1.bf16.msra.mxu0 %v5262
        %7330 = vmatprep.subr.bf16.mxu0 0
        %7331 = vmatpush1.bf16.msra.mxu0 %v5261
        %7332 = vmatprep.subr.bf16.mxu0 0
        %7333 = vmatpush1.bf16.msra.mxu0 %v5260
        %7334 = vmatprep.subr.bf16.mxu0 0
        %7335 = vmatpush1.bf16.msra.mxu0 %v5259
        %7336 = vmatprep.subr.bf16.mxu0 0
        %7337 = vmatpush1.bf16.msra.mxu0 %v5258
        %7338 = vmatprep.subr.bf16.mxu0 0
        %7339 = vmatpush2.bf16.msra.mxu0 %v5273
        %7340 = vmatprep.subr.bf16.mxu0 0
        %7341 = vmatpush2.bf16.msra.mxu0 %v5272
        %7342 = vmatprep.subr.bf16.mxu0 0
        %7343 = vmatpush2.bf16.msra.mxu0 %v5271
        %7344 = vmatprep.subr.bf16.mxu0 0
        %7345 = vmatpush2.bf16.msra.mxu0 %v5270
        %7346 = vmatprep.subr.bf16.mxu0 0
        %7347 = vmatpush2.bf16.msra.mxu0 %v5269
        %7348 = vmatprep.subr.bf16.mxu0 0
        %7349 = vmatpush2.bf16.msra.mxu0 %v5268
        %7350 = vmatprep.subr.bf16.mxu0 0
        %7351 = vmatpush2.bf16.msra.mxu0 %v5267
        %7352 = vmatprep.subr.bf16.mxu0 0
        %7353 = vmatpush2.bf16.msra.mxu0 %v5266
        %7354 = vmatprep.mubr.bf16.mxu0 %v1835
        %7355 = vmatmul.mubr.bf16.gmra.mxu0 %v1834
        %v7356 = vpop.f32.mrf.mxu0
        %v7357 = vadd.f32 %v7317, %v7356
        %v7358 = vpop.f32.mrf.mxu0
        %v7359 = vpop.f32.mrf.mxu0
        %v7360 = vpop.f32.mrf.mxu0
        %7361 = vdwg.mxu0
        %7362 = vmatprep.subr.bf16.mxu0 0
        %7363 = vmatpush1.bf16.msra.mxu0 %v5281
        %7364 = vmatprep.subr.bf16.mxu0 0
        %7365 = vmatpush1.bf16.msra.mxu0 %v5280
        %7366 = vmatprep.subr.bf16.mxu0 0
        %7367 = vmatpush1.bf16.msra.mxu0 %v5279
        %7368 = vmatprep.subr.bf16.mxu0 0
        %7369 = vmatpush1.bf16.msra.mxu0 %v5278
        %7370 = vmatprep.subr.bf16.mxu0 0
        %7371 = vmatpush1.bf16.msra.mxu0 %v5277
        %7372 = vmatprep.subr.bf16.mxu0 0
        %7373 = vmatpush1.bf16.msra.mxu0 %v5276
        %7374 = vmatprep.subr.bf16.mxu0 0
        %7375 = vmatpush1.bf16.msra.mxu0 %v5275
        %7376 = vmatprep.subr.bf16.mxu0 0
        %7377 = vmatpush1.bf16.msra.mxu0 %v5274
        %7378 = vmatprep.subr.bf16.mxu0 0
        %7379 = vmatpush2.bf16.msra.mxu0 %v5289
        %7380 = vmatprep.subr.bf16.mxu0 0
        %7381 = vmatpush2.bf16.msra.mxu0 %v5288
        %7382 = vmatprep.subr.bf16.mxu0 0
        %7383 = vmatpush2.bf16.msra.mxu0 %v5287
        %7384 = vmatprep.subr.bf16.mxu0 0
        %7385 = vmatpush2.bf16.msra.mxu0 %v5286
        %7386 = vmatprep.subr.bf16.mxu0 0
        %7387 = vmatpush2.bf16.msra.mxu0 %v5285
        %7388 = vmatprep.subr.bf16.mxu0 0
        %7389 = vmatpush2.bf16.msra.mxu0 %v5284
        %7390 = vmatprep.subr.bf16.mxu0 0
        %7391 = vmatpush2.bf16.msra.mxu0 %v5283
        %7392 = vmatprep.subr.bf16.mxu0 0
        %7393 = vmatpush2.bf16.msra.mxu0 %v5282
        %7394 = vmatprep.mubr.bf16.mxu0 %v1837
        %7395 = vmatmul.mubr.bf16.gmra.mxu0 %v1836
        %v7396 = vpop.f32.mrf.mxu0
        %v7397 = vadd.f32 %v7357, %v7396
        %v7398 = vpop.f32.mrf.mxu0
        %v7399 = vpop.f32.mrf.mxu0
        %v7400 = vpop.f32.mrf.mxu0
        %7401 = vdwg.mxu0
        %7402 = vmatprep.subr.bf16.mxu0 0
        %7403 = vmatpush1.bf16.msra.mxu0 %v5297
        %7404 = vmatprep.subr.bf16.mxu0 0
        %7405 = vmatpush1.bf16.msra.mxu0 %v5296
        %7406 = vmatprep.subr.bf16.mxu0 0
        %7407 = vmatpush1.bf16.msra.mxu0 %v5295
        %7408 = vmatprep.subr.bf16.mxu0 0
        %7409 = vmatpush1.bf16.msra.mxu0 %v5294
        %7410 = vmatprep.subr.bf16.mxu0 0
        %7411 = vmatpush1.bf16.msra.mxu0 %v5293
        %7412 = vmatprep.subr.bf16.mxu0 0
        %7413 = vmatpush1.bf16.msra.mxu0 %v5292
        %7414 = vmatprep.subr.bf16.mxu0 0
        %7415 = vmatpush1.bf16.msra.mxu0 %v5291
        %7416 = vmatprep.subr.bf16.mxu0 0
        %7417 = vmatpush1.bf16.msra.mxu0 %v5290
        %7418 = vmatprep.subr.bf16.mxu0 0
        %7419 = vmatpush2.bf16.msra.mxu0 %v5305
        %7420 = vmatprep.subr.bf16.mxu0 0
        %7421 = vmatpush2.bf16.msra.mxu0 %v5304
        %7422 = vmatprep.subr.bf16.mxu0 0
        %7423 = vmatpush2.bf16.msra.mxu0 %v5303
        %7424 = vmatprep.subr.bf16.mxu0 0
        %7425 = vmatpush2.bf16.msra.mxu0 %v5302
        %7426 = vmatprep.subr.bf16.mxu0 0
        %7427 = vmatpush2.bf16.msra.mxu0 %v5301
        %7428 = vmatprep.subr.bf16.mxu0 0
        %7429 = vmatpush2.bf16.msra.mxu0 %v5300
        %7430 = vmatprep.subr.bf16.mxu0 0
        %7431 = vmatpush2.bf16.msra.mxu0 %v5299
        %7432 = vmatprep.subr.bf16.mxu0 0
        %7433 = vmatpush2.bf16.msra.mxu0 %v5298
        %7434 = vmatprep.mubr.bf16.mxu0 %v1839
        %7435 = vmatmul.mubr.bf16.gmra.mxu0 %v1838
        %v7436 = vpop.f32.mrf.mxu0
        %v7437 = vadd.f32 %v7397, %v7436
        %v7438 = vpop.f32.mrf.mxu0
        %v7439 = vpop.f32.mrf.mxu0
        %v7440 = vpop.f32.mrf.mxu0
        %7441 = vdwg.mxu0
        %7442 = vmatprep.subr.bf16.mxu0 0
        %7443 = vmatpush1.bf16.msra.mxu0 %v5313
        %7444 = vmatprep.subr.bf16.mxu0 0
        %7445 = vmatpush1.bf16.msra.mxu0 %v5312
        %7446 = vmatprep.subr.bf16.mxu0 0
        %7447 = vmatpush1.bf16.msra.mxu0 %v5311
        %7448 = vmatprep.subr.bf16.mxu0 0
        %7449 = vmatpush1.bf16.msra.mxu0 %v5310
        %7450 = vmatprep.subr.bf16.mxu0 0
        %7451 = vmatpush1.bf16.msra.mxu0 %v5309
        %7452 = vmatprep.subr.bf16.mxu0 0
        %7453 = vmatpush1.bf16.msra.mxu0 %v5308
        %7454 = vmatprep.subr.bf16.mxu0 0
        %7455 = vmatpush1.bf16.msra.mxu0 %v5307
        %7456 = vmatprep.subr.bf16.mxu0 0
        %7457 = vmatpush1.bf16.msra.mxu0 %v5306
        %7458 = vmatprep.subr.bf16.mxu0 0
        %7459 = vmatpush2.bf16.msra.mxu0 %v5321
        %7460 = vmatprep.subr.bf16.mxu0 0
        %7461 = vmatpush2.bf16.msra.mxu0 %v5320
        %7462 = vmatprep.subr.bf16.mxu0 0
        %7463 = vmatpush2.bf16.msra.mxu0 %v5319
        %7464 = vmatprep.subr.bf16.mxu0 0
        %7465 = vmatpush2.bf16.msra.mxu0 %v5318
        %7466 = vmatprep.subr.bf16.mxu0 0
        %7467 = vmatpush2.bf16.msra.mxu0 %v5317
        %7468 = vmatprep.subr.bf16.mxu0 0
        %7469 = vmatpush2.bf16.msra.mxu0 %v5316
        %7470 = vmatprep.subr.bf16.mxu0 0
        %7471 = vmatpush2.bf16.msra.mxu0 %v5315
        %7472 = vmatprep.subr.bf16.mxu0 0
        %7473 = vmatpush2.bf16.msra.mxu0 %v5314
        %7474 = vmatprep.mubr.bf16.mxu0 %v1841
        %7475 = vmatmul.mubr.bf16.gmra.mxu0 %v1840
        %v7476 = vpop.f32.mrf.mxu0
        %v7477 = vadd.f32 %v7437, %v7476
        %v7478 = vpop.f32.mrf.mxu0
        %v7479 = vpop.f32.mrf.mxu0
        %v7480 = vpop.f32.mrf.mxu0
        %7481 = vdwg.mxu0
        %7482 = vmatprep.subr.bf16.mxu0 0
        %7483 = vmatpush1.bf16.msra.mxu0 %v5329
        %7484 = vmatprep.subr.bf16.mxu0 0
        %7485 = vmatpush1.bf16.msra.mxu0 %v5328
        %7486 = vmatprep.subr.bf16.mxu0 0
        %7487 = vmatpush1.bf16.msra.mxu0 %v5327
        %7488 = vmatprep.subr.bf16.mxu0 0
        %7489 = vmatpush1.bf16.msra.mxu0 %v5326
        %7490 = vmatprep.subr.bf16.mxu0 0
        %7491 = vmatpush1.bf16.msra.mxu0 %v5325
        %7492 = vmatprep.subr.bf16.mxu0 0
        %7493 = vmatpush1.bf16.msra.mxu0 %v5324
        %7494 = vmatprep.subr.bf16.mxu0 0
        %7495 = vmatpush1.bf16.msra.mxu0 %v5323
        %7496 = vmatprep.subr.bf16.mxu0 0
        %7497 = vmatpush1.bf16.msra.mxu0 %v5322
        %7498 = vmatprep.subr.bf16.mxu0 0
        %7499 = vmatpush2.bf16.msra.mxu0 %v5337
        %7500 = vmatprep.subr.bf16.mxu0 0
        %7501 = vmatpush2.bf16.msra.mxu0 %v5336
        %7502 = vmatprep.subr.bf16.mxu0 0
        %7503 = vmatpush2.bf16.msra.mxu0 %v5335
        %7504 = vmatprep.subr.bf16.mxu0 0
        %7505 = vmatpush2.bf16.msra.mxu0 %v5334
        %7506 = vmatprep.subr.bf16.mxu0 0
        %7507 = vmatpush2.bf16.msra.mxu0 %v5333
        %7508 = vmatprep.subr.bf16.mxu0 0
        %7509 = vmatpush2.bf16.msra.mxu0 %v5332
        %7510 = vmatprep.subr.bf16.mxu0 0
        %7511 = vmatpush2.bf16.msra.mxu0 %v5331
        %7512 = vmatprep.subr.bf16.mxu0 0
        %7513 = vmatpush2.bf16.msra.mxu0 %v5330
        %7514 = vmatprep.mubr.bf16.mxu0 %v1843
        %7515 = vmatmul.mubr.bf16.gmra.mxu0 %v1842
        %v7516 = vpop.f32.mrf.mxu0
        %v7517 = vadd.f32 %v7477, %v7516
        %v7518 = vpop.f32.mrf.mxu0
        %v7519 = vpop.f32.mrf.mxu0
        %v7520 = vpop.f32.mrf.mxu0
        %7521 = vdwg.mxu0
        %7522 = vmatprep.subr.bf16.mxu0 0
        %7523 = vmatpush1.bf16.msra.mxu0 %v5345
        %7524 = vmatprep.subr.bf16.mxu0 0
        %7525 = vmatpush1.bf16.msra.mxu0 %v5344
        %7526 = vmatprep.subr.bf16.mxu0 0
        %7527 = vmatpush1.bf16.msra.mxu0 %v5343
        %7528 = vmatprep.subr.bf16.mxu0 0
        %7529 = vmatpush1.bf16.msra.mxu0 %v5342
        %7530 = vmatprep.subr.bf16.mxu0 0
        %7531 = vmatpush1.bf16.msra.mxu0 %v5341
        %7532 = vmatprep.subr.bf16.mxu0 0
        %7533 = vmatpush1.bf16.msra.mxu0 %v5340
        %7534 = vmatprep.subr.bf16.mxu0 0
        %7535 = vmatpush1.bf16.msra.mxu0 %v5339
        %7536 = vmatprep.subr.bf16.mxu0 0
        %7537 = vmatpush1.bf16.msra.mxu0 %v5338
        %7538 = vmatprep.subr.bf16.mxu0 0
        %7539 = vmatpush2.bf16.msra.mxu0 %v5353
        %7540 = vmatprep.subr.bf16.mxu0 0
        %7541 = vmatpush2.bf16.msra.mxu0 %v5352
        %7542 = vmatprep.subr.bf16.mxu0 0
        %7543 = vmatpush2.bf16.msra.mxu0 %v5351
        %7544 = vmatprep.subr.bf16.mxu0 0
        %7545 = vmatpush2.bf16.msra.mxu0 %v5350
        %7546 = vmatprep.subr.bf16.mxu0 0
        %7547 = vmatpush2.bf16.msra.mxu0 %v5349
        %7548 = vmatprep.subr.bf16.mxu0 0
        %7549 = vmatpush2.bf16.msra.mxu0 %v5348
        %7550 = vmatprep.subr.bf16.mxu0 0
        %7551 = vmatpush2.bf16.msra.mxu0 %v5347
        %7552 = vmatprep.subr.bf16.mxu0 0
        %7553 = vmatpush2.bf16.msra.mxu0 %v5346
        %7554 = vmatprep.mubr.bf16.mxu0 %v1845
        %7555 = vmatmul.mubr.bf16.gmra.mxu0 %v1844
        %v7556 = vpop.f32.mrf.mxu0
        %v7557 = vadd.f32 %v7517, %v7556
        %v7558 = vpop.f32.mrf.mxu0
        %v7559 = vpop.f32.mrf.mxu0
        %v7560 = vpop.f32.mrf.mxu0
        %7561 = vdwg.mxu0
        %7562 = vmatprep.subr.bf16.mxu0 0
        %7563 = vmatpush1.bf16.msra.mxu0 %v5361
        %7564 = vmatprep.subr.bf16.mxu0 0
        %7565 = vmatpush1.bf16.msra.mxu0 %v5360
        %7566 = vmatprep.subr.bf16.mxu0 0
        %7567 = vmatpush1.bf16.msra.mxu0 %v5359
        %7568 = vmatprep.subr.bf16.mxu0 0
        %7569 = vmatpush1.bf16.msra.mxu0 %v5358
        %7570 = vmatprep.subr.bf16.mxu0 0
        %7571 = vmatpush1.bf16.msra.mxu0 %v5357
        %7572 = vmatprep.subr.bf16.mxu0 0
        %7573 = vmatpush1.bf16.msra.mxu0 %v5356
        %7574 = vmatprep.subr.bf16.mxu0 0
        %7575 = vmatpush1.bf16.msra.mxu0 %v5355
        %7576 = vmatprep.subr.bf16.mxu0 0
        %7577 = vmatpush1.bf16.msra.mxu0 %v5354
        %7578 = vmatprep.subr.bf16.mxu0 0
        %7579 = vmatpush2.bf16.msra.mxu0 %v5369
        %7580 = vmatprep.subr.bf16.mxu0 0
        %7581 = vmatpush2.bf16.msra.mxu0 %v5368
        %7582 = vmatprep.subr.bf16.mxu0 0
        %7583 = vmatpush2.bf16.msra.mxu0 %v5367
        %7584 = vmatprep.subr.bf16.mxu0 0
        %7585 = vmatpush2.bf16.msra.mxu0 %v5366
        %7586 = vmatprep.subr.bf16.mxu0 0
        %7587 = vmatpush2.bf16.msra.mxu0 %v5365
        %7588 = vmatprep.subr.bf16.mxu0 0
        %7589 = vmatpush2.bf16.msra.mxu0 %v5364
        %7590 = vmatprep.subr.bf16.mxu0 0
        %7591 = vmatpush2.bf16.msra.mxu0 %v5363
        %7592 = vmatprep.subr.bf16.mxu0 0
        %7593 = vmatpush2.bf16.msra.mxu0 %v5362
        %7594 = vmatprep.mubr.bf16.mxu0 %v1847
        %7595 = vmatmul.mubr.bf16.gmra.mxu0 %v1846
        %v7596 = vpop.f32.mrf.mxu0
        %v7597 = vadd.f32 %v7557, %v7596
        %v7598 = vpop.f32.mrf.mxu0
        %v7599 = vpop.f32.mrf.mxu0
        %v7600 = vpop.f32.mrf.mxu0
        %7601 = vdwg.mxu0
        %7602 = vmatprep.subr.bf16.mxu0 0
        %7603 = vmatpush1.bf16.msra.mxu0 %v5377
        %7604 = vmatprep.subr.bf16.mxu0 0
        %7605 = vmatpush1.bf16.msra.mxu0 %v5376
        %7606 = vmatprep.subr.bf16.mxu0 0
        %7607 = vmatpush1.bf16.msra.mxu0 %v5375
        %7608 = vmatprep.subr.bf16.mxu0 0
        %7609 = vmatpush1.bf16.msra.mxu0 %v5374
        %7610 = vmatprep.subr.bf16.mxu0 0
        %7611 = vmatpush1.bf16.msra.mxu0 %v5373
        %7612 = vmatprep.subr.bf16.mxu0 0
        %7613 = vmatpush1.bf16.msra.mxu0 %v5372
        %7614 = vmatprep.subr.bf16.mxu0 0
        %7615 = vmatpush1.bf16.msra.mxu0 %v5371
        %7616 = vmatprep.subr.bf16.mxu0 0
        %7617 = vmatpush1.bf16.msra.mxu0 %v5370
        %7618 = vmatprep.subr.bf16.mxu0 0
        %7619 = vmatpush2.bf16.msra.mxu0 %v5385
        %7620 = vmatprep.subr.bf16.mxu0 0
        %7621 = vmatpush2.bf16.msra.mxu0 %v5384
        %7622 = vmatprep.subr.bf16.mxu0 0
        %7623 = vmatpush2.bf16.msra.mxu0 %v5383
        %7624 = vmatprep.subr.bf16.mxu0 0
        %7625 = vmatpush2.bf16.msra.mxu0 %v5382
        %7626 = vmatprep.subr.bf16.mxu0 0
        %7627 = vmatpush2.bf16.msra.mxu0 %v5381
        %7628 = vmatprep.subr.bf16.mxu0 0
        %7629 = vmatpush2.bf16.msra.mxu0 %v5380
        %7630 = vmatprep.subr.bf16.mxu0 0
        %7631 = vmatpush2.bf16.msra.mxu0 %v5379
        %7632 = vmatprep.subr.bf16.mxu0 0
        %7633 = vmatpush2.bf16.msra.mxu0 %v5378
        %7634 = vmatprep.mubr.bf16.mxu0 %v1849
        %7635 = vmatmul.mubr.bf16.gmra.mxu0 %v1848
        %v7636 = vpop.f32.mrf.mxu0
        %v7637 = vadd.f32 %v7597, %v7636
        %v7638 = vpop.f32.mrf.mxu0
        %v7639 = vpop.f32.mrf.mxu0
        %v7640 = vpop.f32.mrf.mxu0
        %7641 = vdwg.mxu0
        %7642 = vmatprep.subr.bf16.mxu0 0
        %7643 = vmatpush1.bf16.msra.mxu0 %v5393
        %7644 = vmatprep.subr.bf16.mxu0 0
        %7645 = vmatpush1.bf16.msra.mxu0 %v5392
        %7646 = vmatprep.subr.bf16.mxu0 0
        %7647 = vmatpush1.bf16.msra.mxu0 %v5391
        %7648 = vmatprep.subr.bf16.mxu0 0
        %7649 = vmatpush1.bf16.msra.mxu0 %v5390
        %7650 = vmatprep.subr.bf16.mxu0 0
        %7651 = vmatpush1.bf16.msra.mxu0 %v5389
        %7652 = vmatprep.subr.bf16.mxu0 0
        %7653 = vmatpush1.bf16.msra.mxu0 %v5388
        %7654 = vmatprep.subr.bf16.mxu0 0
        %7655 = vmatpush1.bf16.msra.mxu0 %v5387
        %7656 = vmatprep.subr.bf16.mxu0 0
        %7657 = vmatpush1.bf16.msra.mxu0 %v5386
        %7658 = vmatprep.subr.bf16.mxu0 0
        %7659 = vmatpush2.bf16.msra.mxu0 %v5401
        %7660 = vmatprep.subr.bf16.mxu0 0
        %7661 = vmatpush2.bf16.msra.mxu0 %v5400
        %7662 = vmatprep.subr.bf16.mxu0 0
        %7663 = vmatpush2.bf16.msra.mxu0 %v5399
        %7664 = vmatprep.subr.bf16.mxu0 0
        %7665 = vmatpush2.bf16.msra.mxu0 %v5398
        %7666 = vmatprep.subr.bf16.mxu0 0
        %7667 = vmatpush2.bf16.msra.mxu0 %v5397
        %7668 = vmatprep.subr.bf16.mxu0 0
        %7669 = vmatpush2.bf16.msra.mxu0 %v5396
        %7670 = vmatprep.subr.bf16.mxu0 0
        %7671 = vmatpush2.bf16.msra.mxu0 %v5395
        %7672 = vmatprep.subr.bf16.mxu0 0
        %7673 = vmatpush2.bf16.msra.mxu0 %v5394
        %7674 = vmatprep.mubr.bf16.mxu0 %v1851
        %7675 = vmatmul.mubr.bf16.gmra.mxu0 %v1850
        %v7676 = vpop.f32.mrf.mxu0
        %v7677 = vadd.f32 %v7637, %v7676
        %v7678 = vpop.f32.mrf.mxu0
        %v7679 = vpop.f32.mrf.mxu0
        %v7680 = vpop.f32.mrf.mxu0
        %7681 = vdwg.mxu0
        %7682 = vmatprep.subr.bf16.mxu0 0
        %7683 = vmatpush1.bf16.msra.mxu0 %v5409
        %7684 = vmatprep.subr.bf16.mxu0 0
        %7685 = vmatpush1.bf16.msra.mxu0 %v5408
        %7686 = vmatprep.subr.bf16.mxu0 0
        %7687 = vmatpush1.bf16.msra.mxu0 %v5407
        %7688 = vmatprep.subr.bf16.mxu0 0
        %7689 = vmatpush1.bf16.msra.mxu0 %v5406
        %7690 = vmatprep.subr.bf16.mxu0 0
        %7691 = vmatpush1.bf16.msra.mxu0 %v5405
        %7692 = vmatprep.subr.bf16.mxu0 0
        %7693 = vmatpush1.bf16.msra.mxu0 %v5404
        %7694 = vmatprep.subr.bf16.mxu0 0
        %7695 = vmatpush1.bf16.msra.mxu0 %v5403
        %7696 = vmatprep.subr.bf16.mxu0 0
        %7697 = vmatpush1.bf16.msra.mxu0 %v5402
        %7698 = vmatprep.subr.bf16.mxu0 0
        %7699 = vmatpush2.bf16.msra.mxu0 %v5417
        %7700 = vmatprep.subr.bf16.mxu0 0
        %7701 = vmatpush2.bf16.msra.mxu0 %v5416
        %7702 = vmatprep.subr.bf16.mxu0 0
        %7703 = vmatpush2.bf16.msra.mxu0 %v5415
        %7704 = vmatprep.subr.bf16.mxu0 0
        %7705 = vmatpush2.bf16.msra.mxu0 %v5414
        %7706 = vmatprep.subr.bf16.mxu0 0
        %7707 = vmatpush2.bf16.msra.mxu0 %v5413
        %7708 = vmatprep.subr.bf16.mxu0 0
        %7709 = vmatpush2.bf16.msra.mxu0 %v5412
        %7710 = vmatprep.subr.bf16.mxu0 0
        %7711 = vmatpush2.bf16.msra.mxu0 %v5411
        %7712 = vmatprep.subr.bf16.mxu0 0
        %7713 = vmatpush2.bf16.msra.mxu0 %v5410
        %7714 = vmatprep.mubr.bf16.mxu0 %v1853
        %7715 = vmatmul.mubr.bf16.gmra.mxu0 %v1852
        %v7716 = vpop.f32.mrf.mxu0
        %v7717 = vadd.f32 %v7677, %v7716
        %v7718 = vpop.f32.mrf.mxu0
        %v7719 = vpop.f32.mrf.mxu0
        %v7720 = vpop.f32.mrf.mxu0
        %7721 = vdwg.mxu0
        %7722 = vmatprep.subr.bf16.mxu0 0
        %7723 = vmatpush1.bf16.msra.mxu0 %v5425
        %7724 = vmatprep.subr.bf16.mxu0 0
        %7725 = vmatpush1.bf16.msra.mxu0 %v5424
        %7726 = vmatprep.subr.bf16.mxu0 0
        %7727 = vmatpush1.bf16.msra.mxu0 %v5423
        %7728 = vmatprep.subr.bf16.mxu0 0
        %7729 = vmatpush1.bf16.msra.mxu0 %v5422
        %7730 = vmatprep.subr.bf16.mxu0 0
        %7731 = vmatpush1.bf16.msra.mxu0 %v5421
        %7732 = vmatprep.subr.bf16.mxu0 0
        %7733 = vmatpush1.bf16.msra.mxu0 %v5420
        %7734 = vmatprep.subr.bf16.mxu0 0
        %7735 = vmatpush1.bf16.msra.mxu0 %v5419
        %7736 = vmatprep.subr.bf16.mxu0 0
        %7737 = vmatpush1.bf16.msra.mxu0 %v5418
        %7738 = vmatprep.subr.bf16.mxu0 0
        %7739 = vmatpush2.bf16.msra.mxu0 %v5433
        %7740 = vmatprep.subr.bf16.mxu0 0
        %7741 = vmatpush2.bf16.msra.mxu0 %v5432
        %7742 = vmatprep.subr.bf16.mxu0 0
        %7743 = vmatpush2.bf16.msra.mxu0 %v5431
        %7744 = vmatprep.subr.bf16.mxu0 0
        %7745 = vmatpush2.bf16.msra.mxu0 %v5430
        %7746 = vmatprep.subr.bf16.mxu0 0
        %7747 = vmatpush2.bf16.msra.mxu0 %v5429
        %7748 = vmatprep.subr.bf16.mxu0 0
        %7749 = vmatpush2.bf16.msra.mxu0 %v5428
        %7750 = vmatprep.subr.bf16.mxu0 0
        %7751 = vmatpush2.bf16.msra.mxu0 %v5427
        %7752 = vmatprep.subr.bf16.mxu0 0
        %7753 = vmatpush2.bf16.msra.mxu0 %v5426
        %7754 = vmatprep.mubr.bf16.mxu0 %v1855
        %7755 = vmatmul.mubr.bf16.gmra.mxu0 %v1854
        %v7756 = vpop.f32.mrf.mxu0
        %v7757 = vadd.f32 %v7717, %v7756
        %v7758 = vpop.f32.mrf.mxu0
        %v7759 = vpop.f32.mrf.mxu0
        %v7760 = vpop.f32.mrf.mxu0
        %7761 = vdwg.mxu0
        %7762 = vmatprep.subr.bf16.mxu0 0
        %7763 = vmatpush1.bf16.msra.mxu0 %v5441
        %7764 = vmatprep.subr.bf16.mxu0 0
        %7765 = vmatpush1.bf16.msra.mxu0 %v5440
        %7766 = vmatprep.subr.bf16.mxu0 0
        %7767 = vmatpush1.bf16.msra.mxu0 %v5439
        %7768 = vmatprep.subr.bf16.mxu0 0
        %7769 = vmatpush1.bf16.msra.mxu0 %v5438
        %7770 = vmatprep.subr.bf16.mxu0 0
        %7771 = vmatpush1.bf16.msra.mxu0 %v5437
        %7772 = vmatprep.subr.bf16.mxu0 0
        %7773 = vmatpush1.bf16.msra.mxu0 %v5436
        %7774 = vmatprep.subr.bf16.mxu0 0
        %7775 = vmatpush1.bf16.msra.mxu0 %v5435
        %7776 = vmatprep.subr.bf16.mxu0 0
        %7777 = vmatpush1.bf16.msra.mxu0 %v5434
        %7778 = vmatprep.subr.bf16.mxu0 0
        %7779 = vmatpush2.bf16.msra.mxu0 %v5449
        %7780 = vmatprep.subr.bf16.mxu0 0
        %7781 = vmatpush2.bf16.msra.mxu0 %v5448
        %7782 = vmatprep.subr.bf16.mxu0 0
        %7783 = vmatpush2.bf16.msra.mxu0 %v5447
        %7784 = vmatprep.subr.bf16.mxu0 0
        %7785 = vmatpush2.bf16.msra.mxu0 %v5446
        %7786 = vmatprep.subr.bf16.mxu0 0
        %7787 = vmatpush2.bf16.msra.mxu0 %v5445
        %7788 = vmatprep.subr.bf16.mxu0 0
        %7789 = vmatpush2.bf16.msra.mxu0 %v5444
        %7790 = vmatprep.subr.bf16.mxu0 0
        %7791 = vmatpush2.bf16.msra.mxu0 %v5443
        %7792 = vmatprep.subr.bf16.mxu0 0
        %7793 = vmatpush2.bf16.msra.mxu0 %v5442
        %7794 = vmatprep.mubr.bf16.mxu0 %v1857
        %7795 = vmatmul.mubr.bf16.gmra.mxu0 %v1856
        %v7796 = vpop.f32.mrf.mxu0
        %v7797 = vadd.f32 %v7757, %v7796
        %v7798 = vpop.f32.mrf.mxu0
        %v7799 = vpop.f32.mrf.mxu0
        %v7800 = vpop.f32.mrf.mxu0
        %7801 = vdwg.mxu0
        %7802 = vmatprep.subr.bf16.mxu0 0
        %7803 = vmatpush1.bf16.msra.mxu0 %v5457
        %7804 = vmatprep.subr.bf16.mxu0 0
        %7805 = vmatpush1.bf16.msra.mxu0 %v5456
        %7806 = vmatprep.subr.bf16.mxu0 0
        %7807 = vmatpush1.bf16.msra.mxu0 %v5455
        %7808 = vmatprep.subr.bf16.mxu0 0
        %7809 = vmatpush1.bf16.msra.mxu0 %v5454
        %7810 = vmatprep.subr.bf16.mxu0 0
        %7811 = vmatpush1.bf16.msra.mxu0 %v5453
        %7812 = vmatprep.subr.bf16.mxu0 0
        %7813 = vmatpush1.bf16.msra.mxu0 %v5452
        %7814 = vmatprep.subr.bf16.mxu0 0
        %7815 = vmatpush1.bf16.msra.mxu0 %v5451
        %7816 = vmatprep.subr.bf16.mxu0 0
        %7817 = vmatpush1.bf16.msra.mxu0 %v5450
        %7818 = vmatprep.subr.bf16.mxu0 0
        %7819 = vmatpush2.bf16.msra.mxu0 %v5465
        %7820 = vmatprep.subr.bf16.mxu0 0
        %7821 = vmatpush2.bf16.msra.mxu0 %v5464
        %7822 = vmatprep.subr.bf16.mxu0 0
        %7823 = vmatpush2.bf16.msra.mxu0 %v5463
        %7824 = vmatprep.subr.bf16.mxu0 0
        %7825 = vmatpush2.bf16.msra.mxu0 %v5462
        %7826 = vmatprep.subr.bf16.mxu0 0
        %7827 = vmatpush2.bf16.msra.mxu0 %v5461
        %7828 = vmatprep.subr.bf16.mxu0 0
        %7829 = vmatpush2.bf16.msra.mxu0 %v5460
        %7830 = vmatprep.subr.bf16.mxu0 0
        %7831 = vmatpush2.bf16.msra.mxu0 %v5459
        %7832 = vmatprep.subr.bf16.mxu0 0
        %7833 = vmatpush2.bf16.msra.mxu0 %v5458
        %7834 = vmatprep.mubr.bf16.mxu0 %v1859
        %7835 = vmatmul.mubr.bf16.gmra.mxu0 %v1858
        %v7836 = vpop.f32.mrf.mxu0
        %v7837 = vadd.f32 %v7797, %v7836
        %v7838 = vpop.f32.mrf.mxu0
        %v7839 = vpop.f32.mrf.mxu0
        %v7840 = vpop.f32.mrf.mxu0
        %7841 = vdwg.mxu0
        %7842 = vmatprep.subr.bf16.mxu0 0
        %7843 = vmatpush1.bf16.msra.mxu0 %v5473
        %7844 = vmatprep.subr.bf16.mxu0 0
        %7845 = vmatpush1.bf16.msra.mxu0 %v5472
        %7846 = vmatprep.subr.bf16.mxu0 0
        %7847 = vmatpush1.bf16.msra.mxu0 %v5471
        %7848 = vmatprep.subr.bf16.mxu0 0
        %7849 = vmatpush1.bf16.msra.mxu0 %v5470
        %7850 = vmatprep.subr.bf16.mxu0 0
        %7851 = vmatpush1.bf16.msra.mxu0 %v5469
        %7852 = vmatprep.subr.bf16.mxu0 0
        %7853 = vmatpush1.bf16.msra.mxu0 %v5468
        %7854 = vmatprep.subr.bf16.mxu0 0
        %7855 = vmatpush1.bf16.msra.mxu0 %v5467
        %7856 = vmatprep.subr.bf16.mxu0 0
        %7857 = vmatpush1.bf16.msra.mxu0 %v5466
        %7858 = vmatprep.subr.bf16.mxu0 0
        %7859 = vmatpush2.bf16.msra.mxu0 %v5481
        %7860 = vmatprep.subr.bf16.mxu0 0
        %7861 = vmatpush2.bf16.msra.mxu0 %v5480
        %7862 = vmatprep.subr.bf16.mxu0 0
        %7863 = vmatpush2.bf16.msra.mxu0 %v5479
        %7864 = vmatprep.subr.bf16.mxu0 0
        %7865 = vmatpush2.bf16.msra.mxu0 %v5478
        %7866 = vmatprep.subr.bf16.mxu0 0
        %7867 = vmatpush2.bf16.msra.mxu0 %v5477
        %7868 = vmatprep.subr.bf16.mxu0 0
        %7869 = vmatpush2.bf16.msra.mxu0 %v5476
        %7870 = vmatprep.subr.bf16.mxu0 0
        %7871 = vmatpush2.bf16.msra.mxu0 %v5475
        %7872 = vmatprep.subr.bf16.mxu0 0
        %7873 = vmatpush2.bf16.msra.mxu0 %v5474
        %7874 = vmatprep.mubr.bf16.mxu0 %v1861
        %7875 = vmatmul.mubr.bf16.gmra.mxu0 %v1860
        %v7876 = vpop.f32.mrf.mxu0
        %v7877 = vadd.f32 %v7837, %v7876
        %v7878 = vpop.f32.mrf.mxu0
        %v7879 = vpop.f32.mrf.mxu0
        %v7880 = vpop.f32.mrf.mxu0
        %7881 = vdwg.mxu0
        %7882 = vmatprep.subr.bf16.mxu0 0
        %7883 = vmatpush1.bf16.msra.mxu0 %v5489
        %7884 = vmatprep.subr.bf16.mxu0 0
        %7885 = vmatpush1.bf16.msra.mxu0 %v5488
        %7886 = vmatprep.subr.bf16.mxu0 0
        %7887 = vmatpush1.bf16.msra.mxu0 %v5487
        %7888 = vmatprep.subr.bf16.mxu0 0
        %7889 = vmatpush1.bf16.msra.mxu0 %v5486
        %7890 = vmatprep.subr.bf16.mxu0 0
        %7891 = vmatpush1.bf16.msra.mxu0 %v5485
        %7892 = vmatprep.subr.bf16.mxu0 0
        %7893 = vmatpush1.bf16.msra.mxu0 %v5484
        %7894 = vmatprep.subr.bf16.mxu0 0
        %7895 = vmatpush1.bf16.msra.mxu0 %v5483
        %7896 = vmatprep.subr.bf16.mxu0 0
        %7897 = vmatpush1.bf16.msra.mxu0 %v5482
        %7898 = vmatprep.subr.bf16.mxu0 0
        %7899 = vmatpush2.bf16.msra.mxu0 %v5497
        %7900 = vmatprep.subr.bf16.mxu0 0
        %7901 = vmatpush2.bf16.msra.mxu0 %v5496
        %7902 = vmatprep.subr.bf16.mxu0 0
        %7903 = vmatpush2.bf16.msra.mxu0 %v5495
        %7904 = vmatprep.subr.bf16.mxu0 0
        %7905 = vmatpush2.bf16.msra.mxu0 %v5494
        %7906 = vmatprep.subr.bf16.mxu0 0
        %7907 = vmatpush2.bf16.msra.mxu0 %v5493
        %7908 = vmatprep.subr.bf16.mxu0 0
        %7909 = vmatpush2.bf16.msra.mxu0 %v5492
        %7910 = vmatprep.subr.bf16.mxu0 0
        %7911 = vmatpush2.bf16.msra.mxu0 %v5491
        %7912 = vmatprep.subr.bf16.mxu0 0
        %7913 = vmatpush2.bf16.msra.mxu0 %v5490
        %7914 = vmatprep.mubr.bf16.mxu0 %v1863
        %7915 = vmatmul.mubr.bf16.gmra.mxu0 %v1862
        %v7916 = vpop.f32.mrf.mxu0
        %v7917 = vadd.f32 %v7877, %v7916
        %v7918 = vpop.f32.mrf.mxu0
        %v7919 = vpop.f32.mrf.mxu0
        %v7920 = vpop.f32.mrf.mxu0
        %7921 = vdwg.mxu0
        %7922 = vmatprep.subr.bf16.mxu0 0
        %7923 = vmatpush1.bf16.msra.mxu0 %v5505
        %7924 = vmatprep.subr.bf16.mxu0 0
        %7925 = vmatpush1.bf16.msra.mxu0 %v5504
        %7926 = vmatprep.subr.bf16.mxu0 0
        %7927 = vmatpush1.bf16.msra.mxu0 %v5503
        %7928 = vmatprep.subr.bf16.mxu0 0
        %7929 = vmatpush1.bf16.msra.mxu0 %v5502
        %7930 = vmatprep.subr.bf16.mxu0 0
        %7931 = vmatpush1.bf16.msra.mxu0 %v5501
        %7932 = vmatprep.subr.bf16.mxu0 0
        %7933 = vmatpush1.bf16.msra.mxu0 %v5500
        %7934 = vmatprep.subr.bf16.mxu0 0
        %7935 = vmatpush1.bf16.msra.mxu0 %v5499
        %7936 = vmatprep.subr.bf16.mxu0 0
        %7937 = vmatpush1.bf16.msra.mxu0 %v5498
        %7938 = vmatprep.subr.bf16.mxu0 0
        %7939 = vmatpush2.bf16.msra.mxu0 %v5513
        %7940 = vmatprep.subr.bf16.mxu0 0
        %7941 = vmatpush2.bf16.msra.mxu0 %v5512
        %7942 = vmatprep.subr.bf16.mxu0 0
        %7943 = vmatpush2.bf16.msra.mxu0 %v5511
        %7944 = vmatprep.subr.bf16.mxu0 0
        %7945 = vmatpush2.bf16.msra.mxu0 %v5510
        %7946 = vmatprep.subr.bf16.mxu0 0
        %7947 = vmatpush2.bf16.msra.mxu0 %v5509
        %7948 = vmatprep.subr.bf16.mxu0 0
        %7949 = vmatpush2.bf16.msra.mxu0 %v5508
        %7950 = vmatprep.subr.bf16.mxu0 0
        %7951 = vmatpush2.bf16.msra.mxu0 %v5507
        %7952 = vmatprep.subr.bf16.mxu0 0
        %7953 = vmatpush2.bf16.msra.mxu0 %v5506
        %7954 = vmatprep.mubr.bf16.mxu0 %v1865
        %7955 = vmatmul.mubr.bf16.gmra.mxu0 %v1864
        %v7956 = vpop.f32.mrf.mxu0
        %v7957 = vadd.f32 %v7917, %v7956
        %v7958 = vpop.f32.mrf.mxu0
        %v7959 = vpop.f32.mrf.mxu0
        %v7960 = vpop.f32.mrf.mxu0
        %7961 = vdwg.mxu0
        %7962 = vmatprep.subr.bf16.mxu0 0
        %7963 = vmatpush1.bf16.msra.mxu0 %v5521
        %7964 = vmatprep.subr.bf16.mxu0 0
        %7965 = vmatpush1.bf16.msra.mxu0 %v5520
        %7966 = vmatprep.subr.bf16.mxu0 0
        %7967 = vmatpush1.bf16.msra.mxu0 %v5519
        %7968 = vmatprep.subr.bf16.mxu0 0
        %7969 = vmatpush1.bf16.msra.mxu0 %v5518
        %7970 = vmatprep.subr.bf16.mxu0 0
        %7971 = vmatpush1.bf16.msra.mxu0 %v5517
        %7972 = vmatprep.subr.bf16.mxu0 0
        %7973 = vmatpush1.bf16.msra.mxu0 %v5516
        %7974 = vmatprep.subr.bf16.mxu0 0
        %7975 = vmatpush1.bf16.msra.mxu0 %v5515
        %7976 = vmatprep.subr.bf16.mxu0 0
        %7977 = vmatpush1.bf16.msra.mxu0 %v5514
        %7978 = vmatprep.subr.bf16.mxu0 0
        %7979 = vmatpush2.bf16.msra.mxu0 %v5529
        %7980 = vmatprep.subr.bf16.mxu0 0
        %7981 = vmatpush2.bf16.msra.mxu0 %v5528
        %7982 = vmatprep.subr.bf16.mxu0 0
        %7983 = vmatpush2.bf16.msra.mxu0 %v5527
        %7984 = vmatprep.subr.bf16.mxu0 0
        %7985 = vmatpush2.bf16.msra.mxu0 %v5526
        %7986 = vmatprep.subr.bf16.mxu0 0
        %7987 = vmatpush2.bf16.msra.mxu0 %v5525
        %7988 = vmatprep.subr.bf16.mxu0 0
        %7989 = vmatpush2.bf16.msra.mxu0 %v5524
        %7990 = vmatprep.subr.bf16.mxu0 0
        %7991 = vmatpush2.bf16.msra.mxu0 %v5523
        %7992 = vmatprep.subr.bf16.mxu0 0
        %7993 = vmatpush2.bf16.msra.mxu0 %v5522
        %7994 = vmatprep.mubr.bf16.mxu0 %v1867
        %7995 = vmatmul.mubr.bf16.gmra.mxu0 %v1866
        %v7996 = vpop.f32.mrf.mxu0
        %v7997 = vadd.f32 %v7957, %v7996
        %v7998 = vpop.f32.mrf.mxu0
        %v7999 = vpop.f32.mrf.mxu0
        %v8000 = vpop.f32.mrf.mxu0
        %8001 = vdwg.mxu0
        %8002 = vmatprep.subr.bf16.mxu0 0
        %8003 = vmatpush1.bf16.msra.mxu0 %v5537
        %8004 = vmatprep.subr.bf16.mxu0 0
        %8005 = vmatpush1.bf16.msra.mxu0 %v5536
        %8006 = vmatprep.subr.bf16.mxu0 0
        %8007 = vmatpush1.bf16.msra.mxu0 %v5535
        %8008 = vmatprep.subr.bf16.mxu0 0
        %8009 = vmatpush1.bf16.msra.mxu0 %v5534
        %8010 = vmatprep.subr.bf16.mxu0 0
        %8011 = vmatpush1.bf16.msra.mxu0 %v5533
        %8012 = vmatprep.subr.bf16.mxu0 0
        %8013 = vmatpush1.bf16.msra.mxu0 %v5532
        %8014 = vmatprep.subr.bf16.mxu0 0
        %8015 = vmatpush1.bf16.msra.mxu0 %v5531
        %8016 = vmatprep.subr.bf16.mxu0 0
        %8017 = vmatpush1.bf16.msra.mxu0 %v5530
        %8018 = vmatprep.subr.bf16.mxu0 0
        %8019 = vmatpush2.bf16.msra.mxu0 %v5545
        %8020 = vmatprep.subr.bf16.mxu0 0
        %8021 = vmatpush2.bf16.msra.mxu0 %v5544
        %8022 = vmatprep.subr.bf16.mxu0 0
        %8023 = vmatpush2.bf16.msra.mxu0 %v5543
        %8024 = vmatprep.subr.bf16.mxu0 0
        %8025 = vmatpush2.bf16.msra.mxu0 %v5542
        %8026 = vmatprep.subr.bf16.mxu0 0
        %8027 = vmatpush2.bf16.msra.mxu0 %v5541
        %8028 = vmatprep.subr.bf16.mxu0 0
        %8029 = vmatpush2.bf16.msra.mxu0 %v5540
        %8030 = vmatprep.subr.bf16.mxu0 0
        %8031 = vmatpush2.bf16.msra.mxu0 %v5539
        %8032 = vmatprep.subr.bf16.mxu0 0
        %8033 = vmatpush2.bf16.msra.mxu0 %v5538
        %8034 = vmatprep.mubr.bf16.mxu0 %v1869
        %8035 = vmatmul.mubr.bf16.gmra.mxu0 %v1868
        %v8036 = vpop.f32.mrf.mxu0
        %v8037 = vadd.f32 %v7997, %v8036
        %v8038 = vpop.f32.mrf.mxu0
        %v8039 = vpop.f32.mrf.mxu0
        %v8040 = vpop.f32.mrf.mxu0
        %8041 = vdwg.mxu0
        %8042 = vmatprep.subr.bf16.mxu0 0
        %8043 = vmatpush1.bf16.msra.mxu0 %v5553
        %8044 = vmatprep.subr.bf16.mxu0 0
        %8045 = vmatpush1.bf16.msra.mxu0 %v5552
        %8046 = vmatprep.subr.bf16.mxu0 0
        %8047 = vmatpush1.bf16.msra.mxu0 %v5551
        %8048 = vmatprep.subr.bf16.mxu0 0
        %8049 = vmatpush1.bf16.msra.mxu0 %v5550
        %8050 = vmatprep.subr.bf16.mxu0 0
        %8051 = vmatpush1.bf16.msra.mxu0 %v5549
        %8052 = vmatprep.subr.bf16.mxu0 0
        %8053 = vmatpush1.bf16.msra.mxu0 %v5548
        %8054 = vmatprep.subr.bf16.mxu0 0
        %8055 = vmatpush1.bf16.msra.mxu0 %v5547
        %8056 = vmatprep.subr.bf16.mxu0 0
        %8057 = vmatpush1.bf16.msra.mxu0 %v5546
        %8058 = vmatprep.subr.bf16.mxu0 0
        %8059 = vmatpush2.bf16.msra.mxu0 %v5561
        %8060 = vmatprep.subr.bf16.mxu0 0
        %8061 = vmatpush2.bf16.msra.mxu0 %v5560
        %8062 = vmatprep.subr.bf16.mxu0 0
        %8063 = vmatpush2.bf16.msra.mxu0 %v5559
        %8064 = vmatprep.subr.bf16.mxu0 0
        %8065 = vmatpush2.bf16.msra.mxu0 %v5558
        %8066 = vmatprep.subr.bf16.mxu0 0
        %8067 = vmatpush2.bf16.msra.mxu0 %v5557
        %8068 = vmatprep.subr.bf16.mxu0 0
        %8069 = vmatpush2.bf16.msra.mxu0 %v5556
        %8070 = vmatprep.subr.bf16.mxu0 0
        %8071 = vmatpush2.bf16.msra.mxu0 %v5555
        %8072 = vmatprep.subr.bf16.mxu0 0
        %8073 = vmatpush2.bf16.msra.mxu0 %v5554
        %8074 = vmatprep.mubr.bf16.mxu0 %v1871
        %8075 = vmatmul.mubr.bf16.gmra.mxu0 %v1870
        %v8076 = vpop.f32.mrf.mxu0
        %v8077 = vadd.f32 %v8037, %v8076
        %v8078 = vpop.f32.mrf.mxu0
        %v8079 = vpop.f32.mrf.mxu0
        %v8080 = vpop.f32.mrf.mxu0
        %8081 = vdwg.mxu0
        %v8082 = vadd.f32 %v161, %v8077
        %vm8083 = vcmask 416768
        %8084 = vst.msk [vmem:[#allocation2] sm:$0xff] %vm8083, %v8082
        // Predicated region
        $region33: #{frequency_bias_forward.1} parent=27 // pred_check
          %p8085 = pneg %p79
        $region34: #{frequency_bias_forward.1} parent=27 // pred_check_branch
          %8087 = sbr.rel (%p8085) target = $region36
        $region35: #{frequency_bias_forward.1} parent=27 // pred_region
          %s8089 = ssub.s32 128, 128
          %8090 = vsyncadd [#allocation3], %s8089
          %s8092 = sshll.u32 [#allocation2], 4
          %s8093 = int_to_ptr.vmem [resolvable:$true] %s8092
          %8095 = dma.vmem_to_hbm [thread:$0]  %s8093, 128, %s2, [#allocation3]
        $region36: #{frequency_bias_forward.1} parent=27 // pred_fallthru
          _
        // Predicated region
        $region37: #{frequency_bias_forward.1} parent=27 // pred_check
          %p8096 = pneg %p79
        $region38: #{frequency_bias_forward.1} parent=27 // pred_check_branch
          %8098 = sbr.rel (%p8096) target = $region40
        $region39: #{frequency_bias_forward.1} parent=27 // pred_region
          %8099 = dma.done [#allocation3], 128
        $region40: #{frequency_bias_forward.1} parent=27 // pred_fallthru
          _
      $region28: #{frequency_bias_forward.1} parent=5 // pred_fallthru
        _
      %p8100 = scmp.le.s32.totalorder 2, %s9
      // Predicated region
      $region41: #{frequency_bias_forward.1} parent=5 // pred_check
        %p8101 = pneg %p8100
      $region42: #{frequency_bias_forward.1} parent=5 // pred_check_branch
        %8103 = sbr.rel (%p8101) target = $region44
      $region43: #{frequency_bias_forward.1} parent=5 // pred_region
        %s8104 = ssub.s32 %s9, 2
      $region44: #{frequency_bias_forward.1} parent=5 // pred_fallthru
        _
    $region6: #{frequency_bias_forward.1} parent=1 // loop_footer
      %s13 = sadd.s32 1, %s9
    $region7: #{frequency_bias_forward.1} parent=1 // loop_footer_branch
      %8 = sbr.rel target = $region3
    $region8: #{frequency_bias_forward.1} parent=1 // loop_exit
      _
    %8105 = vsyncpa [#allocation3], 1
    %s8106 = scalar_lea.sflag [#allocation3], 1
    %8107 = vsyncpa %s8106, 1

</llo_original>
